<compile_context>
chip_gen: v7x
topology: tpu7x:2x2x1
jax: 0.10.0
libtpu: 0.0.40
codegen_flags: <defaults>
</compile_context>

<pallas_src>
import functools
import math

import jax
import jax.numpy as jnp
import numpy as np
from jax.experimental import pallas as pl
from jax.experimental.pallas import tpu as pltpu


# ----------------------------------------------------------------------------
# Single fused kernel (one block of Bt batch elements per grid step)
# ----------------------------------------------------------------------------
def fused_kernel(q_ref, k1_ref, v1_ref, k2_ref, v2_ref,
                 wq_ref, wk1_ref, wv1_ref, wk2_ref, wv2_ref,
                 wo1_ref, wo2_ref, w1_ref, w2_ref, bias_ref,
                 out_ref, *, num_heads, head_dim):
    Bt, L, E = q_ref.shape
    S = k1_ref.shape[1]
    H = num_heads
    Dh = head_dim
    HD = w1_ref.shape[1]                       # hidden_dim
    scale = 1.0 / math.sqrt(Dh)

    def rows(ref):                             # (Bt, N, E) ref -> (Bt*N, E)
        if Bt == 1:
            return ref[0]
        return jnp.concatenate([ref[b] for b in range(Bt)], axis=0)

    bias = bias_ref[...]                       # (11, W) packed bias slab
    q = rows(q_ref)                            # (Bt*L, E)

    # Fused q projection for BOTH branches: (Bt*L, E) @ (E, 2E) on the MXU.
    qp = jnp.dot(q, wq_ref[...], preferred_element_type=jnp.float32) \
        + bias[0:1, :2 * E]

    def heads(x, n):
        # (Bt*n, E) -> (Bt*H, n, Dh) head view via static lane/sublane slices.
        parts = [x[b * n:(b + 1) * n, h * Dh:(h + 1) * Dh]
                 for b in range(Bt) for h in range(H)]
        return jnp.stack(parts, axis=0)

    def merge_heads(o):
        # (Bt*H, L, Dh) -> (Bt*L, E): lane-concat heads, row-concat batches.
        per_b = [jnp.concatenate([o[b * H + h] for h in range(H)], axis=-1)
                 for b in range(Bt)]
        return per_b[0] if Bt == 1 else jnp.concatenate(per_b, axis=0)

    def branch(qh, k_ref, v_ref, wk_ref, wv_ref, wo_ref, bk, bv, bo):
        k = rows(k_ref)                        # (Bt*S, E)
        v = rows(v_ref)
        # Full-width projections, heads stay packed on lanes.
        kp = jnp.dot(k, wk_ref[...], preferred_element_type=jnp.float32) + bk
        vp = jnp.dot(v, wv_ref[...], preferred_element_type=jnp.float32) + bv
        kh = heads(kp, S)                      # (Bt*H, S, Dh)
        vh = heads(vp, S)
        # Per-(batch, head) attention.
        s = jnp.einsum('gld,gsd->gls', qh, kh,
                       preferred_element_type=jnp.float32) * scale
        s = s - jnp.max(s, axis=-1, keepdims=True)
        p = jnp.exp(s)
        p = p * pl.reciprocal(jnp.sum(p, axis=-1, keepdims=True), approx=True)
        o = jnp.einsum('gls,gsd->gld', p, vh,
                       preferred_element_type=jnp.float32)     # (Bt*H, L, Dh)
        of = merge_heads(o)                                    # (Bt*L, E)
        # Full-width out_proj.
        return jnp.dot(of, wo_ref[...], preferred_element_type=jnp.float32) + bo

    qh1 = heads(qp[:, :E], L)
    qh2 = heads(qp[:, E:2 * E], L)
    a1 = branch(qh1, k1_ref, v1_ref, wk1_ref, wv1_ref, wo1_ref,
                bias[1:2, :E], bias[2:3, :E], bias[5:6, :E])
    a2 = branch(qh2, k2_ref, v2_ref, wk2_ref, wv2_ref, wo2_ref,
                bias[3:4, :E], bias[4:5, :E], bias[6:7, :E])

    # Fusion MLP: concat([a1, a2]) @ w1.T as ONE (Bt*L, 2E) @ (2E, HD) matmul.
    fused = jnp.concatenate([a1, a2], axis=-1)
    h = jnp.dot(fused, w1_ref[...], preferred_element_type=jnp.float32) \
        + bias[7:8, :HD]
    h = jnp.maximum(h, 0.0)
    # TODO(synk): dropout(p=0.1) is the identity here (inference / eval mode).
    o = jnp.dot(h, w2_ref[...], preferred_element_type=jnp.float32) \
        + bias[8:9, :E] + q

    # LayerNorm (f32) + affine.
    mu = jnp.mean(o, axis=-1, keepdims=True)
    var = jnp.mean((o - mu) ** 2, axis=-1, keepdims=True)
    y = (o - mu) * jax.lax.rsqrt(var + 1e-5)
    y = y * bias[9:10, :E] + bias[10:11, :E]                   # (Bt*L, E)

    # Lane-dense output (Bt, L, E); final permute(1,2,0) happens in the wrapper.
    for b in range(Bt):
        out_ref[b] = y[b * L:(b + 1) * L].astype(out_ref.dtype)


# ----------------------------------------------------------------------------
# Host-side parameter preparation (transpose + stack + bias-slab packing)
# ----------------------------------------------------------------------------
def prepare_kernel_params(p, embed_dim):
    E = embed_dim

    def T(w):                                  # PyTorch (out, in) -> (in, out)
        return jnp.asarray(w, jnp.float32).T

    weights = dict(
        wq=jnp.concatenate([T(p["wq1"]), T(p["wq2"])], axis=1),   # (E, 2E)
        wk1=T(p["wk1"]), wv1=T(p["wv1"]),
        wk2=T(p["wk2"]), wv2=T(p["wv2"]),
        wo1=T(p["wo1"]), wo2=T(p["wo2"]),
        w1=T(p["w1"]),                                            # (2E, HD)
        w2=T(p["w2"]),                                            # (HD, E)
    )

    hidden_dim = int(np.prod(p["b1"].shape))
    W = max(2 * E, hidden_dim)

    def row(vec):
        v = jnp.asarray(vec, jnp.float32).reshape(-1)
        return jnp.pad(v, (0, W - v.shape[0]))

    bias = jnp.stack([
        row(jnp.concatenate([jnp.asarray(p["bq1"]).reshape(-1),
                             jnp.asarray(p["bq2"]).reshape(-1)])),   # 0: [bq1|bq2]
        row(p["bk1"]), row(p["bv1"]),                                # 1, 2
        row(p["bk2"]), row(p["bv2"]),                                # 3, 4
        row(p["bo1"]), row(p["bo2"]),                                # 5, 6
        row(p["b1"]), row(p["b2"]),                                  # 7, 8
        row(p["gamma"]), row(p["beta"]),                             # 9, 10
    ], axis=0)                                                       # (11, W)
    weights["bias"] = bias
    return weights


_WEIGHT_ORDER = ["wq", "wk1", "wv1", "wk2", "wv2", "wo1", "wo2", "w1", "w2", "bias"]


# ----------------------------------------------------------------------------
# Wrapper: one fused pallas_call, coarsened "parallel" batch grid
# ----------------------------------------------------------------------------
def cross_attention_fusion(q, k1, k2, v1, v2, kparams, num_heads, batch_block=None):
    """q, k*, v*: (B, L, E) float32.  Returns (B, E, L) like the PyTorch module."""
    B, L, E = q.shape
    S = k1.shape[1]
    Dh = E // num_heads
    if batch_block is None:
        # Coarsen the batch grid, but keep >= 2 blocks when possible so both
        # v7x TensorCores get work.
        batch_block = B // 2 if (B % 2 == 0 and B >= 2) else B
    Bt = batch_block
    assert B % Bt == 0
    num_blocks = B // Bt

    weights = [kparams[n] for n in _WEIGHT_ORDER]

    in_specs = [
        pl.BlockSpec((Bt, L, E), lambda b: (b, 0, 0)),   # q
        pl.BlockSpec((Bt, S, E), lambda b: (b, 0, 0)),   # k1
        pl.BlockSpec((Bt, S, E), lambda b: (b, 0, 0)),   # v1
        pl.BlockSpec((Bt, S, E), lambda b: (b, 0, 0)),   # k2
        pl.BlockSpec((Bt, S, E), lambda b: (b, 0, 0)),   # v2
    ]
    for w in weights:  # grid-invariant weight / bias-slab blocks (fetched once)
        in_specs.append(pl.BlockSpec(w.shape, lambda b, _nd=w.ndim: (0,) * _nd))

    kern = functools.partial(fused_kernel, num_heads=num_heads, head_dim=Dh)
    out = pl.pallas_call(
        kern,
        out_shape=jax.ShapeDtypeStruct((B, L, E), jnp.float32),
        grid=(num_blocks,),
        in_specs=in_specs,
        out_specs=pl.BlockSpec((Bt, L, E), lambda b: (b, 0, 0)),
        compiler_params=pltpu.CompilerParams(
            dimension_semantics=("parallel",),
            vmem_limit_bytes=32 * 1024 * 1024),
    )(q, k1, v1, k2, v2, *weights)
    # Module's final permute(1, 2, 0): done by XLA so kernel stores stay lane-dense.
    return jnp.transpose(out, (0, 2, 1))


# ----------------------------------------------------------------------------
# Pure-JAX reference (PyTorch-layout params) for the correctness check
# ----------------------------------------------------------------------------
def _mha_ref(q, k, v, wq, bq, wk, bk, wv, bv, wo, bo, H):
    B, L, E = q.shape
    Dh = E // H
    qp = q @ wq.T + bq[0]
    kp = k @ wk.T + bk[0]
    vp = v @ wv.T + bv[0]
    qh = qp.reshape(B, L, H, Dh).transpose(0, 2, 1, 3)
    kh = kp.reshape(B, -1, H, Dh).transpose(0, 2, 1, 3)
    vh = vp.reshape(B, -1, H, Dh).transpose(0, 2, 1, 3)
    s = jnp.einsum("bhld,bhsd->bhls", qh, kh) / math.sqrt(Dh)
    prob = jax.nn.softmax(s, axis=-1)
    o = jnp.einsum("bhls,bhsd->bhld", prob, vh).transpose(0, 2, 1, 3).reshape(B, L, E)
    return o @ wo.T + bo[0]


def _ref(q, k1, k2, v1, v2, p, H):
    a1 = _mha_ref(q, k1, v1, p["wq1"], p["bq1"], p["wk1"], p["bk1"],
                  p["wv1"], p["bv1"], p["wo1"], p["bo1"], H)
    a2 = _mha_ref(q, k2, v2, p["wq2"], p["bq2"], p["wk2"], p["bk2"],
                  p["wv2"], p["bv2"], p["wo2"], p["bo2"], H)
    fused = jnp.concatenate([a1, a2], axis=-1)
    h = jax.nn.relu(fused @ p["w1"].T + p["b1"][0])
    o = h @ p["w2"].T + p["b2"][0] + q
    mu = jnp.mean(o, axis=-1, keepdims=True)
    var = jnp.mean((o - mu) ** 2, axis=-1, keepdims=True)
    o = (o - mu) / jnp.sqrt(var + 1e-5) * p["gamma"][0] + p["beta"][0]
    return jnp.transpose(o, (0, 2, 1))


# ----------------------------------------------------------------------------
# Deterministic parameter init (PyTorch layout)
# ----------------------------------------------------------------------------
def init_params(key, embed_dim, hidden_dim):
    E, Hd = embed_dim, hidden_dim
    names_shapes = [
        ("wq1", (E, E)), ("bq1", (1, E)), ("wk1", (E, E)), ("bk1", (1, E)),
        ("wv1", (E, E)), ("bv1", (1, E)), ("wo1", (E, E)), ("bo1", (1, E)),
        ("wq2", (E, E)), ("bq2", (1, E)), ("wk2", (E, E)), ("bk2", (1, E)),
        ("wv2", (E, E)), ("bv2", (1, E)), ("wo2", (E, E)), ("bo2", (1, E)),
        ("w1", (Hd, 2 * E)), ("b1", (1, Hd)),
        ("w2", (E, Hd)), ("b2", (1, E)),
    ]
    params = {}
    keys = jax.random.split(key, len(names_shapes))
    for (name, shape), k in zip(names_shapes, keys):
        params[name] = (0.05 * jax.random.normal(k, shape)).astype(jnp.float32)
    params["gamma"] = jnp.ones((1, E), jnp.float32)
    params["beta"] = jnp.zeros((1, E), jnp.float32)
    return params


if __name__ == "__main__":
    embed_dim, num_heads, hidden_dim = 32, 4, 64
    B, L, S = 2, 8, 8

    root = jax.random.PRNGKey(0)
    kq, kk1, kk2, kv1, kv2, kparm = jax.random.split(root, 6)
    q = jax.random.normal(kq, (B, L, embed_dim), jnp.float32)
    k1 = jax.random.normal(kk1, (B, S, embed_dim), jnp.float32)
    k2 = jax.random.normal(kk2, (B, S, embed_dim), jnp.float32)
    v1 = jax.random.normal(kv1, (B, S, embed_dim), jnp.float32)
    v2 = jax.random.normal(kv2, (B, S, embed_dim), jnp.float32)
    params = init_params(kparm, embed_dim, hidden_dim)
    kparams = prepare_kernel_params(params, embed_dim)

    out = cross_attention_fusion(q, k1, k2, v1, v2, kparams, num_heads)
    out = jax.block_until_ready(out)

    ref = jax.block_until_ready(_ref(q, k1, k2, v1, v2, params, num_heads))
    assert out.shape == (B, embed_dim, L), out.shape
    # Tolerance loosened slightly vs 1e-4 because the softmax denominator uses
    # pl.reciprocal(..., approx=True) (EUP approximate reciprocal).
    np.testing.assert_allclose(np.asarray(out), np.asarray(ref),
                               rtol=2e-3, atol=2e-3)
    print("KERNEL_OK")
</pallas_src>

<mosaic_0001>
module attributes {stable_mosaic.version = 11 : i64} {
  func.func @fused_kernel(%arg0: i32, %arg1: memref<1x8x32xf32, #tpu.memory_space<vmem>>, %arg2: memref<1x8x32xf32, #tpu.memory_space<vmem>>, %arg3: memref<1x8x32xf32, #tpu.memory_space<vmem>>, %arg4: memref<1x8x32xf32, #tpu.memory_space<vmem>>, %arg5: memref<1x8x32xf32, #tpu.memory_space<vmem>>, %arg6: memref<32x64xf32, #tpu.memory_space<vmem>>, %arg7: memref<32x32xf32, #tpu.memory_space<vmem>>, %arg8: memref<32x32xf32, #tpu.memory_space<vmem>>, %arg9: memref<32x32xf32, #tpu.memory_space<vmem>>, %arg10: memref<32x32xf32, #tpu.memory_space<vmem>>, %arg11: memref<32x32xf32, #tpu.memory_space<vmem>>, %arg12: memref<32x32xf32, #tpu.memory_space<vmem>>, %arg13: memref<64x64xf32, #tpu.memory_space<vmem>>, %arg14: memref<64x32xf32, #tpu.memory_space<vmem>>, %arg15: memref<11x64xf32, #tpu.memory_space<vmem>>, %arg16: memref<1x8x32xf32, #tpu.memory_space<vmem>>) attributes {dimension_semantics = [#tpu.dimension_semantics<parallel>], iteration_bounds = array<i64: 2>, scalar_prefetch = 0 : i64, scratch_operands = 0 : i64, tpu.core_type = #tpu.core_type<tc>, window_params = [{transform_indices = @transform_0, window_bounds = array<i64: 1, 8, 32>}, {transform_indices = @transform_1, window_bounds = array<i64: 1, 8, 32>}, {transform_indices = @transform_2, window_bounds = array<i64: 1, 8, 32>}, {transform_indices = @transform_3, window_bounds = array<i64: 1, 8, 32>}, {transform_indices = @transform_4, window_bounds = array<i64: 1, 8, 32>}, {pipeline_mode = #tpu.pipeline_mode<synchronous>, transform_indices = @transform_5, window_bounds = array<i64: 32, 64>}, {pipeline_mode = #tpu.pipeline_mode<synchronous>, transform_indices = @transform_6, window_bounds = array<i64: 32, 32>}, {pipeline_mode = #tpu.pipeline_mode<synchronous>, transform_indices = @transform_7, window_bounds = array<i64: 32, 32>}, {pipeline_mode = #tpu.pipeline_mode<synchronous>, transform_indices = @transform_8, window_bounds = array<i64: 32, 32>}, {pipeline_mode = #tpu.pipeline_mode<synchronous>, transform_indices = @transform_9, window_bounds = array<i64: 32, 32>}, {pipeline_mode = #tpu.pipeline_mode<synchronous>, transform_indices = @transform_10, window_bounds = array<i64: 32, 32>}, {pipeline_mode = #tpu.pipeline_mode<synchronous>, transform_indices = @transform_11, window_bounds = array<i64: 32, 32>}, {pipeline_mode = #tpu.pipeline_mode<synchronous>, transform_indices = @transform_12, window_bounds = array<i64: 64, 64>}, {pipeline_mode = #tpu.pipeline_mode<synchronous>, transform_indices = @transform_13, window_bounds = array<i64: 64, 32>}, {pipeline_mode = #tpu.pipeline_mode<synchronous>, transform_indices = @transform_14, window_bounds = array<i64: 11, 64>}, {transform_indices = @transform_15, window_bounds = array<i64: 1, 8, 32>}]} {
    %c0 = arith.constant 0 : index
    %c0_0 = arith.constant 0 : index
    %0 = vector.load %arg15[%c0, %c0_0] : memref<11x64xf32, #tpu.memory_space<vmem>>, vector<11x64xf32>
    %c0_1 = arith.constant 0 : index
    %c0_2 = arith.constant 0 : index
    %c0_3 = arith.constant 0 : index
    %1 = vector.load %arg1[%c0_1, %c0_2, %c0_3] : memref<1x8x32xf32, #tpu.memory_space<vmem>>, vector<1x8x32xf32>
    %2 = vector.shape_cast %1 : vector<1x8x32xf32> to vector<8x32xf32>
    %c0_4 = arith.constant 0 : index
    %c0_5 = arith.constant 0 : index
    %3 = vector.load %arg6[%c0_4, %c0_5] : memref<32x64xf32, #tpu.memory_space<vmem>>, vector<32x64xf32>
    %cst = arith.constant dense<0.000000e+00> : vector<8x64xf32>
    %4 = tpu.matmul %2, %3, %cst {dimension_numbers = #tpu.dot_dimension_numbers<[1], [0], [0], [1], [0, 0, 1, 1], [], []>} : vector<8x32xf32>, vector<32x64xf32>, vector<8x64xf32> -> vector<8x64xf32>
    %5 = vector.extract_strided_slice %0 {offsets = [0, 0], sizes = [1, 64], strides = [1, 1]} : vector<11x64xf32> to vector<1x64xf32>
    %6 = vector.broadcast %5 : vector<1x64xf32> to vector<8x64xf32>
    %7 = arith.addf %4, %6 : vector<8x64xf32>
    %8 = vector.extract_strided_slice %7 {offsets = [0, 0], sizes = [8, 32], strides = [1, 1]} : vector<8x64xf32> to vector<8x32xf32>
    %9 = vector.extract_strided_slice %8 {offsets = [0, 0], sizes = [8, 8], strides = [1, 1]} : vector<8x32xf32> to vector<8x8xf32>
    %10 = vector.extract_strided_slice %8 {offsets = [0, 8], sizes = [8, 8], strides = [1, 1]} : vector<8x32xf32> to vector<8x8xf32>
    %11 = vector.extract_strided_slice %8 {offsets = [0, 16], sizes = [8, 8], strides = [1, 1]} : vector<8x32xf32> to vector<8x8xf32>
    %12 = vector.extract_strided_slice %8 {offsets = [0, 24], sizes = [8, 8], strides = [1, 1]} : vector<8x32xf32> to vector<8x8xf32>
    %13 = vector.shape_cast %9 : vector<8x8xf32> to vector<1x8x8xf32>
    %14 = vector.shape_cast %10 : vector<8x8xf32> to vector<1x8x8xf32>
    %15 = vector.shape_cast %11 : vector<8x8xf32> to vector<1x8x8xf32>
    %16 = vector.shape_cast %12 : vector<8x8xf32> to vector<1x8x8xf32>
    %17 = tpu.concatenate %13, %14, %15, %16 in 0 : vector<1x8x8xf32>, vector<1x8x8xf32>, vector<1x8x8xf32>, vector<1x8x8xf32> -> vector<4x8x8xf32>
    %18 = vector.extract_strided_slice %7 {offsets = [0, 32], sizes = [8, 32], strides = [1, 1]} : vector<8x64xf32> to vector<8x32xf32>
    %19 = vector.extract_strided_slice %18 {offsets = [0, 0], sizes = [8, 8], strides = [1, 1]} : vector<8x32xf32> to vector<8x8xf32>
    %20 = vector.extract_strided_slice %18 {offsets = [0, 8], sizes = [8, 8], strides = [1, 1]} : vector<8x32xf32> to vector<8x8xf32>
    %21 = vector.extract_strided_slice %18 {offsets = [0, 16], sizes = [8, 8], strides = [1, 1]} : vector<8x32xf32> to vector<8x8xf32>
    %22 = vector.extract_strided_slice %18 {offsets = [0, 24], sizes = [8, 8], strides = [1, 1]} : vector<8x32xf32> to vector<8x8xf32>
    %23 = vector.shape_cast %19 : vector<8x8xf32> to vector<1x8x8xf32>
    %24 = vector.shape_cast %20 : vector<8x8xf32> to vector<1x8x8xf32>
    %25 = vector.shape_cast %21 : vector<8x8xf32> to vector<1x8x8xf32>
    %26 = vector.shape_cast %22 : vector<8x8xf32> to vector<1x8x8xf32>
    %27 = tpu.concatenate %23, %24, %25, %26 in 0 : vector<1x8x8xf32>, vector<1x8x8xf32>, vector<1x8x8xf32>, vector<1x8x8xf32> -> vector<4x8x8xf32>
    %28 = vector.extract_strided_slice %0 {offsets = [1, 0], sizes = [1, 32], strides = [1, 1]} : vector<11x64xf32> to vector<1x32xf32>
    %29 = vector.extract_strided_slice %0 {offsets = [2, 0], sizes = [1, 32], strides = [1, 1]} : vector<11x64xf32> to vector<1x32xf32>
    %30 = vector.extract_strided_slice %0 {offsets = [5, 0], sizes = [1, 32], strides = [1, 1]} : vector<11x64xf32> to vector<1x32xf32>
    %c0_6 = arith.constant 0 : index
    %c0_7 = arith.constant 0 : index
    %c0_8 = arith.constant 0 : index
    %31 = vector.load %arg2[%c0_6, %c0_7, %c0_8] : memref<1x8x32xf32, #tpu.memory_space<vmem>>, vector<1x8x32xf32>
    %32 = vector.shape_cast %31 : vector<1x8x32xf32> to vector<8x32xf32>
    %c0_9 = arith.constant 0 : index
    %c0_10 = arith.constant 0 : index
    %c0_11 = arith.constant 0 : index
    %33 = vector.load %arg3[%c0_9, %c0_10, %c0_11] : memref<1x8x32xf32, #tpu.memory_space<vmem>>, vector<1x8x32xf32>
    %34 = vector.shape_cast %33 : vector<1x8x32xf32> to vector<8x32xf32>
    %c0_12 = arith.constant 0 : index
    %c0_13 = arith.constant 0 : index
    %35 = vector.load %arg7[%c0_12, %c0_13] : memref<32x32xf32, #tpu.memory_space<vmem>>, vector<32x32xf32>
    %cst_14 = arith.constant dense<0.000000e+00> : vector<8x32xf32>
    %36 = tpu.matmul %32, %35, %cst_14 {dimension_numbers = #tpu.dot_dimension_numbers<[1], [0], [0], [1], [0, 0, 1, 1], [], []>} : vector<8x32xf32>, vector<32x32xf32>, vector<8x32xf32> -> vector<8x32xf32>
    %37 = vector.broadcast %28 : vector<1x32xf32> to vector<8x32xf32>
    %38 = arith.addf %36, %37 : vector<8x32xf32>
    %c0_15 = arith.constant 0 : index
    %c0_16 = arith.constant 0 : index
    %39 = vector.load %arg8[%c0_15, %c0_16] : memref<32x32xf32, #tpu.memory_space<vmem>>, vector<32x32xf32>
    %cst_17 = arith.constant dense<0.000000e+00> : vector<8x32xf32>
    %40 = tpu.matmul %34, %39, %cst_17 {dimension_numbers = #tpu.dot_dimension_numbers<[1], [0], [0], [1], [0, 0, 1, 1], [], []>} : vector<8x32xf32>, vector<32x32xf32>, vector<8x32xf32> -> vector<8x32xf32>
    %41 = vector.broadcast %29 : vector<1x32xf32> to vector<8x32xf32>
    %42 = arith.addf %40, %41 : vector<8x32xf32>
    %43 = vector.extract_strided_slice %38 {offsets = [0, 0], sizes = [8, 8], strides = [1, 1]} : vector<8x32xf32> to vector<8x8xf32>
    %44 = vector.extract_strided_slice %38 {offsets = [0, 8], sizes = [8, 8], strides = [1, 1]} : vector<8x32xf32> to vector<8x8xf32>
    %45 = vector.extract_strided_slice %38 {offsets = [0, 16], sizes = [8, 8], strides = [1, 1]} : vector<8x32xf32> to vector<8x8xf32>
    %46 = vector.extract_strided_slice %38 {offsets = [0, 24], sizes = [8, 8], strides = [1, 1]} : vector<8x32xf32> to vector<8x8xf32>
    %47 = vector.shape_cast %43 : vector<8x8xf32> to vector<1x8x8xf32>
    %48 = vector.shape_cast %44 : vector<8x8xf32> to vector<1x8x8xf32>
    %49 = vector.shape_cast %45 : vector<8x8xf32> to vector<1x8x8xf32>
    %50 = vector.shape_cast %46 : vector<8x8xf32> to vector<1x8x8xf32>
    %51 = tpu.concatenate %47, %48, %49, %50 in 0 : vector<1x8x8xf32>, vector<1x8x8xf32>, vector<1x8x8xf32>, vector<1x8x8xf32> -> vector<4x8x8xf32>
    %52 = vector.extract_strided_slice %42 {offsets = [0, 0], sizes = [8, 8], strides = [1, 1]} : vector<8x32xf32> to vector<8x8xf32>
    %53 = vector.extract_strided_slice %42 {offsets = [0, 8], sizes = [8, 8], strides = [1, 1]} : vector<8x32xf32> to vector<8x8xf32>
    %54 = vector.extract_strided_slice %42 {offsets = [0, 16], sizes = [8, 8], strides = [1, 1]} : vector<8x32xf32> to vector<8x8xf32>
    %55 = vector.extract_strided_slice %42 {offsets = [0, 24], sizes = [8, 8], strides = [1, 1]} : vector<8x32xf32> to vector<8x8xf32>
    %56 = vector.shape_cast %52 : vector<8x8xf32> to vector<1x8x8xf32>
    %57 = vector.shape_cast %53 : vector<8x8xf32> to vector<1x8x8xf32>
    %58 = vector.shape_cast %54 : vector<8x8xf32> to vector<1x8x8xf32>
    %59 = vector.shape_cast %55 : vector<8x8xf32> to vector<1x8x8xf32>
    %60 = tpu.concatenate %56, %57, %58, %59 in 0 : vector<1x8x8xf32>, vector<1x8x8xf32>, vector<1x8x8xf32>, vector<1x8x8xf32> -> vector<4x8x8xf32>
    "tpu.trace_start"() <{level = 10 : i32, message = "gld,gsd->gls"}> : () -> ()
    %cst_18 = arith.constant dense<0.000000e+00> : vector<4x8x8xf32>
    %61 = tpu.matmul %17, %51, %cst_18 {dimension_numbers = #tpu.dot_dimension_numbers<[2], [2], [1], [1], [0, 0, 0, 1, 1, 1], [0], [0]>} : vector<4x8x8xf32>, vector<4x8x8xf32>, vector<4x8x8xf32> -> vector<4x8x8xf32>
    "tpu.trace_stop"() : () -> ()
    %cst_19 = arith.constant 0.353553385 : f32
    %62 = vector.broadcast %cst_19 : f32 to vector<4x8x8xf32>
    %63 = arith.mulf %61, %62 : vector<4x8x8xf32>
    %cst_20 = arith.constant dense<0xFF800000> : vector<4x8xf32>
    %64 = vector.multi_reduction <maximumf>, %63, %cst_20 [2] : vector<4x8x8xf32> to vector<4x8xf32>
    %65 = vector.shape_cast %64 : vector<4x8xf32> to vector<4x8x1xf32>
    %66 = vector.broadcast %65 : vector<4x8x1xf32> to vector<4x8x8xf32>
    %67 = arith.subf %63, %66 : vector<4x8x8xf32>
    %68 = math.exp %67 : vector<4x8x8xf32>
    %cst_21 = arith.constant dense<0.000000e+00> : vector<4x8xf32>
    %69 = vector.multi_reduction <add>, %68, %cst_21 [2] : vector<4x8x8xf32> to vector<4x8xf32>
    %70 = vector.shape_cast %69 : vector<4x8xf32> to vector<4x8x1xf32>
    %71 = tpu.reciprocal %70 {approx = true} : vector<4x8x1xf32> -> vector<4x8x1xf32>
    %72 = vector.broadcast %71 : vector<4x8x1xf32> to vector<4x8x8xf32>
    %73 = arith.mulf %68, %72 : vector<4x8x8xf32>
    "tpu.trace_start"() <{level = 10 : i32, message = "gls,gsd->gld"}> : () -> ()
    %cst_22 = arith.constant dense<0.000000e+00> : vector<4x8x8xf32>
    %74 = tpu.matmul %73, %60, %cst_22 {dimension_numbers = #tpu.dot_dimension_numbers<[2], [1], [1], [2], [0, 0, 0, 1, 1, 2], [0], [0]>} : vector<4x8x8xf32>, vector<4x8x8xf32>, vector<4x8x8xf32> -> vector<4x8x8xf32>
    "tpu.trace_stop"() : () -> ()
    %75 = vector.extract_strided_slice %74 {offsets = [0, 0, 0], sizes = [1, 8, 8], strides = [1, 1, 1]} : vector<4x8x8xf32> to vector<1x8x8xf32>
    %76 = vector.shape_cast %75 : vector<1x8x8xf32> to vector<8x8xf32>
    %77 = vector.extract_strided_slice %74 {offsets = [1, 0, 0], sizes = [1, 8, 8], strides = [1, 1, 1]} : vector<4x8x8xf32> to vector<1x8x8xf32>
    %78 = vector.shape_cast %77 : vector<1x8x8xf32> to vector<8x8xf32>
    %79 = vector.extract_strided_slice %74 {offsets = [2, 0, 0], sizes = [1, 8, 8], strides = [1, 1, 1]} : vector<4x8x8xf32> to vector<1x8x8xf32>
    %80 = vector.shape_cast %79 : vector<1x8x8xf32> to vector<8x8xf32>
    %81 = vector.extract_strided_slice %74 {offsets = [3, 0, 0], sizes = [1, 8, 8], strides = [1, 1, 1]} : vector<4x8x8xf32> to vector<1x8x8xf32>
    %82 = vector.shape_cast %81 : vector<1x8x8xf32> to vector<8x8xf32>
    %83 = tpu.concatenate %76, %78, %80, %82 in 1 : vector<8x8xf32>, vector<8x8xf32>, vector<8x8xf32>, vector<8x8xf32> -> vector<8x32xf32>
    %c0_23 = arith.constant 0 : index
    %c0_24 = arith.constant 0 : index
    %84 = vector.load %arg11[%c0_23, %c0_24] : memref<32x32xf32, #tpu.memory_space<vmem>>, vector<32x32xf32>
    %cst_25 = arith.constant dense<0.000000e+00> : vector<8x32xf32>
    %85 = tpu.matmul %83, %84, %cst_25 {dimension_numbers = #tpu.dot_dimension_numbers<[1], [0], [0], [1], [0, 0, 1, 1], [], []>} : vector<8x32xf32>, vector<32x32xf32>, vector<8x32xf32> -> vector<8x32xf32>
    %86 = vector.broadcast %30 : vector<1x32xf32> to vector<8x32xf32>
    %87 = arith.addf %85, %86 : vector<8x32xf32>
    %88 = vector.extract_strided_slice %0 {offsets = [3, 0], sizes = [1, 32], strides = [1, 1]} : vector<11x64xf32> to vector<1x32xf32>
    %89 = vector.extract_strided_slice %0 {offsets = [4, 0], sizes = [1, 32], strides = [1, 1]} : vector<11x64xf32> to vector<1x32xf32>
    %90 = vector.extract_strided_slice %0 {offsets = [6, 0], sizes = [1, 32], strides = [1, 1]} : vector<11x64xf32> to vector<1x32xf32>
    %c0_26 = arith.constant 0 : index
    %c0_27 = arith.constant 0 : index
    %c0_28 = arith.constant 0 : index
    %91 = vector.load %arg4[%c0_26, %c0_27, %c0_28] : memref<1x8x32xf32, #tpu.memory_space<vmem>>, vector<1x8x32xf32>
    %92 = vector.shape_cast %91 : vector<1x8x32xf32> to vector<8x32xf32>
    %c0_29 = arith.constant 0 : index
    %c0_30 = arith.constant 0 : index
    %c0_31 = arith.constant 0 : index
    %93 = vector.load %arg5[%c0_29, %c0_30, %c0_31] : memref<1x8x32xf32, #tpu.memory_space<vmem>>, vector<1x8x32xf32>
    %94 = vector.shape_cast %93 : vector<1x8x32xf32> to vector<8x32xf32>
    %c0_32 = arith.constant 0 : index
    %c0_33 = arith.constant 0 : index
    %95 = vector.load %arg9[%c0_32, %c0_33] : memref<32x32xf32, #tpu.memory_space<vmem>>, vector<32x32xf32>
    %cst_34 = arith.constant dense<0.000000e+00> : vector<8x32xf32>
    %96 = tpu.matmul %92, %95, %cst_34 {dimension_numbers = #tpu.dot_dimension_numbers<[1], [0], [0], [1], [0, 0, 1, 1], [], []>} : vector<8x32xf32>, vector<32x32xf32>, vector<8x32xf32> -> vector<8x32xf32>
    %97 = vector.broadcast %88 : vector<1x32xf32> to vector<8x32xf32>
    %98 = arith.addf %96, %97 : vector<8x32xf32>
    %c0_35 = arith.constant 0 : index
    %c0_36 = arith.constant 0 : index
    %99 = vector.load %arg10[%c0_35, %c0_36] : memref<32x32xf32, #tpu.memory_space<vmem>>, vector<32x32xf32>
    %cst_37 = arith.constant dense<0.000000e+00> : vector<8x32xf32>
    %100 = tpu.matmul %94, %99, %cst_37 {dimension_numbers = #tpu.dot_dimension_numbers<[1], [0], [0], [1], [0, 0, 1, 1], [], []>} : vector<8x32xf32>, vector<32x32xf32>, vector<8x32xf32> -> vector<8x32xf32>
    %101 = vector.broadcast %89 : vector<1x32xf32> to vector<8x32xf32>
    %102 = arith.addf %100, %101 : vector<8x32xf32>
    %103 = vector.extract_strided_slice %98 {offsets = [0, 0], sizes = [8, 8], strides = [1, 1]} : vector<8x32xf32> to vector<8x8xf32>
    %104 = vector.extract_strided_slice %98 {offsets = [0, 8], sizes = [8, 8], strides = [1, 1]} : vector<8x32xf32> to vector<8x8xf32>
    %105 = vector.extract_strided_slice %98 {offsets = [0, 16], sizes = [8, 8], strides = [1, 1]} : vector<8x32xf32> to vector<8x8xf32>
    %106 = vector.extract_strided_slice %98 {offsets = [0, 24], sizes = [8, 8], strides = [1, 1]} : vector<8x32xf32> to vector<8x8xf32>
    %107 = vector.shape_cast %103 : vector<8x8xf32> to vector<1x8x8xf32>
    %108 = vector.shape_cast %104 : vector<8x8xf32> to vector<1x8x8xf32>
    %109 = vector.shape_cast %105 : vector<8x8xf32> to vector<1x8x8xf32>
    %110 = vector.shape_cast %106 : vector<8x8xf32> to vector<1x8x8xf32>
    %111 = tpu.concatenate %107, %108, %109, %110 in 0 : vector<1x8x8xf32>, vector<1x8x8xf32>, vector<1x8x8xf32>, vector<1x8x8xf32> -> vector<4x8x8xf32>
    %112 = vector.extract_strided_slice %102 {offsets = [0, 0], sizes = [8, 8], strides = [1, 1]} : vector<8x32xf32> to vector<8x8xf32>
    %113 = vector.extract_strided_slice %102 {offsets = [0, 8], sizes = [8, 8], strides = [1, 1]} : vector<8x32xf32> to vector<8x8xf32>
    %114 = vector.extract_strided_slice %102 {offsets = [0, 16], sizes = [8, 8], strides = [1, 1]} : vector<8x32xf32> to vector<8x8xf32>
    %115 = vector.extract_strided_slice %102 {offsets = [0, 24], sizes = [8, 8], strides = [1, 1]} : vector<8x32xf32> to vector<8x8xf32>
    %116 = vector.shape_cast %112 : vector<8x8xf32> to vector<1x8x8xf32>
    %117 = vector.shape_cast %113 : vector<8x8xf32> to vector<1x8x8xf32>
    %118 = vector.shape_cast %114 : vector<8x8xf32> to vector<1x8x8xf32>
    %119 = vector.shape_cast %115 : vector<8x8xf32> to vector<1x8x8xf32>
    %120 = tpu.concatenate %116, %117, %118, %119 in 0 : vector<1x8x8xf32>, vector<1x8x8xf32>, vector<1x8x8xf32>, vector<1x8x8xf32> -> vector<4x8x8xf32>
    "tpu.trace_start"() <{level = 10 : i32, message = "gld,gsd->gls"}> : () -> ()
    %cst_38 = arith.constant dense<0.000000e+00> : vector<4x8x8xf32>
    %121 = tpu.matmul %27, %111, %cst_38 {dimension_numbers = #tpu.dot_dimension_numbers<[2], [2], [1], [1], [0, 0, 0, 1, 1, 1], [0], [0]>} : vector<4x8x8xf32>, vector<4x8x8xf32>, vector<4x8x8xf32> -> vector<4x8x8xf32>
    "tpu.trace_stop"() : () -> ()
    %cst_39 = arith.constant 0.353553385 : f32
    %122 = vector.broadcast %cst_39 : f32 to vector<4x8x8xf32>
    %123 = arith.mulf %121, %122 : vector<4x8x8xf32>
    %cst_40 = arith.constant dense<0xFF800000> : vector<4x8xf32>
    %124 = vector.multi_reduction <maximumf>, %123, %cst_40 [2] : vector<4x8x8xf32> to vector<4x8xf32>
    %125 = vector.shape_cast %124 : vector<4x8xf32> to vector<4x8x1xf32>
    %126 = vector.broadcast %125 : vector<4x8x1xf32> to vector<4x8x8xf32>
    %127 = arith.subf %123, %126 : vector<4x8x8xf32>
    %128 = math.exp %127 : vector<4x8x8xf32>
    %cst_41 = arith.constant dense<0.000000e+00> : vector<4x8xf32>
    %129 = vector.multi_reduction <add>, %128, %cst_41 [2] : vector<4x8x8xf32> to vector<4x8xf32>
    %130 = vector.shape_cast %129 : vector<4x8xf32> to vector<4x8x1xf32>
    %131 = tpu.reciprocal %130 {approx = true} : vector<4x8x1xf32> -> vector<4x8x1xf32>
    %132 = vector.broadcast %131 : vector<4x8x1xf32> to vector<4x8x8xf32>
    %133 = arith.mulf %128, %132 : vector<4x8x8xf32>
    "tpu.trace_start"() <{level = 10 : i32, message = "gls,gsd->gld"}> : () -> ()
    %cst_42 = arith.constant dense<0.000000e+00> : vector<4x8x8xf32>
    %134 = tpu.matmul %133, %120, %cst_42 {dimension_numbers = #tpu.dot_dimension_numbers<[2], [1], [1], [2], [0, 0, 0, 1, 1, 2], [0], [0]>} : vector<4x8x8xf32>, vector<4x8x8xf32>, vector<4x8x8xf32> -> vector<4x8x8xf32>
    "tpu.trace_stop"() : () -> ()
    %135 = vector.extract_strided_slice %134 {offsets = [0, 0, 0], sizes = [1, 8, 8], strides = [1, 1, 1]} : vector<4x8x8xf32> to vector<1x8x8xf32>
    %136 = vector.shape_cast %135 : vector<1x8x8xf32> to vector<8x8xf32>
    %137 = vector.extract_strided_slice %134 {offsets = [1, 0, 0], sizes = [1, 8, 8], strides = [1, 1, 1]} : vector<4x8x8xf32> to vector<1x8x8xf32>
    %138 = vector.shape_cast %137 : vector<1x8x8xf32> to vector<8x8xf32>
    %139 = vector.extract_strided_slice %134 {offsets = [2, 0, 0], sizes = [1, 8, 8], strides = [1, 1, 1]} : vector<4x8x8xf32> to vector<1x8x8xf32>
    %140 = vector.shape_cast %139 : vector<1x8x8xf32> to vector<8x8xf32>
    %141 = vector.extract_strided_slice %134 {offsets = [3, 0, 0], sizes = [1, 8, 8], strides = [1, 1, 1]} : vector<4x8x8xf32> to vector<1x8x8xf32>
    %142 = vector.shape_cast %141 : vector<1x8x8xf32> to vector<8x8xf32>
    %143 = tpu.concatenate %136, %138, %140, %142 in 1 : vector<8x8xf32>, vector<8x8xf32>, vector<8x8xf32>, vector<8x8xf32> -> vector<8x32xf32>
    %c0_43 = arith.constant 0 : index
    %c0_44 = arith.constant 0 : index
    %144 = vector.load %arg12[%c0_43, %c0_44] : memref<32x32xf32, #tpu.memory_space<vmem>>, vector<32x32xf32>
    %cst_45 = arith.constant dense<0.000000e+00> : vector<8x32xf32>
    %145 = tpu.matmul %143, %144, %cst_45 {dimension_numbers = #tpu.dot_dimension_numbers<[1], [0], [0], [1], [0, 0, 1, 1], [], []>} : vector<8x32xf32>, vector<32x32xf32>, vector<8x32xf32> -> vector<8x32xf32>
    %146 = vector.broadcast %90 : vector<1x32xf32> to vector<8x32xf32>
    %147 = arith.addf %145, %146 : vector<8x32xf32>
    %148 = tpu.concatenate %87, %147 in 1 : vector<8x32xf32>, vector<8x32xf32> -> vector<8x64xf32>
    %c0_46 = arith.constant 0 : index
    %c0_47 = arith.constant 0 : index
    %149 = vector.load %arg13[%c0_46, %c0_47] : memref<64x64xf32, #tpu.memory_space<vmem>>, vector<64x64xf32>
    %cst_48 = arith.constant dense<0.000000e+00> : vector<8x64xf32>
    %150 = tpu.matmul %148, %149, %cst_48 {dimension_numbers = #tpu.dot_dimension_numbers<[1], [0], [0], [1], [0, 0, 1, 1], [], []>} : vector<8x64xf32>, vector<64x64xf32>, vector<8x64xf32> -> vector<8x64xf32>
    %151 = vector.extract_strided_slice %0 {offsets = [7, 0], sizes = [1, 64], strides = [1, 1]} : vector<11x64xf32> to vector<1x64xf32>
    %152 = vector.broadcast %151 : vector<1x64xf32> to vector<8x64xf32>
    %153 = arith.addf %150, %152 : vector<8x64xf32>
    %cst_49 = arith.constant 0.000000e+00 : f32
    %154 = vector.broadcast %cst_49 : f32 to vector<8x64xf32>
    %155 = arith.maximumf %153, %154 : vector<8x64xf32>
    %c0_50 = arith.constant 0 : index
    %c0_51 = arith.constant 0 : index
    %156 = vector.load %arg14[%c0_50, %c0_51] : memref<64x32xf32, #tpu.memory_space<vmem>>, vector<64x32xf32>
    %cst_52 = arith.constant dense<0.000000e+00> : vector<8x32xf32>
    %157 = tpu.matmul %155, %156, %cst_52 {dimension_numbers = #tpu.dot_dimension_numbers<[1], [0], [0], [1], [0, 0, 1, 1], [], []>} : vector<8x64xf32>, vector<64x32xf32>, vector<8x32xf32> -> vector<8x32xf32>
    %158 = vector.extract_strided_slice %0 {offsets = [8, 0], sizes = [1, 32], strides = [1, 1]} : vector<11x64xf32> to vector<1x32xf32>
    %159 = vector.broadcast %158 : vector<1x32xf32> to vector<8x32xf32>
    %160 = arith.addf %157, %159 : vector<8x32xf32>
    %161 = arith.addf %160, %2 : vector<8x32xf32>
    %cst_53 = arith.constant dense<0.000000e+00> : vector<8xf32>
    %162 = vector.multi_reduction <add>, %161, %cst_53 [1] : vector<8x32xf32> to vector<8xf32>
    %163 = vector.shape_cast %162 : vector<8xf32> to vector<8x1xf32>
    %cst_54 = arith.constant 3.200000e+01 : f32
    %164 = vector.broadcast %cst_54 : f32 to vector<8x1xf32>
    %165 = arith.divf %163, %164 : vector<8x1xf32>
    %166 = vector.broadcast %165 : vector<8x1xf32> to vector<8x32xf32>
    %167 = arith.subf %161, %166 : vector<8x32xf32>
    %168 = arith.mulf %167, %167 : vector<8x32xf32>
    %cst_55 = arith.constant dense<0.000000e+00> : vector<8xf32>
    %169 = vector.multi_reduction <add>, %168, %cst_55 [1] : vector<8x32xf32> to vector<8xf32>
    %170 = vector.shape_cast %169 : vector<8xf32> to vector<8x1xf32>
    %cst_56 = arith.constant 3.200000e+01 : f32
    %171 = vector.broadcast %cst_56 : f32 to vector<8x1xf32>
    %172 = arith.divf %170, %171 : vector<8x1xf32>
    %173 = vector.broadcast %165 : vector<8x1xf32> to vector<8x32xf32>
    %174 = arith.subf %161, %173 : vector<8x32xf32>
    %cst_57 = arith.constant 9.99999974E-6 : f32
    %175 = vector.broadcast %cst_57 : f32 to vector<8x1xf32>
    %176 = arith.addf %172, %175 : vector<8x1xf32>
    %177 = math.rsqrt %176 : vector<8x1xf32>
    %178 = vector.broadcast %177 : vector<8x1xf32> to vector<8x32xf32>
    %179 = arith.mulf %174, %178 : vector<8x32xf32>
    %180 = vector.extract_strided_slice %0 {offsets = [9, 0], sizes = [1, 32], strides = [1, 1]} : vector<11x64xf32> to vector<1x32xf32>
    %181 = vector.broadcast %180 : vector<1x32xf32> to vector<8x32xf32>
    %182 = arith.mulf %179, %181 : vector<8x32xf32>
    %183 = vector.extract_strided_slice %0 {offsets = [10, 0], sizes = [1, 32], strides = [1, 1]} : vector<11x64xf32> to vector<1x32xf32>
    %184 = vector.broadcast %183 : vector<1x32xf32> to vector<8x32xf32>
    %185 = arith.addf %182, %184 : vector<8x32xf32>
    %c0_58 = arith.constant 0 : index
    %c0_59 = arith.constant 0 : index
    %c0_60 = arith.constant 0 : index
    %186 = vector.load %arg16[%c0_58, %c0_59, %c0_60] : memref<1x8x32xf32, #tpu.memory_space<vmem>>, vector<1x8x32xf32>
    %187 = vector.shape_cast %186 : vector<1x8x32xf32> to vector<8x32xf32>
    %188 = vector.shape_cast %185 : vector<8x32xf32> to vector<1x8x32xf32>
    tpu.vector_store %arg16[%c0_58, %c0_59, %c0_60], %188 {strides = array<i32>} : memref<1x8x32xf32, #tpu.memory_space<vmem>>, vector<1x8x32xf32>,
    return
  }
  func.func @transform_0(%arg0: i32) -> (i32, i32, i32) {
    %c0_i32 = arith.constant 0 : i32
    %c0_i32_0 = arith.constant 0 : i32
    %c0_i32_1 = arith.constant 0 : i32
    return %arg0, %c0_i32, %c0_i32_0 : i32, i32, i32
  }
  func.func @transform_1(%arg0: i32) -> (i32, i32, i32) {
    %c0_i32 = arith.constant 0 : i32
    %c0_i32_0 = arith.constant 0 : i32
    %c0_i32_1 = arith.constant 0 : i32
    return %arg0, %c0_i32, %c0_i32_0 : i32, i32, i32
  }
  func.func @transform_2(%arg0: i32) -> (i32, i32, i32) {
    %c0_i32 = arith.constant 0 : i32
    %c0_i32_0 = arith.constant 0 : i32
    %c0_i32_1 = arith.constant 0 : i32
    return %arg0, %c0_i32, %c0_i32_0 : i32, i32, i32
  }
  func.func @transform_3(%arg0: i32) -> (i32, i32, i32) {
    %c0_i32 = arith.constant 0 : i32
    %c0_i32_0 = arith.constant 0 : i32
    %c0_i32_1 = arith.constant 0 : i32
    return %arg0, %c0_i32, %c0_i32_0 : i32, i32, i32
  }
  func.func @transform_4(%arg0: i32) -> (i32, i32, i32) {
    %c0_i32 = arith.constant 0 : i32
    %c0_i32_0 = arith.constant 0 : i32
    %c0_i32_1 = arith.constant 0 : i32
    return %arg0, %c0_i32, %c0_i32_0 : i32, i32, i32
  }
  func.func @transform_5(%arg0: i32) -> (i32, i32) {
    %c0_i32 = arith.constant 0 : i32
    %c0_i32_0 = arith.constant 0 : i32
    %c0_i32_1 = arith.constant 0 : i32
    return %c0_i32, %c0_i32_0 : i32, i32
  }
  func.func @transform_6(%arg0: i32) -> (i32, i32) {
    %c0_i32 = arith.constant 0 : i32
    %c0_i32_0 = arith.constant 0 : i32
    %c0_i32_1 = arith.constant 0 : i32
    return %c0_i32, %c0_i32_0 : i32, i32
  }
  func.func @transform_7(%arg0: i32) -> (i32, i32) {
    %c0_i32 = arith.constant 0 : i32
    %c0_i32_0 = arith.constant 0 : i32
    %c0_i32_1 = arith.constant 0 : i32
    return %c0_i32, %c0_i32_0 : i32, i32
  }
  func.func @transform_8(%arg0: i32) -> (i32, i32) {
    %c0_i32 = arith.constant 0 : i32
    %c0_i32_0 = arith.constant 0 : i32
    %c0_i32_1 = arith.constant 0 : i32
    return %c0_i32, %c0_i32_0 : i32, i32
  }
  func.func @transform_9(%arg0: i32) -> (i32, i32) {
    %c0_i32 = arith.constant 0 : i32
    %c0_i32_0 = arith.constant 0 : i32
    %c0_i32_1 = arith.constant 0 : i32
    return %c0_i32, %c0_i32_0 : i32, i32
  }
  func.func @transform_10(%arg0: i32) -> (i32, i32) {
    %c0_i32 = arith.constant 0 : i32
    %c0_i32_0 = arith.constant 0 : i32
    %c0_i32_1 = arith.constant 0 : i32
    return %c0_i32, %c0_i32_0 : i32, i32
  }
  func.func @transform_11(%arg0: i32) -> (i32, i32) {
    %c0_i32 = arith.constant 0 : i32
    %c0_i32_0 = arith.constant 0 : i32
    %c0_i32_1 = arith.constant 0 : i32
    return %c0_i32, %c0_i32_0 : i32, i32
  }
  func.func @transform_12(%arg0: i32) -> (i32, i32) {
    %c0_i32 = arith.constant 0 : i32
    %c0_i32_0 = arith.constant 0 : i32
    %c0_i32_1 = arith.constant 0 : i32
    return %c0_i32, %c0_i32_0 : i32, i32
  }
  func.func @transform_13(%arg0: i32) -> (i32, i32) {
    %c0_i32 = arith.constant 0 : i32
    %c0_i32_0 = arith.constant 0 : i32
    %c0_i32_1 = arith.constant 0 : i32
    return %c0_i32, %c0_i32_0 : i32, i32
  }
  func.func @transform_14(%arg0: i32) -> (i32, i32) {
    %c0_i32 = arith.constant 0 : i32
    %c0_i32_0 = arith.constant 0 : i32
    %c0_i32_1 = arith.constant 0 : i32
    return %c0_i32, %c0_i32_0 : i32, i32
  }
  func.func @transform_15(%arg0: i32) -> (i32, i32, i32) {
    %c0_i32 = arith.constant 0 : i32
    %c0_i32_0 = arith.constant 0 : i32
    %c0_i32_1 = arith.constant 0 : i32
    return %arg0, %c0_i32, %c0_i32_0 : i32, i32, i32
  }
}

</mosaic_0001>

<llo_original>
// kernel: tpu_custom_call.1
$region0: #{tpu_custom_call.1}
  #allocation0 [shape = 'u32[]', space=smem, size = 0x4, offset = 0x4, fixed_abs, tag = 'smem constant byte address 0x4 - core index']
  #allocation1 [shape = 'u32[144,128]{1,0:T(1,128)}', space=vmem, size = 0x12000, scoped, tag = 'internal scratch']
  %s0 = inlined_call_operand.vmem [shape: f32[2,8,32], index: 0, kind: input, shape index: {}]
  %s1 = inlined_call_operand.hbm [shape: f32[2,8,32], index: 1, kind: input, shape index: {}]
  %s2 = inlined_call_operand.hbm [shape: f32[2,8,32], index: 2, kind: input, shape index: {}]
  %s3 = inlined_call_operand.hbm [shape: f32[2,8,32], index: 3, kind: input, shape index: {}]
  %s4 = inlined_call_operand.hbm [shape: f32[2,8,32], index: 4, kind: input, shape index: {}]
  %s5 = inlined_call_operand.vmem [shape: f32[32,64], index: 5, kind: input, shape index: {}]
  %s6 = inlined_call_operand.hbm [shape: f32[32,32], index: 6, kind: input, shape index: {}]
  %s7 = inlined_call_operand.hbm [shape: f32[32,32], index: 7, kind: input, shape index: {}]
  %s8 = inlined_call_operand.hbm [shape: f32[32,32], index: 8, kind: input, shape index: {}]
  %s9 = inlined_call_operand.hbm [shape: f32[32,32], index: 9, kind: input, shape index: {}]
  %s10 = inlined_call_operand.hbm [shape: f32[32,32], index: 10, kind: input, shape index: {}]
  %s11 = inlined_call_operand.hbm [shape: f32[32,32], index: 11, kind: input, shape index: {}]
  %s12 = inlined_call_operand.vmem [shape: f32[64,64], index: 12, kind: input, shape index: {}]
  %s13 = inlined_call_operand.vmem [shape: f32[64,32], index: 13, kind: input, shape index: {}]
  %s14 = inlined_call_operand.hbm [shape: f32[11,64], index: 14, kind: input, shape index: {}]
  %s15 = inlined_call_operand.hbm [shape: f32[2,8,32], index: 15, kind: output, shape index: {}]
  %s16 = sld [smem:[#allocation0]]
  $region137: #{tpu_custom_call.1} parent=0
    _
  %s18 = ssub.s32 1, %s16
  %s19 = scalar_select 0, %s18, %s16
  $region1: #{tpu_custom_call.1} parent=0
    #allocation2 [shape = 'u8[8192]{0}', space=vmem, size = 0x2000, scoped, tag = 'input window, operand 1']
    #allocation3 [shape = 's32[2]{0}', space=sflag, size = 0x8, scoped, tag = 'scoped memory for tpu_custom_call.1']
    #allocation4 [shape = 's32[2]{0}', space=sflag, size = 0x8, scoped, tag = 'scoped memory for tpu_custom_call.1']
    #allocation5 [shape = 'u8[8192]{0}', space=vmem, size = 0x2000, scoped, tag = 'input window, operand 2']
    #allocation6 [shape = 's32[2]{0}', space=sflag, size = 0x8, scoped, tag = 'scoped memory for tpu_custom_call.1']
    #allocation7 [shape = 'u8[8192]{0}', space=vmem, size = 0x2000, scoped, tag = 'input window, operand 3']
    #allocation8 [shape = 'u8[8192]{0}', space=vmem, size = 0x2000, scoped, tag = 'input window, operand 4']
    #allocation9 [shape = 's32[2]{0}', space=sflag, size = 0x8, scoped, tag = 'scoped memory for tpu_custom_call.1']
    #allocation10 [shape = 'u8[16384]{0}', space=vmem, size = 0x4000, scoped, tag = 'input window, operand 6, single buffered']
    #allocation11 [shape = 'u8[16384]{0}', space=vmem, size = 0x4000, scoped, tag = 'input window, operand 7, single buffered']
    #allocation12 [shape = 's32[1]{0}', space=sflag, size = 0x4, scoped, tag = 'scoped memory for tpu_custom_call.1']
    #allocation13 [shape = 'u8[16384]{0}', space=vmem, size = 0x4000, scoped, tag = 'input window, operand 8, single buffered']
    #allocation14 [shape = 'u8[16384]{0}', space=vmem, size = 0x4000, scoped, tag = 'input window, operand 9, single buffered']
    #allocation15 [shape = 's32[1]{0}', space=sflag, size = 0x4, scoped, tag = 'scoped memory for tpu_custom_call.1']
    #allocation16 [shape = 'u8[16384]{0}', space=vmem, size = 0x4000, scoped, tag = 'input window, operand 10, single buffered']
    #allocation17 [shape = 'u8[16384]{0}', space=vmem, size = 0x4000, scoped, tag = 'input window, operand 11, single buffered']
    #allocation18 [shape = 's32[1]{0}', space=sflag, size = 0x4, scoped, tag = 'scoped memory for tpu_custom_call.1']
    #allocation19 [shape = 'u8[8192]{0}', space=vmem, size = 0x2000, scoped, tag = 'input window, operand 14, single buffered']
    #allocation20 [shape = 'u8[8192]{0}', space=vmem, size = 0x2000, scoped, tag = 'output window, operand 0']
    %20 = vsyncpa [#allocation3], 0
    %s21 = scalar_lea.sflag [#allocation3], 1
    %22 = vsyncpa %s21, 0
    %23 = vsyncpa [#allocation6], 0
    %s24 = scalar_lea.sflag [#allocation6], 1
    %25 = vsyncpa %s24, 0
    %26 = vsyncpa [#allocation9], 0
    %s27 = scalar_lea.sflag [#allocation9], 1
    %28 = vsyncpa %s27, 0
    %29 = vsyncpa [#allocation12], 0
    %30 = vsyncpa [#allocation15], 0
    %31 = vsyncpa [#allocation18], 0
    %32 = vsyncpa [#allocation4], 0
    %s33 = scalar_lea.sflag [#allocation4], 1
    %34 = vsyncpa %s33, 0
    loop: start=0, step=1, limit=4
    $region2: #{tpu_custom_call.1} parent=1 // loop_pre_header
      _
    $region3: #{tpu_custom_call.1} parent=1 // loop_header
      %s36 = sphi 0, %s40
      %p37 = scmp.ge.s32.totalorder %s36, 4
      %s46 = sphi 0, %s48
      %s49 = sphi 0, %s46
      %s50 = sphi 0, %s49
      %s66 = sphi 0, %s50
      %s72 = sphi 0, %s74
      %s75 = sphi 0, %s72
      %s76 = sphi 0, %s75
      %s92 = sphi 0, %s76
      %s98 = sphi 0, %s100
      %s101 = sphi 0, %s98
      %s102 = sphi 0, %s101
      %s118 = sphi 0, %s102
      %s124 = sphi 0, %s126
      %s127 = sphi 0, %s124
      %s128 = sphi 0, %s127
      %s144 = sphi 0, %s128
      %s150 = sphi 0, %s152
      %s153 = sphi 0, %s150
      %s154 = sphi 0, %s153
      %s170 = sphi 0, %s154
      %s174 = sphi 0, %s174
      %s176 = sphi 0, %s174
      %s177 = sphi 0, %s176
      %s191 = sphi 0, %s177
      %s195 = sphi 0, %s195
      %s197 = sphi 0, %s195
      %s198 = sphi 0, %s197
      %s212 = sphi 0, %s198
      %s216 = sphi 0, %s216
      %s218 = sphi 0, %s216
      %s219 = sphi 0, %s218
      %s233 = sphi 0, %s219
      %s237 = sphi 0, %s237
      %s239 = sphi 0, %s237
      %s240 = sphi 0, %s239
      %s254 = sphi 0, %s240
      %s258 = sphi 0, %s258
      %s260 = sphi 0, %s258
      %s261 = sphi 0, %s260
      %s275 = sphi 0, %s261
      %s279 = sphi 0, %s279
      %s281 = sphi 0, %s279
      %s282 = sphi 0, %s281
      %s296 = sphi 0, %s282
      %s300 = sphi 0, %s300
      %s302 = sphi 0, %s300
      %s303 = sphi 0, %s302
      %s317 = sphi 0, %s303
      %s321 = sphi 0, %s321
      %s323 = sphi 0, %s321
      %s324 = sphi 0, %s323
      %s338 = sphi 0, %s324
      %s342 = sphi 0, %s342
      %s344 = sphi 0, %s342
      %s345 = sphi 0, %s344
      %s359 = sphi 0, %s345
      %s363 = sphi 0, %s363
      %s365 = sphi 0, %s363
      %s366 = sphi 0, %s365
      %s380 = sphi 0, %s366
      %s386 = sphi 0, %s388
      %s389 = sphi 0, %s386
      %s390 = sphi 0, %s389
      %s406 = sphi 0, %s390
    $region4: #{tpu_custom_call.1} parent=1 // loop_header_branch
      %39 = sbr.rel (%p37) target = $region8
    $region5: #{tpu_custom_call.1} parent=1 // loop_body
      %s41 = ssub.s32 %s36, 1
      %s42 = ssub.s32 %s36, 2
      %s43 = sadd.s32 %s36, 1
      %s44 = ssub.s32 %s36, %s43
      %p45 = scmp.eq.s32.totalorder %s44, 0
      %s47 = sadd.s32 %s46, 1
      %s48 = scalar_select %p45, %s46, %s47
      %p51 = pneg %p45
      %p52 = scmp.eq.s32.totalorder %s36, 1
      %p53 = por %p51, %p52
      %p54 = scmp.ne.s32.totalorder %s46, %s49
      %p55 = scmp.eq.s32.totalorder %s36, 0
      %p56 = por %p54, %p55
      %p57 = scmp.ne.s32.totalorder %s46, %s49
      %p58 = scmp.eq.s32.totalorder %s41, 1
      %p59 = por %p57, %p58
      %p60 = scmp.ne.s32.totalorder %s49, %s50
      %p61 = scmp.eq.s32.totalorder %s41, 0
      %p62 = por %p60, %p61
      %p63 = scmp.ne.s32.totalorder %s49, %s50
      %p64 = scmp.eq.s32.totalorder %s42, 1
      %p65 = por %p63, %p64
      %p67 = scmp.ne.s32.totalorder %s50, %s66
      %p68 = scmp.eq.s32.totalorder %s42, 0
      %p69 = por %p67, %p68
      %s70 = ssub.s32 %s36, %s43
      %p71 = scmp.eq.s32.totalorder %s70, 0
      %s73 = sadd.s32 %s72, 1
      %s74 = scalar_select %p71, %s72, %s73
      %p77 = pneg %p71
      %p78 = scmp.eq.s32.totalorder %s36, 1
      %p79 = por %p77, %p78
      %p80 = scmp.ne.s32.totalorder %s72, %s75
      %p81 = scmp.eq.s32.totalorder %s36, 0
      %p82 = por %p80, %p81
      %p83 = scmp.ne.s32.totalorder %s72, %s75
      %p84 = scmp.eq.s32.totalorder %s41, 1
      %p85 = por %p83, %p84
      %p86 = scmp.ne.s32.totalorder %s75, %s76
      %p87 = scmp.eq.s32.totalorder %s41, 0
      %p88 = por %p86, %p87
      %p89 = scmp.ne.s32.totalorder %s75, %s76
      %p90 = scmp.eq.s32.totalorder %s42, 1
      %p91 = por %p89, %p90
      %p93 = scmp.ne.s32.totalorder %s76, %s92
      %p94 = scmp.eq.s32.totalorder %s42, 0
      %p95 = por %p93, %p94
      %s96 = ssub.s32 %s36, %s43
      %p97 = scmp.eq.s32.totalorder %s96, 0
      %s99 = sadd.s32 %s98, 1
      %s100 = scalar_select %p97, %s98, %s99
      %p103 = pneg %p97
      %p104 = scmp.eq.s32.totalorder %s36, 1
      %p105 = por %p103, %p104
      %p106 = scmp.ne.s32.totalorder %s98, %s101
      %p107 = scmp.eq.s32.totalorder %s36, 0
      %p108 = por %p106, %p107
      %p109 = scmp.ne.s32.totalorder %s98, %s101
      %p110 = scmp.eq.s32.totalorder %s41, 1
      %p111 = por %p109, %p110
      %p112 = scmp.ne.s32.totalorder %s101, %s102
      %p113 = scmp.eq.s32.totalorder %s41, 0
      %p114 = por %p112, %p113
      %p115 = scmp.ne.s32.totalorder %s101, %s102
      %p116 = scmp.eq.s32.totalorder %s42, 1
      %p117 = por %p115, %p116
      %p119 = scmp.ne.s32.totalorder %s102, %s118
      %p120 = scmp.eq.s32.totalorder %s42, 0
      %p121 = por %p119, %p120
      %s122 = ssub.s32 %s36, %s43
      %p123 = scmp.eq.s32.totalorder %s122, 0
      %s125 = sadd.s32 %s124, 1
      %s126 = scalar_select %p123, %s124, %s125
      %p129 = pneg %p123
      %p130 = scmp.eq.s32.totalorder %s36, 1
      %p131 = por %p129, %p130
      %p132 = scmp.ne.s32.totalorder %s124, %s127
      %p133 = scmp.eq.s32.totalorder %s36, 0
      %p134 = por %p132, %p133
      %p135 = scmp.ne.s32.totalorder %s124, %s127
      %p136 = scmp.eq.s32.totalorder %s41, 1
      %p137 = por %p135, %p136
      %p138 = scmp.ne.s32.totalorder %s127, %s128
      %p139 = scmp.eq.s32.totalorder %s41, 0
      %p140 = por %p138, %p139
      %p141 = scmp.ne.s32.totalorder %s127, %s128
      %p142 = scmp.eq.s32.totalorder %s42, 1
      %p143 = por %p141, %p142
      %p145 = scmp.ne.s32.totalorder %s128, %s144
      %p146 = scmp.eq.s32.totalorder %s42, 0
      %p147 = por %p145, %p146
      %s148 = ssub.s32 %s36, %s43
      %p149 = scmp.eq.s32.totalorder %s148, 0
      %s151 = sadd.s32 %s150, 1
      %s152 = scalar_select %p149, %s150, %s151
      %p155 = pneg %p149
      %p156 = scmp.eq.s32.totalorder %s36, 1
      %p157 = por %p155, %p156
      %p158 = scmp.ne.s32.totalorder %s150, %s153
      %p159 = scmp.eq.s32.totalorder %s36, 0
      %p160 = por %p158, %p159
      %p161 = scmp.ne.s32.totalorder %s150, %s153
      %p162 = scmp.eq.s32.totalorder %s41, 1
      %p163 = por %p161, %p162
      %p164 = scmp.ne.s32.totalorder %s153, %s154
      %p165 = scmp.eq.s32.totalorder %s41, 0
      %p166 = por %p164, %p165
      %p167 = scmp.ne.s32.totalorder %s153, %s154
      %p168 = scmp.eq.s32.totalorder %s42, 1
      %p169 = por %p167, %p168
      %p171 = scmp.ne.s32.totalorder %s154, %s170
      %p172 = scmp.eq.s32.totalorder %s42, 0
      %p173 = por %p171, %p172
      %s175 = sadd.s32 %s174, 1
      %p178 = scmp.eq.s32.totalorder %s36, 1
      %p179 = scmp.ne.s32.totalorder %s174, %s176
      %p180 = scmp.eq.s32.totalorder %s36, 0
      %p181 = por %p179, %p180
      %p182 = scmp.ne.s32.totalorder %s174, %s176
      %p183 = scmp.eq.s32.totalorder %s41, 1
      %p184 = por %p182, %p183
      %p185 = scmp.ne.s32.totalorder %s176, %s177
      %p186 = scmp.eq.s32.totalorder %s41, 0
      %p187 = por %p185, %p186
      %p188 = scmp.ne.s32.totalorder %s176, %s177
      %p189 = scmp.eq.s32.totalorder %s42, 1
      %p190 = por %p188, %p189
      %p192 = scmp.ne.s32.totalorder %s177, %s191
      %p193 = scmp.eq.s32.totalorder %s42, 0
      %p194 = por %p192, %p193
      %s196 = sadd.s32 %s195, 1
      %p199 = scmp.eq.s32.totalorder %s36, 1
      %p200 = scmp.ne.s32.totalorder %s195, %s197
      %p201 = scmp.eq.s32.totalorder %s36, 0
      %p202 = por %p200, %p201
      %p203 = scmp.ne.s32.totalorder %s195, %s197
      %p204 = scmp.eq.s32.totalorder %s41, 1
      %p205 = por %p203, %p204
      %p206 = scmp.ne.s32.totalorder %s197, %s198
      %p207 = scmp.eq.s32.totalorder %s41, 0
      %p208 = por %p206, %p207
      %p209 = scmp.ne.s32.totalorder %s197, %s198
      %p210 = scmp.eq.s32.totalorder %s42, 1
      %p211 = por %p209, %p210
      %p213 = scmp.ne.s32.totalorder %s198, %s212
      %p214 = scmp.eq.s32.totalorder %s42, 0
      %p215 = por %p213, %p214
      %s217 = sadd.s32 %s216, 1
      %p220 = scmp.eq.s32.totalorder %s36, 1
      %p221 = scmp.ne.s32.totalorder %s216, %s218
      %p222 = scmp.eq.s32.totalorder %s36, 0
      %p223 = por %p221, %p222
      %p224 = scmp.ne.s32.totalorder %s216, %s218
      %p225 = scmp.eq.s32.totalorder %s41, 1
      %p226 = por %p224, %p225
      %p227 = scmp.ne.s32.totalorder %s218, %s219
      %p228 = scmp.eq.s32.totalorder %s41, 0
      %p229 = por %p227, %p228
      %p230 = scmp.ne.s32.totalorder %s218, %s219
      %p231 = scmp.eq.s32.totalorder %s42, 1
      %p232 = por %p230, %p231
      %p234 = scmp.ne.s32.totalorder %s219, %s233
      %p235 = scmp.eq.s32.totalorder %s42, 0
      %p236 = por %p234, %p235
      %s238 = sadd.s32 %s237, 1
      %p241 = scmp.eq.s32.totalorder %s36, 1
      %p242 = scmp.ne.s32.totalorder %s237, %s239
      %p243 = scmp.eq.s32.totalorder %s36, 0
      %p244 = por %p242, %p243
      %p245 = scmp.ne.s32.totalorder %s237, %s239
      %p246 = scmp.eq.s32.totalorder %s41, 1
      %p247 = por %p245, %p246
      %p248 = scmp.ne.s32.totalorder %s239, %s240
      %p249 = scmp.eq.s32.totalorder %s41, 0
      %p250 = por %p248, %p249
      %p251 = scmp.ne.s32.totalorder %s239, %s240
      %p252 = scmp.eq.s32.totalorder %s42, 1
      %p253 = por %p251, %p252
      %p255 = scmp.ne.s32.totalorder %s240, %s254
      %p256 = scmp.eq.s32.totalorder %s42, 0
      %p257 = por %p255, %p256
      %s259 = sadd.s32 %s258, 1
      %p262 = scmp.eq.s32.totalorder %s36, 1
      %p263 = scmp.ne.s32.totalorder %s258, %s260
      %p264 = scmp.eq.s32.totalorder %s36, 0
      %p265 = por %p263, %p264
      %p266 = scmp.ne.s32.totalorder %s258, %s260
      %p267 = scmp.eq.s32.totalorder %s41, 1
      %p268 = por %p266, %p267
      %p269 = scmp.ne.s32.totalorder %s260, %s261
      %p270 = scmp.eq.s32.totalorder %s41, 0
      %p271 = por %p269, %p270
      %p272 = scmp.ne.s32.totalorder %s260, %s261
      %p273 = scmp.eq.s32.totalorder %s42, 1
      %p274 = por %p272, %p273
      %p276 = scmp.ne.s32.totalorder %s261, %s275
      %p277 = scmp.eq.s32.totalorder %s42, 0
      %p278 = por %p276, %p277
      %s280 = sadd.s32 %s279, 1
      %p283 = scmp.eq.s32.totalorder %s36, 1
      %p284 = scmp.ne.s32.totalorder %s279, %s281
      %p285 = scmp.eq.s32.totalorder %s36, 0
      %p286 = por %p284, %p285
      %p287 = scmp.ne.s32.totalorder %s279, %s281
      %p288 = scmp.eq.s32.totalorder %s41, 1
      %p289 = por %p287, %p288
      %p290 = scmp.ne.s32.totalorder %s281, %s282
      %p291 = scmp.eq.s32.totalorder %s41, 0
      %p292 = por %p290, %p291
      %p293 = scmp.ne.s32.totalorder %s281, %s282
      %p294 = scmp.eq.s32.totalorder %s42, 1
      %p295 = por %p293, %p294
      %p297 = scmp.ne.s32.totalorder %s282, %s296
      %p298 = scmp.eq.s32.totalorder %s42, 0
      %p299 = por %p297, %p298
      %s301 = sadd.s32 %s300, 1
      %p304 = scmp.eq.s32.totalorder %s36, 1
      %p305 = scmp.ne.s32.totalorder %s300, %s302
      %p306 = scmp.eq.s32.totalorder %s36, 0
      %p307 = por %p305, %p306
      %p308 = scmp.ne.s32.totalorder %s300, %s302
      %p309 = scmp.eq.s32.totalorder %s41, 1
      %p310 = por %p308, %p309
      %p311 = scmp.ne.s32.totalorder %s302, %s303
      %p312 = scmp.eq.s32.totalorder %s41, 0
      %p313 = por %p311, %p312
      %p314 = scmp.ne.s32.totalorder %s302, %s303
      %p315 = scmp.eq.s32.totalorder %s42, 1
      %p316 = por %p314, %p315
      %p318 = scmp.ne.s32.totalorder %s303, %s317
      %p319 = scmp.eq.s32.totalorder %s42, 0
      %p320 = por %p318, %p319
      %s322 = sadd.s32 %s321, 1
      %p325 = scmp.eq.s32.totalorder %s36, 1
      %p326 = scmp.ne.s32.totalorder %s321, %s323
      %p327 = scmp.eq.s32.totalorder %s36, 0
      %p328 = por %p326, %p327
      %p329 = scmp.ne.s32.totalorder %s321, %s323
      %p330 = scmp.eq.s32.totalorder %s41, 1
      %p331 = por %p329, %p330
      %p332 = scmp.ne.s32.totalorder %s323, %s324
      %p333 = scmp.eq.s32.totalorder %s41, 0
      %p334 = por %p332, %p333
      %p335 = scmp.ne.s32.totalorder %s323, %s324
      %p336 = scmp.eq.s32.totalorder %s42, 1
      %p337 = por %p335, %p336
      %p339 = scmp.ne.s32.totalorder %s324, %s338
      %p340 = scmp.eq.s32.totalorder %s42, 0
      %p341 = por %p339, %p340
      %s343 = sadd.s32 %s342, 1
      %p346 = scmp.eq.s32.totalorder %s36, 1
      %p347 = scmp.ne.s32.totalorder %s342, %s344
      %p348 = scmp.eq.s32.totalorder %s36, 0
      %p349 = por %p347, %p348
      %p350 = scmp.ne.s32.totalorder %s342, %s344
      %p351 = scmp.eq.s32.totalorder %s41, 1
      %p352 = por %p350, %p351
      %p353 = scmp.ne.s32.totalorder %s344, %s345
      %p354 = scmp.eq.s32.totalorder %s41, 0
      %p355 = por %p353, %p354
      %p356 = scmp.ne.s32.totalorder %s344, %s345
      %p357 = scmp.eq.s32.totalorder %s42, 1
      %p358 = por %p356, %p357
      %p360 = scmp.ne.s32.totalorder %s345, %s359
      %p361 = scmp.eq.s32.totalorder %s42, 0
      %p362 = por %p360, %p361
      %s364 = sadd.s32 %s363, 1
      %p367 = scmp.eq.s32.totalorder %s36, 1
      %p368 = scmp.ne.s32.totalorder %s363, %s365
      %p369 = scmp.eq.s32.totalorder %s36, 0
      %p370 = por %p368, %p369
      %p371 = scmp.ne.s32.totalorder %s363, %s365
      %p372 = scmp.eq.s32.totalorder %s41, 1
      %p373 = por %p371, %p372
      %p374 = scmp.ne.s32.totalorder %s365, %s366
      %p375 = scmp.eq.s32.totalorder %s41, 0
      %p376 = por %p374, %p375
      %p377 = scmp.ne.s32.totalorder %s365, %s366
      %p378 = scmp.eq.s32.totalorder %s42, 1
      %p379 = por %p377, %p378
      %p381 = scmp.ne.s32.totalorder %s366, %s380
      %p382 = scmp.eq.s32.totalorder %s42, 0
      %p383 = por %p381, %p382
      %s384 = ssub.s32 %s36, %s43
      %p385 = scmp.eq.s32.totalorder %s384, 0
      %s387 = sadd.s32 %s386, 1
      %s388 = scalar_select %p385, %s386, %s387
      %p391 = pneg %p385
      %p392 = scmp.eq.s32.totalorder %s36, 1
      %p393 = por %p391, %p392
      %p394 = scmp.ne.s32.totalorder %s386, %s389
      %p395 = scmp.eq.s32.totalorder %s36, 0
      %p396 = por %p394, %p395
      %p397 = scmp.ne.s32.totalorder %s386, %s389
      %p398 = scmp.eq.s32.totalorder %s41, 1
      %p399 = por %p397, %p398
      %p400 = scmp.ne.s32.totalorder %s389, %s390
      %p401 = scmp.eq.s32.totalorder %s41, 0
      %p402 = por %p400, %p401
      %p403 = scmp.ne.s32.totalorder %s389, %s390
      %p404 = scmp.eq.s32.totalorder %s42, 1
      %p405 = por %p403, %p404
      %p407 = scmp.ne.s32.totalorder %s390, %s406
      %p408 = scmp.eq.s32.totalorder %s42, 0
      %p409 = por %p407, %p408
      %p410 = scmp.le.s32.totalorder 1, %s36
      %p411 = scmp.lt.s32.totalorder %s36, 3
      %p412 = pnand %p410, %p411
      %p413 = pneg %p412
      // Predicated region
      $region9: #{tpu_custom_call.1} parent=5 // pred_check
        _
      $region10: #{tpu_custom_call.1} parent=5 // pred_check_branch
        %415 = sbr.rel (%p412) target = $region12
      $region11: #{tpu_custom_call.1} parent=5 // pred_region
        %s416 = ssub.s32 %s36, 1
        // Predicated region
        $region13: #{tpu_custom_call.1} parent=11 // pred_check
          %p417 = pneg %p187
        $region14: #{tpu_custom_call.1} parent=11 // pred_check_branch
          %419 = sbr.rel (%p417) target = $region16
        $region15: #{tpu_custom_call.1} parent=11 // pred_region
          _
        $region16: #{tpu_custom_call.1} parent=11 // pred_fallthru
          _
        // Predicated region
        $region17: #{tpu_custom_call.1} parent=11 // pred_check
          %p420 = pneg %p208
        $region18: #{tpu_custom_call.1} parent=11 // pred_check_branch
          %422 = sbr.rel (%p420) target = $region20
        $region19: #{tpu_custom_call.1} parent=11 // pred_region
          %s424 = ssub.s32 512, 512
          %425 = vsyncadd [#allocation9], %s424
          %s426 = sshll.u32 [#allocation10], 4
          %s427 = int_to_ptr.vmem [resolvable:$true] %s426
          %432 = dma.hbm_to_vmem [thread:$0]  %s6, 512, %s427, [#allocation9], 128, 128, 8
        $region20: #{tpu_custom_call.1} parent=11 // pred_fallthru
          _
        // Predicated region
        $region21: #{tpu_custom_call.1} parent=11 // pred_check
          %p433 = pneg %p229
        $region22: #{tpu_custom_call.1} parent=11 // pred_check_branch
          %435 = sbr.rel (%p433) target = $region24
        $region23: #{tpu_custom_call.1} parent=11 // pred_region
          %s437 = ssub.s32 512, 512
          %438 = vsyncadd [#allocation12], %s437
          %s439 = sshll.u32 [#allocation11], 4
          %s440 = int_to_ptr.vmem [resolvable:$true] %s439
          %445 = dma.hbm_to_vmem [thread:$0]  %s7, 512, %s440, [#allocation12], 128, 128, 8
        $region24: #{tpu_custom_call.1} parent=11 // pred_fallthru
          _
        // Predicated region
        $region25: #{tpu_custom_call.1} parent=11 // pred_check
          %p446 = pneg %p250
        $region26: #{tpu_custom_call.1} parent=11 // pred_check_branch
          %448 = sbr.rel (%p446) target = $region28
        $region27: #{tpu_custom_call.1} parent=11 // pred_region
          %s450 = ssub.s32 512, 512
          %451 = vsyncadd [#allocation12], %s450
          %s452 = sshll.u32 [#allocation13], 4
          %s453 = int_to_ptr.vmem [resolvable:$true] %s452
          %458 = dma.hbm_to_vmem [thread:$0]  %s8, 512, %s453, [#allocation12], 128, 128, 8
        $region28: #{tpu_custom_call.1} parent=11 // pred_fallthru
          _
        // Predicated region
        $region29: #{tpu_custom_call.1} parent=11 // pred_check
          %p459 = pneg %p271
        $region30: #{tpu_custom_call.1} parent=11 // pred_check_branch
          %461 = sbr.rel (%p459) target = $region32
        $region31: #{tpu_custom_call.1} parent=11 // pred_region
          %s463 = ssub.s32 512, 512
          %464 = vsyncadd [#allocation15], %s463
          %s465 = sshll.u32 [#allocation14], 4
          %s466 = int_to_ptr.vmem [resolvable:$true] %s465
          %471 = dma.hbm_to_vmem [thread:$0]  %s9, 512, %s466, [#allocation15], 128, 128, 8
        $region32: #{tpu_custom_call.1} parent=11 // pred_fallthru
          _
        // Predicated region
        $region33: #{tpu_custom_call.1} parent=11 // pred_check
          %p472 = pneg %p292
        $region34: #{tpu_custom_call.1} parent=11 // pred_check_branch
          %474 = sbr.rel (%p472) target = $region36
        $region35: #{tpu_custom_call.1} parent=11 // pred_region
          %s476 = ssub.s32 512, 512
          %477 = vsyncadd [#allocation15], %s476
          %s478 = sshll.u32 [#allocation16], 4
          %s479 = int_to_ptr.vmem [resolvable:$true] %s478
          %484 = dma.hbm_to_vmem [thread:$0]  %s10, 512, %s479, [#allocation15], 128, 128, 8
        $region36: #{tpu_custom_call.1} parent=11 // pred_fallthru
          _
        // Predicated region
        $region37: #{tpu_custom_call.1} parent=11 // pred_check
          %p485 = pneg %p313
        $region38: #{tpu_custom_call.1} parent=11 // pred_check_branch
          %487 = sbr.rel (%p485) target = $region40
        $region39: #{tpu_custom_call.1} parent=11 // pred_region
          %s489 = ssub.s32 512, 512
          %490 = vsyncadd [#allocation18], %s489
          %s491 = sshll.u32 [#allocation17], 4
          %s492 = int_to_ptr.vmem [resolvable:$true] %s491
          %497 = dma.hbm_to_vmem [thread:$0]  %s11, 512, %s492, [#allocation18], 128, 128, 8
        $region40: #{tpu_custom_call.1} parent=11 // pred_fallthru
          _
        // Predicated region
        $region41: #{tpu_custom_call.1} parent=11 // pred_check
          %p498 = pneg %p334
        $region42: #{tpu_custom_call.1} parent=11 // pred_check_branch
          %500 = sbr.rel (%p498) target = $region44
        $region43: #{tpu_custom_call.1} parent=11 // pred_region
          _
        $region44: #{tpu_custom_call.1} parent=11 // pred_fallthru
          _
        // Predicated region
        $region45: #{tpu_custom_call.1} parent=11 // pred_check
          %p501 = pneg %p355
        $region46: #{tpu_custom_call.1} parent=11 // pred_check_branch
          %503 = sbr.rel (%p501) target = $region48
        $region47: #{tpu_custom_call.1} parent=11 // pred_region
          _
        $region48: #{tpu_custom_call.1} parent=11 // pred_fallthru
          _
        // Predicated region
        $region49: #{tpu_custom_call.1} parent=11 // pred_check
          %p504 = pneg %p376
        $region50: #{tpu_custom_call.1} parent=11 // pred_check_branch
          %506 = sbr.rel (%p504) target = $region52
        $region51: #{tpu_custom_call.1} parent=11 // pred_region
          %s508 = ssub.s32 256, 256
          %509 = vsyncadd [#allocation18], %s508
          %s510 = sshll.u32 [#allocation19], 4
          %s511 = int_to_ptr.vmem [resolvable:$true] %s510
          %516 = dma.hbm_to_vmem [thread:$0]  %s14, 256, %s511, [#allocation18], 128, 128, 8
        $region52: #{tpu_custom_call.1} parent=11 // pred_fallthru
          _
      $region12: #{tpu_custom_call.1} parent=5 // pred_fallthru
        _
      %p517 = scmp.lt.s32.totalorder %s36, 2
      // Predicated region
      $region53: #{tpu_custom_call.1} parent=5 // pred_check
        %p518 = pneg %p517
      $region54: #{tpu_custom_call.1} parent=5 // pred_check_branch
        %520 = sbr.rel (%p518) target = $region56
      $region55: #{tpu_custom_call.1} parent=5 // pred_region
        // Predicated region
        $region57: #{tpu_custom_call.1} parent=55 // pred_check
          %p521 = pneg %p56
        $region58: #{tpu_custom_call.1} parent=55 // pred_check_branch
          %523 = sbr.rel (%p521) target = $region60
        $region59: #{tpu_custom_call.1} parent=55 // pred_region
          %p524 = scmp.lt.s32.totalorder %s36, 1
          %s525 = scalar_select %p524, %s36, 1
          %s526 = smul.addr %s525, 8
          %s527 = scalar_lea.vmem %s0, %s526
        $region60: #{tpu_custom_call.1} parent=55 // pred_fallthru
          _
        // Predicated region
        $region61: #{tpu_custom_call.1} parent=55 // pred_check
          %p528 = pneg %p82
        $region62: #{tpu_custom_call.1} parent=55 // pred_check_branch
          %530 = sbr.rel (%p528) target = $region64
        $region63: #{tpu_custom_call.1} parent=55 // pred_region
          %s531 = sand.u32 %s72, 1
          %s532 = scalar_lea.sflag [#allocation3], %s531
          %s533 = sand.u32 %s72, 1
          %s534 = smul.addr %s533, 8
          %s535 = scalar_lea.vmem [#allocation2], %s534
          %s537 = ssub.s32 128, 128
          %538 = vsyncadd %s532, %s537
          %s539 = smul.addr %s36, 128
          %s540 = scalar_lea.hbm %s1, %s539
          %s542 = sshll.u32 %s535, 4
          %s543 = int_to_ptr.vmem [resolvable:$true] %s542
          %545 = dma.hbm_to_vmem [thread:$0]  %s540, 128, %s543, %s532
        $region64: #{tpu_custom_call.1} parent=55 // pred_fallthru
          _
        // Predicated region
        $region65: #{tpu_custom_call.1} parent=55 // pred_check
          %p546 = pneg %p108
        $region66: #{tpu_custom_call.1} parent=55 // pred_check_branch
          %548 = sbr.rel (%p546) target = $region68
        $region67: #{tpu_custom_call.1} parent=55 // pred_region
          %s549 = sand.u32 %s36, 1
          %s550 = scalar_lea.sflag [#allocation6], %s549
          %s551 = sand.u32 %s98, 1
          %s552 = smul.addr %s551, 8
          %s553 = scalar_lea.vmem [#allocation5], %s552
          %s555 = ssub.s32 128, 128
          %556 = vsyncadd %s550, %s555
          %s557 = smul.addr %s36, 128
          %s558 = scalar_lea.hbm %s2, %s557
          %s560 = sshll.u32 %s553, 4
          %s561 = int_to_ptr.vmem [resolvable:$true] %s560
          %563 = dma.hbm_to_vmem [thread:$0]  %s558, 128, %s561, %s550
        $region68: #{tpu_custom_call.1} parent=55 // pred_fallthru
          _
        // Predicated region
        $region69: #{tpu_custom_call.1} parent=55 // pred_check
          %p564 = pneg %p134
        $region70: #{tpu_custom_call.1} parent=55 // pred_check_branch
          %566 = sbr.rel (%p564) target = $region72
        $region71: #{tpu_custom_call.1} parent=55 // pred_region
          %s567 = sand.u32 %s36, 1
          %s568 = scalar_lea.sflag [#allocation6], %s567
          %s569 = sand.u32 %s124, 1
          %s570 = smul.addr %s569, 8
          %s571 = scalar_lea.vmem [#allocation7], %s570
          %s573 = ssub.s32 128, 128
          %574 = vsyncadd %s568, %s573
          %s575 = smul.addr %s36, 128
          %s576 = scalar_lea.hbm %s3, %s575
          %s578 = sshll.u32 %s571, 4
          %s579 = int_to_ptr.vmem [resolvable:$true] %s578
          %581 = dma.hbm_to_vmem [thread:$0]  %s576, 128, %s579, %s568
        $region72: #{tpu_custom_call.1} parent=55 // pred_fallthru
          _
        // Predicated region
        $region73: #{tpu_custom_call.1} parent=55 // pred_check
          %p582 = pneg %p160
        $region74: #{tpu_custom_call.1} parent=55 // pred_check_branch
          %584 = sbr.rel (%p582) target = $region76
        $region75: #{tpu_custom_call.1} parent=55 // pred_region
          %s585 = sand.u32 %s36, 1
          %s586 = scalar_lea.sflag [#allocation9], %s585
          %s587 = sand.u32 %s150, 1
          %s588 = smul.addr %s587, 8
          %s589 = scalar_lea.vmem [#allocation8], %s588
          %s591 = ssub.s32 128, 128
          %592 = vsyncadd %s586, %s591
          %s593 = smul.addr %s36, 128
          %s594 = scalar_lea.hbm %s4, %s593
          %s596 = sshll.u32 %s589, 4
          %s597 = int_to_ptr.vmem [resolvable:$true] %s596
          %599 = dma.hbm_to_vmem [thread:$0]  %s594, 128, %s597, %s586
        $region76: #{tpu_custom_call.1} parent=55 // pred_fallthru
          _
      $region56: #{tpu_custom_call.1} parent=5 // pred_fallthru
        _
      %p600 = scmp.le.s32.totalorder 1, %s36
      %p601 = scmp.lt.s32.totalorder %s36, 3
      %p602 = pnand %p600, %p601
      %p603 = pneg %p602
      // Predicated region
      $region77: #{tpu_custom_call.1} parent=5 // pred_check
        _
      $region78: #{tpu_custom_call.1} parent=5 // pred_check_branch
        %605 = sbr.rel (%p602) target = $region80
      $region79: #{tpu_custom_call.1} parent=5 // pred_region
        %s606 = ssub.s32 %s36, 1
        %s607 = sand.u32 %s75, 1
        %s608 = scalar_lea.sflag [#allocation3], %s607
        %s609 = sand.u32 %s75, 1
        %s610 = smul.addr %s609, 8
        %s611 = scalar_lea.vmem [#allocation2], %s610
        // Predicated region
        $region81: #{tpu_custom_call.1} parent=79 // pred_check
          %p612 = pneg %p88
        $region82: #{tpu_custom_call.1} parent=79 // pred_check_branch
          %614 = sbr.rel (%p612) target = $region84
        $region83: #{tpu_custom_call.1} parent=79 // pred_region
          %615 = dma.done %s608, 128
        $region84: #{tpu_custom_call.1} parent=79 // pred_fallthru
          _
        %s616 = sand.u32 %s41, 1
        %s617 = scalar_lea.sflag [#allocation6], %s616
        %s618 = sand.u32 %s101, 1
        %s619 = smul.addr %s618, 8
        %s620 = scalar_lea.vmem [#allocation5], %s619
        // Predicated region
        $region85: #{tpu_custom_call.1} parent=79 // pred_check
          %p621 = pneg %p114
        $region86: #{tpu_custom_call.1} parent=79 // pred_check_branch
          %623 = sbr.rel (%p621) target = $region88
        $region87: #{tpu_custom_call.1} parent=79 // pred_region
          %624 = dma.done %s617, 128
        $region88: #{tpu_custom_call.1} parent=79 // pred_fallthru
          _
        %s625 = sand.u32 %s41, 1
        %s626 = scalar_lea.sflag [#allocation6], %s625
        %s627 = sand.u32 %s127, 1
        %s628 = smul.addr %s627, 8
        %s629 = scalar_lea.vmem [#allocation7], %s628
        // Predicated region
        $region89: #{tpu_custom_call.1} parent=79 // pred_check
          %p630 = pneg %p140
        $region90: #{tpu_custom_call.1} parent=79 // pred_check_branch
          %632 = sbr.rel (%p630) target = $region92
        $region91: #{tpu_custom_call.1} parent=79 // pred_region
          %633 = dma.done %s626, 128
        $region92: #{tpu_custom_call.1} parent=79 // pred_fallthru
          _
        %s634 = sand.u32 %s41, 1
        %s635 = scalar_lea.sflag [#allocation9], %s634
        %s636 = sand.u32 %s153, 1
        %s637 = smul.addr %s636, 8
        %s638 = scalar_lea.vmem [#allocation8], %s637
        // Predicated region
        $region93: #{tpu_custom_call.1} parent=79 // pred_check
          %p639 = pneg %p166
        $region94: #{tpu_custom_call.1} parent=79 // pred_check_branch
          %641 = sbr.rel (%p639) target = $region96
        $region95: #{tpu_custom_call.1} parent=79 // pred_region
          %642 = dma.done %s635, 128
        $region96: #{tpu_custom_call.1} parent=79 // pred_fallthru
          _
        // Predicated region
        $region97: #{tpu_custom_call.1} parent=79 // pred_check
          %p643 = pneg %p208
        $region98: #{tpu_custom_call.1} parent=79 // pred_check_branch
          %645 = sbr.rel (%p643) target = $region100
        $region99: #{tpu_custom_call.1} parent=79 // pred_region
          %646 = dma.done [#allocation9], 512
        $region100: #{tpu_custom_call.1} parent=79 // pred_fallthru
          _
        // Predicated region
        $region101: #{tpu_custom_call.1} parent=79 // pred_check
          %p647 = pneg %p229
        $region102: #{tpu_custom_call.1} parent=79 // pred_check_branch
          %649 = sbr.rel (%p647) target = $region104
        $region103: #{tpu_custom_call.1} parent=79 // pred_region
          %650 = dma.done [#allocation12], 512
        $region104: #{tpu_custom_call.1} parent=79 // pred_fallthru
          _
        // Predicated region
        $region105: #{tpu_custom_call.1} parent=79 // pred_check
          %p651 = pneg %p250
        $region106: #{tpu_custom_call.1} parent=79 // pred_check_branch
          %653 = sbr.rel (%p651) target = $region108
        $region107: #{tpu_custom_call.1} parent=79 // pred_region
          %654 = dma.done [#allocation12], 512
        $region108: #{tpu_custom_call.1} parent=79 // pred_fallthru
          _
        // Predicated region
        $region109: #{tpu_custom_call.1} parent=79 // pred_check
          %p655 = pneg %p271
        $region110: #{tpu_custom_call.1} parent=79 // pred_check_branch
          %657 = sbr.rel (%p655) target = $region112
        $region111: #{tpu_custom_call.1} parent=79 // pred_region
          %658 = dma.done [#allocation15], 512
        $region112: #{tpu_custom_call.1} parent=79 // pred_fallthru
          _
        // Predicated region
        $region113: #{tpu_custom_call.1} parent=79 // pred_check
          %p659 = pneg %p292
        $region114: #{tpu_custom_call.1} parent=79 // pred_check_branch
          %661 = sbr.rel (%p659) target = $region116
        $region115: #{tpu_custom_call.1} parent=79 // pred_region
          %662 = dma.done [#allocation15], 512
        $region116: #{tpu_custom_call.1} parent=79 // pred_fallthru
          _
        // Predicated region
        $region117: #{tpu_custom_call.1} parent=79 // pred_check
          %p663 = pneg %p313
        $region118: #{tpu_custom_call.1} parent=79 // pred_check_branch
          %665 = sbr.rel (%p663) target = $region120
        $region119: #{tpu_custom_call.1} parent=79 // pred_region
          %666 = dma.done [#allocation18], 512
        $region120: #{tpu_custom_call.1} parent=79 // pred_fallthru
          _
        // Predicated region
        $region121: #{tpu_custom_call.1} parent=79 // pred_check
          %p667 = pneg %p376
        $region122: #{tpu_custom_call.1} parent=79 // pred_check_branch
          %669 = sbr.rel (%p667) target = $region124
        $region123: #{tpu_custom_call.1} parent=79 // pred_region
          %670 = dma.done [#allocation18], 256
        $region124: #{tpu_custom_call.1} parent=79 // pred_fallthru
          _
        %p671 = scmp.lt.s32.totalorder %s41, 1
        %s672 = scalar_select %p671, %s41, 1
        %s673 = smul.addr %s672, 8
        %s674 = scalar_lea.vmem %s0, %s673
        %p675 = pneg %p62
        %p676 = pneg %p59
        %s677 = sand.u32 %s75, 1
        %s678 = scalar_lea.sflag [#allocation3], %s677
        %s679 = sand.u32 %s75, 1
        %s680 = smul.addr %s679, 8
        %s681 = scalar_lea.vmem [#allocation2], %s680
        %p682 = pneg %p88
        %p683 = pneg %p85
        %s684 = sand.u32 %s41, 1
        %s685 = scalar_lea.sflag [#allocation6], %s684
        %s686 = sand.u32 %s101, 1
        %s687 = smul.addr %s686, 8
        %s688 = scalar_lea.vmem [#allocation5], %s687
        %p689 = pneg %p114
        %p690 = pneg %p111
        %s691 = sand.u32 %s41, 1
        %s692 = scalar_lea.sflag [#allocation6], %s691
        %s693 = sand.u32 %s127, 1
        %s694 = smul.addr %s693, 8
        %s695 = scalar_lea.vmem [#allocation7], %s694
        %p696 = pneg %p140
        %p697 = pneg %p137
        %s698 = sand.u32 %s41, 1
        %s699 = scalar_lea.sflag [#allocation9], %s698
        %s700 = sand.u32 %s153, 1
        %s701 = smul.addr %s700, 8
        %s702 = scalar_lea.vmem [#allocation8], %s701
        %p703 = pneg %p166
        %p704 = pneg %p163
        %p705 = pneg %p187
        %p706 = pneg %p184
        %p707 = pneg %p208
        %p708 = pneg %p205
        %p709 = pneg %p229
        %p710 = pneg %p226
        %p711 = pneg %p250
        %p712 = pneg %p247
        %p713 = pneg %p271
        %p714 = pneg %p268
        %p715 = pneg %p292
        %p716 = pneg %p289
        %p717 = pneg %p313
        %p718 = pneg %p310
        %p719 = pneg %p334
        %p720 = pneg %p331
        %p721 = pneg %p355
        %p722 = pneg %p352
        %p723 = pneg %p376
        %p724 = pneg %p373
        %p725 = pneg %p402
        %p726 = pneg %p399
        %s727 = sand.u32 %s389, 1
        %s728 = scalar_lea.sflag [#allocation4], %s727
        %s729 = sand.u32 %s389, 1
        %s730 = smul.addr %s729, 8
        %s731 = scalar_lea.vmem [#allocation20], %s730
        %p732 = scmp.lt.s32.totalorder %s41, 1
        %s733 = scalar_select %p732, %s41, 1
        %s734 = smul.addr %s733, 8
        %s735 = scalar_lea.vmem %s0, %s734
        %v736 = vld [vmem:[#allocation19] sm:$0xff]
        %v737 = vld [vmem:[#allocation19 + $0x8] sm:$0x7]
        %v738 = vld [vmem:[%s735] sm:$0xff]
        %v739 = vld [vmem:[%s5] sm:$0xff]
        %v740 = vld [vmem:[%s5 + $0x8] sm:$0xff]
        %v741 = vld [vmem:[%s5 + $0x10] sm:$0xff]
        %v742 = vld [vmem:[%s5 + $0x18] sm:$0xff]
        %v743 = vlaneseq
        %v744 = vshrl.u32 %v743, 7
        %v745 = vsub.s32 0, %v744
        %v746 = vrot.slane %v736, %v745
        %vm747 = vcmask 261120
        %v749 = vsel %vm747, %v738, 0
        %751 = vmatprep.subr.mxu0 0.0
        %752 = vmatpush1.msra.mxu0 %v739
        %753 = vmatprep.subr.mxu0 0.0
        %754 = vmatpush1.msra.mxu0 %v740
        %755 = vmatprep.subr.mxu0 0.0
        %756 = vmatpush1.msra.mxu0 %v741
        %757 = vmatprep.subr.mxu0 0.0
        %758 = vmatpush1.msra.mxu0 %v742
        %759 = vmatprep.subr.mxu0 0.0
        %760 = vmatpush1.msra.mxu0 0.0
        %761 = vmatprep.subr.mxu0 0.0
        %762 = vmatpush1.msra.mxu0 0.0
        %763 = vmatprep.subr.mxu0 0.0
        %764 = vmatpush1.msra.mxu0 0.0
        %765 = vmatprep.subr.mxu0 0.0
        %766 = vmatpush1.msra.mxu0 0.0
        %767 = vmatprep.subr.mxu0 0.0
        %768 = vmatpush1.msra.mxu0 0.0
        %769 = vmatprep.subr.mxu0 0.0
        %770 = vmatpush1.msra.mxu0 0.0
        %771 = vmatprep.subr.mxu0 0.0
        %772 = vmatpush1.msra.mxu0 0.0
        %773 = vmatprep.subr.mxu0 0.0
        %774 = vmatpush1.msra.mxu0 0.0
        %775 = vmatprep.subr.mxu0 0.0
        %776 = vmatpush1.msra.mxu0 0.0
        %777 = vmatprep.subr.mxu0 0.0
        %778 = vmatpush1.msra.mxu0 0.0
        %779 = vmatprep.subr.mxu0 0.0
        %780 = vmatpush1.msra.mxu0 0.0
        %781 = vmatprep.subr.mxu0 0.0
        %782 = vmatpush1.msra.mxu0 0.0
        %783 = vmatprep.subr.mxu0 0.0
        %784 = vmatpush1.msra.mxu0 0.0
        %785 = vmatprep.subr.mxu0 0.0
        %786 = vmatpush1.msra.mxu0 0.0
        %787 = vmatprep.subr.mxu0 0.0
        %788 = vmatpush1.msra.mxu0 0.0
        %789 = vmatprep.subr.mxu0 0.0
        %790 = vmatpush1.msra.mxu0 0.0
        %791 = vmatprep.subr.mxu0 0.0
        %792 = vmatpush1.msra.mxu0 0.0
        %793 = vmatprep.subr.mxu0 0.0
        %794 = vmatpush1.msra.mxu0 0.0
        %795 = vmatprep.subr.mxu0 0.0
        %796 = vmatpush1.msra.mxu0 0.0
        %797 = vmatprep.subr.mxu0 0.0
        %798 = vmatpush1.msra.mxu0 0.0
        %799 = vmatprep.subr.mxu0 0.0
        %800 = vmatpush1.msra.mxu0 0.0
        %801 = vmatprep.subr.mxu0 0.0
        %802 = vmatpush1.msra.mxu0 0.0
        %803 = vmatprep.subr.mxu0 0.0
        %804 = vmatpush1.msra.mxu0 0.0
        %805 = vmatprep.subr.mxu0 0.0
        %806 = vmatpush1.msra.mxu0 0.0
        %807 = vmatprep.subr.mxu0 0.0
        %808 = vmatpush1.msra.mxu0 0.0
        %809 = vmatprep.subr.mxu0 0.0
        %810 = vmatpush1.msra.mxu0 0.0
        %811 = vmatprep.subr.mxu0 0.0
        %812 = vmatpush1.msra.mxu0 0.0
        %813 = vmatprep.subr.mxu0 0.0
        %814 = vmatpush1.msra.mxu0 0.0
        %815 = vmatprep.mubr.f32.mxu0 0.0
        %816 = vmatmul.mubr.f32.gmra.mrb[0].mxu0 %v749
        %v817 = vpop.f32.mrb[0].mxu0
        %v818 = vadd.f32 %v746, %v817
        %v819 = vpop.f32.mrb[0].mxu0
        %820 = vdwg.mxu0
        %822 = vrot.lane.b32.xlu0 %v818, 120
        %v823 = vpop.permute.xlu0 %822
        %824 = vrot.lane.b32.xlu0 %v818, 112
        %v825 = vpop.permute.xlu0 %824
        %826 = vrot.lane.b32.xlu0 %v818, 104
        %v827 = vpop.permute.xlu0 %826
        %v828 = vld [vmem:[%s611] sm:$0xff]
        %v829 = vld [vmem:[%s620] sm:$0xff]
        %v830 = vld [vmem:[#allocation10] sm:$0xff]
        %v831 = vld [vmem:[#allocation10 + $0x8] sm:$0xff]
        %v832 = vld [vmem:[#allocation10 + $0x10] sm:$0xff]
        %v833 = vld [vmem:[#allocation10 + $0x18] sm:$0xff]
        %v834 = vlaneseq
        %v835 = vshrl.u32 %v834, 7
        %v836 = vsub.s32 1, %v835
        %v837 = vrot.slane %v736, %v836
        %v839 = vsel %vm747, %v828, 0
        %841 = vmatprep.subr.mxu0 0.0
        %842 = vmatpush1.msra.mxu0 %v830
        %843 = vmatprep.subr.mxu0 0.0
        %844 = vmatpush1.msra.mxu0 %v831
        %845 = vmatprep.subr.mxu0 0.0
        %846 = vmatpush1.msra.mxu0 %v832
        %847 = vmatprep.subr.mxu0 0.0
        %848 = vmatpush1.msra.mxu0 %v833
        %849 = vmatprep.subr.mxu0 0.0
        %850 = vmatpush1.msra.mxu0 0.0
        %851 = vmatprep.subr.mxu0 0.0
        %852 = vmatpush1.msra.mxu0 0.0
        %853 = vmatprep.subr.mxu0 0.0
        %854 = vmatpush1.msra.mxu0 0.0
        %855 = vmatprep.subr.mxu0 0.0
        %856 = vmatpush1.msra.mxu0 0.0
        %857 = vmatprep.subr.mxu0 0.0
        %858 = vmatpush1.msra.mxu0 0.0
        %859 = vmatprep.subr.mxu0 0.0
        %860 = vmatpush1.msra.mxu0 0.0
        %861 = vmatprep.subr.mxu0 0.0
        %862 = vmatpush1.msra.mxu0 0.0
        %863 = vmatprep.subr.mxu0 0.0
        %864 = vmatpush1.msra.mxu0 0.0
        %865 = vmatprep.subr.mxu0 0.0
        %866 = vmatpush1.msra.mxu0 0.0
        %867 = vmatprep.subr.mxu0 0.0
        %868 = vmatpush1.msra.mxu0 0.0
        %869 = vmatprep.subr.mxu0 0.0
        %870 = vmatpush1.msra.mxu0 0.0
        %871 = vmatprep.subr.mxu0 0.0
        %872 = vmatpush1.msra.mxu0 0.0
        %873 = vmatprep.subr.mxu0 0.0
        %874 = vmatpush1.msra.mxu0 0.0
        %875 = vmatprep.subr.mxu0 0.0
        %876 = vmatpush1.msra.mxu0 0.0
        %877 = vmatprep.subr.mxu0 0.0
        %878 = vmatpush1.msra.mxu0 0.0
        %879 = vmatprep.subr.mxu0 0.0
        %880 = vmatpush1.msra.mxu0 0.0
        %881 = vmatprep.subr.mxu0 0.0
        %882 = vmatpush1.msra.mxu0 0.0
        %883 = vmatprep.subr.mxu0 0.0
        %884 = vmatpush1.msra.mxu0 0.0
        %885 = vmatprep.subr.mxu0 0.0
        %886 = vmatpush1.msra.mxu0 0.0
        %887 = vmatprep.subr.mxu0 0.0
        %888 = vmatpush1.msra.mxu0 0.0
        %889 = vmatprep.subr.mxu0 0.0
        %890 = vmatpush1.msra.mxu0 0.0
        %891 = vmatprep.subr.mxu0 0.0
        %892 = vmatpush1.msra.mxu0 0.0
        %893 = vmatprep.subr.mxu0 0.0
        %894 = vmatpush1.msra.mxu0 0.0
        %895 = vmatprep.subr.mxu0 0.0
        %896 = vmatpush1.msra.mxu0 0.0
        %897 = vmatprep.subr.mxu0 0.0
        %898 = vmatpush1.msra.mxu0 0.0
        %899 = vmatprep.subr.mxu0 0.0
        %900 = vmatpush1.msra.mxu0 0.0
        %901 = vmatprep.subr.mxu0 0.0
        %902 = vmatpush1.msra.mxu0 0.0
        %903 = vmatprep.subr.mxu0 0.0
        %904 = vmatpush1.msra.mxu0 0.0
        %905 = vmatprep.mubr.f32.mxu0 0.0
        %906 = vmatmul.mubr.f32.gmra.mrb[0].mxu0 %v839
        %v907 = vpop.f32.mrb[0].mxu0
        %v908 = vadd.f32 %v837, %v907
        %v909 = vpop.f32.mrb[0].mxu0
        %910 = vdwg.mxu0
        %v911 = vld [vmem:[#allocation11] sm:$0xff]
        %v912 = vld [vmem:[#allocation11 + $0x8] sm:$0xff]
        %v913 = vld [vmem:[#allocation11 + $0x10] sm:$0xff]
        %v914 = vld [vmem:[#allocation11 + $0x18] sm:$0xff]
        %v915 = vlaneseq
        %v916 = vshrl.u32 %v915, 7
        %v917 = vsub.s32 2, %v916
        %v918 = vrot.slane %v736, %v917
        %v920 = vsel %vm747, %v829, 0
        %922 = vmatprep.subr.mxu0 0.0
        %923 = vmatpush1.msra.mxu0 %v911
        %924 = vmatprep.subr.mxu0 0.0
        %925 = vmatpush1.msra.mxu0 %v912
        %926 = vmatprep.subr.mxu0 0.0
        %927 = vmatpush1.msra.mxu0 %v913
        %928 = vmatprep.subr.mxu0 0.0
        %929 = vmatpush1.msra.mxu0 %v914
        %930 = vmatprep.subr.mxu0 0.0
        %931 = vmatpush1.msra.mxu0 0.0
        %932 = vmatprep.subr.mxu0 0.0
        %933 = vmatpush1.msra.mxu0 0.0
        %934 = vmatprep.subr.mxu0 0.0
        %935 = vmatpush1.msra.mxu0 0.0
        %936 = vmatprep.subr.mxu0 0.0
        %937 = vmatpush1.msra.mxu0 0.0
        %938 = vmatprep.subr.mxu0 0.0
        %939 = vmatpush1.msra.mxu0 0.0
        %940 = vmatprep.subr.mxu0 0.0
        %941 = vmatpush1.msra.mxu0 0.0
        %942 = vmatprep.subr.mxu0 0.0
        %943 = vmatpush1.msra.mxu0 0.0
        %944 = vmatprep.subr.mxu0 0.0
        %945 = vmatpush1.msra.mxu0 0.0
        %946 = vmatprep.subr.mxu0 0.0
        %947 = vmatpush1.msra.mxu0 0.0
        %948 = vmatprep.subr.mxu0 0.0
        %949 = vmatpush1.msra.mxu0 0.0
        %950 = vmatprep.subr.mxu0 0.0
        %951 = vmatpush1.msra.mxu0 0.0
        %952 = vmatprep.subr.mxu0 0.0
        %953 = vmatpush1.msra.mxu0 0.0
        %954 = vmatprep.subr.mxu0 0.0
        %955 = vmatpush1.msra.mxu0 0.0
        %956 = vmatprep.subr.mxu0 0.0
        %957 = vmatpush1.msra.mxu0 0.0
        %958 = vmatprep.subr.mxu0 0.0
        %959 = vmatpush1.msra.mxu0 0.0
        %960 = vmatprep.subr.mxu0 0.0
        %961 = vmatpush1.msra.mxu0 0.0
        %962 = vmatprep.subr.mxu0 0.0
        %963 = vmatpush1.msra.mxu0 0.0
        %964 = vmatprep.subr.mxu0 0.0
        %965 = vmatpush1.msra.mxu0 0.0
        %966 = vmatprep.subr.mxu0 0.0
        %967 = vmatpush1.msra.mxu0 0.0
        %968 = vmatprep.subr.mxu0 0.0
        %969 = vmatpush1.msra.mxu0 0.0
        %970 = vmatprep.subr.mxu0 0.0
        %971 = vmatpush1.msra.mxu0 0.0
        %972 = vmatprep.subr.mxu0 0.0
        %973 = vmatpush1.msra.mxu0 0.0
        %974 = vmatprep.subr.mxu0 0.0
        %975 = vmatpush1.msra.mxu0 0.0
        %976 = vmatprep.subr.mxu0 0.0
        %977 = vmatpush1.msra.mxu0 0.0
        %978 = vmatprep.subr.mxu0 0.0
        %979 = vmatpush1.msra.mxu0 0.0
        %980 = vmatprep.subr.mxu0 0.0
        %981 = vmatpush1.msra.mxu0 0.0
        %982 = vmatprep.subr.mxu0 0.0
        %983 = vmatpush1.msra.mxu0 0.0
        %984 = vmatprep.subr.mxu0 0.0
        %985 = vmatpush1.msra.mxu0 0.0
        %986 = vmatprep.mubr.f32.mxu0 0.0
        %987 = vmatmul.mubr.f32.gmra.mrb[0].mxu0 %v920
        %v988 = vpop.f32.mrb[0].mxu0
        %v989 = vadd.f32 %v918, %v988
        %v990 = vpop.f32.mrb[0].mxu0
        %991 = vdwg.mxu0
        %993 = vrot.lane.b32.xlu0 %v908, 120
        %v994 = vpop.permute.xlu0 %993
        %995 = vrot.lane.b32.xlu0 %v908, 112
        %v996 = vpop.permute.xlu0 %995
        %997 = vrot.lane.b32.xlu0 %v908, 104
        %v998 = vpop.permute.xlu0 %997
        %1000 = vrot.lane.b32.xlu0 %v989, 120
        %v1001 = vpop.permute.xlu0 %1000
        %1003 = vrot.lane.b32.xlu0 %v989, 112
        %v1004 = vpop.permute.xlu0 %1003
        %1006 = vrot.lane.b32.xlu0 %v989, 104
        %v1007 = vpop.permute.xlu0 %1006
        %vm1009 = vcmask 64512
        %v1010 = vsel %vm1009, %v818, 0
        %v1012 = vsel %vm1009, %v908, 0
        %1014 = vmatprep.subr.mxu0 0.0
        %1015 = vmatpush1.xpose.msra.mxu0 %v1012
        %1016 = vmatprep.subr.mxu0 0.0
        %1017 = vmatpush1.xpose.msra.mxu0 0.0
        %1018 = vmatprep.subr.mxu0 0.0
        %1019 = vmatpush1.xpose.msra.mxu0 0.0
        %1020 = vmatprep.subr.mxu0 0.0
        %1021 = vmatpush1.xpose.msra.mxu0 0.0
        %1022 = vmatprep.subr.mxu0 0.0
        %1023 = vmatpush1.xpose.msra.mxu0 0.0
        %1024 = vmatprep.subr.mxu0 0.0
        %1025 = vmatpush1.xpose.msra.mxu0 0.0
        %1026 = vmatprep.subr.mxu0 0.0
        %1027 = vmatpush1.xpose.msra.mxu0 0.0
        %1028 = vmatprep.subr.mxu0 0.0
        %1029 = vmatpush1.xpose.msra.mxu0 0.0
        %1030 = vmatprep.subr.mxu0 0.0
        %1031 = vmatpush1.xpose.msra.mxu0 0.0
        %1032 = vmatprep.subr.mxu0 0.0
        %1033 = vmatpush1.xpose.msra.mxu0 0.0
        %1034 = vmatprep.subr.mxu0 0.0
        %1035 = vmatpush1.xpose.msra.mxu0 0.0
        %1036 = vmatprep.subr.mxu0 0.0
        %1037 = vmatpush1.xpose.msra.mxu0 0.0
        %1038 = vmatprep.subr.mxu0 0.0
        %1039 = vmatpush1.xpose.msra.mxu0 0.0
        %1040 = vmatprep.subr.mxu0 0.0
        %1041 = vmatpush1.xpose.msra.mxu0 0.0
        %1042 = vmatprep.subr.mxu0 0.0
        %1043 = vmatpush1.xpose.msra.mxu0 0.0
        %1044 = vmatprep.subr.mxu0 0.0
        %1045 = vmatpush1.xpose.msra.mxu0 0.0
        %1046 = vmatprep.subr.mxu0 0.0
        %1047 = vmatpush1.xpose.msra.mxu0 0.0
        %1048 = vmatprep.subr.mxu0 0.0
        %1049 = vmatpush1.xpose.msra.mxu0 0.0
        %1050 = vmatprep.subr.mxu0 0.0
        %1051 = vmatpush1.xpose.msra.mxu0 0.0
        %1052 = vmatprep.subr.mxu0 0.0
        %1053 = vmatpush1.xpose.msra.mxu0 0.0
        %1054 = vmatprep.subr.mxu0 0.0
        %1055 = vmatpush1.xpose.msra.mxu0 0.0
        %1056 = vmatprep.subr.mxu0 0.0
        %1057 = vmatpush1.xpose.msra.mxu0 0.0
        %1058 = vmatprep.subr.mxu0 0.0
        %1059 = vmatpush1.xpose.msra.mxu0 0.0
        %1060 = vmatprep.subr.mxu0 0.0
        %1061 = vmatpush1.xpose.msra.mxu0 0.0
        %1062 = vmatprep.subr.mxu0 0.0
        %1063 = vmatpush1.xpose.msra.mxu0 0.0
        %1064 = vmatprep.subr.mxu0 0.0
        %1065 = vmatpush1.xpose.msra.mxu0 0.0
        %1066 = vmatprep.subr.mxu0 0.0
        %1067 = vmatpush1.xpose.msra.mxu0 0.0
        %1068 = vmatprep.subr.mxu0 0.0
        %1069 = vmatpush1.xpose.msra.mxu0 0.0
        %1070 = vmatprep.subr.mxu0 0.0
        %1071 = vmatpush1.xpose.msra.mxu0 0.0
        %1072 = vmatprep.subr.mxu0 0.0
        %1073 = vmatpush1.xpose.msra.mxu0 0.0
        %1074 = vmatprep.subr.mxu0 0.0
        %1075 = vmatpush1.xpose.msra.mxu0 0.0
        %1076 = vmatprep.subr.mxu0 0.0
        %1077 = vmatpush1.xpose.msra.mxu0 0.0
        %1078 = vmatprep.mubr.f32.mxu0 0.0
        %1079 = vmatmul.mubr.f32.gmra.mrb[0].mxu0 %v1010
        %v1080 = vpop.f32.mrb[0].mxu0
        %v1081 = vadd.f32 0.0, %v1080
        %v1082 = vpop.f32.mrb[0].mxu0
        %1083 = vdwg.mxu0
        %v1084 = vsel %vm1009, %v823, 0
        %v1086 = vsel %vm1009, %v994, 0
        %1088 = vmatprep.subr.mxu0 0.0
        %1089 = vmatpush1.xpose.msra.mxu0 %v1086
        %1090 = vmatprep.subr.mxu0 0.0
        %1091 = vmatpush1.xpose.msra.mxu0 0.0
        %1092 = vmatprep.subr.mxu0 0.0
        %1093 = vmatpush1.xpose.msra.mxu0 0.0
        %1094 = vmatprep.subr.mxu0 0.0
        %1095 = vmatpush1.xpose.msra.mxu0 0.0
        %1096 = vmatprep.subr.mxu0 0.0
        %1097 = vmatpush1.xpose.msra.mxu0 0.0
        %1098 = vmatprep.subr.mxu0 0.0
        %1099 = vmatpush1.xpose.msra.mxu0 0.0
        %1100 = vmatprep.subr.mxu0 0.0
        %1101 = vmatpush1.xpose.msra.mxu0 0.0
        %1102 = vmatprep.subr.mxu0 0.0
        %1103 = vmatpush1.xpose.msra.mxu0 0.0
        %1104 = vmatprep.subr.mxu0 0.0
        %1105 = vmatpush1.xpose.msra.mxu0 0.0
        %1106 = vmatprep.subr.mxu0 0.0
        %1107 = vmatpush1.xpose.msra.mxu0 0.0
        %1108 = vmatprep.subr.mxu0 0.0
        %1109 = vmatpush1.xpose.msra.mxu0 0.0
        %1110 = vmatprep.subr.mxu0 0.0
        %1111 = vmatpush1.xpose.msra.mxu0 0.0
        %1112 = vmatprep.subr.mxu0 0.0
        %1113 = vmatpush1.xpose.msra.mxu0 0.0
        %1114 = vmatprep.subr.mxu0 0.0
        %1115 = vmatpush1.xpose.msra.mxu0 0.0
        %1116 = vmatprep.subr.mxu0 0.0
        %1117 = vmatpush1.xpose.msra.mxu0 0.0
        %1118 = vmatprep.subr.mxu0 0.0
        %1119 = vmatpush1.xpose.msra.mxu0 0.0
        %1120 = vmatprep.subr.mxu0 0.0
        %1121 = vmatpush1.xpose.msra.mxu0 0.0
        %1122 = vmatprep.subr.mxu0 0.0
        %1123 = vmatpush1.xpose.msra.mxu0 0.0
        %1124 = vmatprep.subr.mxu0 0.0
        %1125 = vmatpush1.xpose.msra.mxu0 0.0
        %1126 = vmatprep.subr.mxu0 0.0
        %1127 = vmatpush1.xpose.msra.mxu0 0.0
        %1128 = vmatprep.subr.mxu0 0.0
        %1129 = vmatpush1.xpose.msra.mxu0 0.0
        %1130 = vmatprep.subr.mxu0 0.0
        %1131 = vmatpush1.xpose.msra.mxu0 0.0
        %1132 = vmatprep.subr.mxu0 0.0
        %1133 = vmatpush1.xpose.msra.mxu0 0.0
        %1134 = vmatprep.subr.mxu0 0.0
        %1135 = vmatpush1.xpose.msra.mxu0 0.0
        %1136 = vmatprep.subr.mxu0 0.0
        %1137 = vmatpush1.xpose.msra.mxu0 0.0
        %1138 = vmatprep.subr.mxu0 0.0
        %1139 = vmatpush1.xpose.msra.mxu0 0.0
        %1140 = vmatprep.subr.mxu0 0.0
        %1141 = vmatpush1.xpose.msra.mxu0 0.0
        %1142 = vmatprep.subr.mxu0 0.0
        %1143 = vmatpush1.xpose.msra.mxu0 0.0
        %1144 = vmatprep.subr.mxu0 0.0
        %1145 = vmatpush1.xpose.msra.mxu0 0.0
        %1146 = vmatprep.subr.mxu0 0.0
        %1147 = vmatpush1.xpose.msra.mxu0 0.0
        %1148 = vmatprep.subr.mxu0 0.0
        %1149 = vmatpush1.xpose.msra.mxu0 0.0
        %1150 = vmatprep.subr.mxu0 0.0
        %1151 = vmatpush1.xpose.msra.mxu0 0.0
        %1152 = vmatprep.mubr.f32.mxu0 0.0
        %1153 = vmatmul.mubr.f32.gmra.mrb[0].mxu0 %v1084
        %v1154 = vpop.f32.mrb[0].mxu0
        %v1155 = vadd.f32 0.0, %v1154
        %v1156 = vpop.f32.mrb[0].mxu0
        %1157 = vdwg.mxu0
        %v1158 = vsel %vm1009, %v825, 0
        %v1160 = vsel %vm1009, %v996, 0
        %1162 = vmatprep.subr.mxu0 0.0
        %1163 = vmatpush1.xpose.msra.mxu0 %v1160
        %1164 = vmatprep.subr.mxu0 0.0
        %1165 = vmatpush1.xpose.msra.mxu0 0.0
        %1166 = vmatprep.subr.mxu0 0.0
        %1167 = vmatpush1.xpose.msra.mxu0 0.0
        %1168 = vmatprep.subr.mxu0 0.0
        %1169 = vmatpush1.xpose.msra.mxu0 0.0
        %1170 = vmatprep.subr.mxu0 0.0
        %1171 = vmatpush1.xpose.msra.mxu0 0.0
        %1172 = vmatprep.subr.mxu0 0.0
        %1173 = vmatpush1.xpose.msra.mxu0 0.0
        %1174 = vmatprep.subr.mxu0 0.0
        %1175 = vmatpush1.xpose.msra.mxu0 0.0
        %1176 = vmatprep.subr.mxu0 0.0
        %1177 = vmatpush1.xpose.msra.mxu0 0.0
        %1178 = vmatprep.subr.mxu0 0.0
        %1179 = vmatpush1.xpose.msra.mxu0 0.0
        %1180 = vmatprep.subr.mxu0 0.0
        %1181 = vmatpush1.xpose.msra.mxu0 0.0
        %1182 = vmatprep.subr.mxu0 0.0
        %1183 = vmatpush1.xpose.msra.mxu0 0.0
        %1184 = vmatprep.subr.mxu0 0.0
        %1185 = vmatpush1.xpose.msra.mxu0 0.0
        %1186 = vmatprep.subr.mxu0 0.0
        %1187 = vmatpush1.xpose.msra.mxu0 0.0
        %1188 = vmatprep.subr.mxu0 0.0
        %1189 = vmatpush1.xpose.msra.mxu0 0.0
        %1190 = vmatprep.subr.mxu0 0.0
        %1191 = vmatpush1.xpose.msra.mxu0 0.0
        %1192 = vmatprep.subr.mxu0 0.0
        %1193 = vmatpush1.xpose.msra.mxu0 0.0
        %1194 = vmatprep.subr.mxu0 0.0
        %1195 = vmatpush1.xpose.msra.mxu0 0.0
        %1196 = vmatprep.subr.mxu0 0.0
        %1197 = vmatpush1.xpose.msra.mxu0 0.0
        %1198 = vmatprep.subr.mxu0 0.0
        %1199 = vmatpush1.xpose.msra.mxu0 0.0
        %1200 = vmatprep.subr.mxu0 0.0
        %1201 = vmatpush1.xpose.msra.mxu0 0.0
        %1202 = vmatprep.subr.mxu0 0.0
        %1203 = vmatpush1.xpose.msra.mxu0 0.0
        %1204 = vmatprep.subr.mxu0 0.0
        %1205 = vmatpush1.xpose.msra.mxu0 0.0
        %1206 = vmatprep.subr.mxu0 0.0
        %1207 = vmatpush1.xpose.msra.mxu0 0.0
        %1208 = vmatprep.subr.mxu0 0.0
        %1209 = vmatpush1.xpose.msra.mxu0 0.0
        %1210 = vmatprep.subr.mxu0 0.0
        %1211 = vmatpush1.xpose.msra.mxu0 0.0
        %1212 = vmatprep.subr.mxu0 0.0
        %1213 = vmatpush1.xpose.msra.mxu0 0.0
        %1214 = vmatprep.subr.mxu0 0.0
        %1215 = vmatpush1.xpose.msra.mxu0 0.0
        %1216 = vmatprep.subr.mxu0 0.0
        %1217 = vmatpush1.xpose.msra.mxu0 0.0
        %1218 = vmatprep.subr.mxu0 0.0
        %1219 = vmatpush1.xpose.msra.mxu0 0.0
        %1220 = vmatprep.subr.mxu0 0.0
        %1221 = vmatpush1.xpose.msra.mxu0 0.0
        %1222 = vmatprep.subr.mxu0 0.0
        %1223 = vmatpush1.xpose.msra.mxu0 0.0
        %1224 = vmatprep.subr.mxu0 0.0
        %1225 = vmatpush1.xpose.msra.mxu0 0.0
        %1226 = vmatprep.mubr.f32.mxu0 0.0
        %1227 = vmatmul.mubr.f32.gmra.mrb[0].mxu0 %v1158
        %v1228 = vpop.f32.mrb[0].mxu0
        %v1229 = vadd.f32 0.0, %v1228
        %v1230 = vpop.f32.mrb[0].mxu0
        %1231 = vdwg.mxu0
        %v1232 = vsel %vm1009, %v827, 0
        %v1234 = vsel %vm1009, %v998, 0
        %1236 = vmatprep.subr.mxu0 0.0
        %1237 = vmatpush1.xpose.msra.mxu0 %v1234
        %1238 = vmatprep.subr.mxu0 0.0
        %1239 = vmatpush1.xpose.msra.mxu0 0.0
        %1240 = vmatprep.subr.mxu0 0.0
        %1241 = vmatpush1.xpose.msra.mxu0 0.0
        %1242 = vmatprep.subr.mxu0 0.0
        %1243 = vmatpush1.xpose.msra.mxu0 0.0
        %1244 = vmatprep.subr.mxu0 0.0
        %1245 = vmatpush1.xpose.msra.mxu0 0.0
        %1246 = vmatprep.subr.mxu0 0.0
        %1247 = vmatpush1.xpose.msra.mxu0 0.0
        %1248 = vmatprep.subr.mxu0 0.0
        %1249 = vmatpush1.xpose.msra.mxu0 0.0
        %1250 = vmatprep.subr.mxu0 0.0
        %1251 = vmatpush1.xpose.msra.mxu0 0.0
        %1252 = vmatprep.subr.mxu0 0.0
        %1253 = vmatpush1.xpose.msra.mxu0 0.0
        %1254 = vmatprep.subr.mxu0 0.0
        %1255 = vmatpush1.xpose.msra.mxu0 0.0
        %1256 = vmatprep.subr.mxu0 0.0
        %1257 = vmatpush1.xpose.msra.mxu0 0.0
        %1258 = vmatprep.subr.mxu0 0.0
        %1259 = vmatpush1.xpose.msra.mxu0 0.0
        %1260 = vmatprep.subr.mxu0 0.0
        %1261 = vmatpush1.xpose.msra.mxu0 0.0
        %1262 = vmatprep.subr.mxu0 0.0
        %1263 = vmatpush1.xpose.msra.mxu0 0.0
        %1264 = vmatprep.subr.mxu0 0.0
        %1265 = vmatpush1.xpose.msra.mxu0 0.0
        %1266 = vmatprep.subr.mxu0 0.0
        %1267 = vmatpush1.xpose.msra.mxu0 0.0
        %1268 = vmatprep.subr.mxu0 0.0
        %1269 = vmatpush1.xpose.msra.mxu0 0.0
        %1270 = vmatprep.subr.mxu0 0.0
        %1271 = vmatpush1.xpose.msra.mxu0 0.0
        %1272 = vmatprep.subr.mxu0 0.0
        %1273 = vmatpush1.xpose.msra.mxu0 0.0
        %1274 = vmatprep.subr.mxu0 0.0
        %1275 = vmatpush1.xpose.msra.mxu0 0.0
        %1276 = vmatprep.subr.mxu0 0.0
        %1277 = vmatpush1.xpose.msra.mxu0 0.0
        %1278 = vmatprep.subr.mxu0 0.0
        %1279 = vmatpush1.xpose.msra.mxu0 0.0
        %1280 = vmatprep.subr.mxu0 0.0
        %1281 = vmatpush1.xpose.msra.mxu0 0.0
        %1282 = vmatprep.subr.mxu0 0.0
        %1283 = vmatpush1.xpose.msra.mxu0 0.0
        %1284 = vmatprep.subr.mxu0 0.0
        %1285 = vmatpush1.xpose.msra.mxu0 0.0
        %1286 = vmatprep.subr.mxu0 0.0
        %1287 = vmatpush1.xpose.msra.mxu0 0.0
        %1288 = vmatprep.subr.mxu0 0.0
        %1289 = vmatpush1.xpose.msra.mxu0 0.0
        %1290 = vmatprep.subr.mxu0 0.0
        %1291 = vmatpush1.xpose.msra.mxu0 0.0
        %1292 = vmatprep.subr.mxu0 0.0
        %1293 = vmatpush1.xpose.msra.mxu0 0.0
        %1294 = vmatprep.subr.mxu0 0.0
        %1295 = vmatpush1.xpose.msra.mxu0 0.0
        %1296 = vmatprep.subr.mxu0 0.0
        %1297 = vmatpush1.xpose.msra.mxu0 0.0
        %1298 = vmatprep.subr.mxu0 0.0
        %1299 = vmatpush1.xpose.msra.mxu0 0.0
        %1300 = vmatprep.mubr.f32.mxu0 0.0
        %1301 = vmatmul.mubr.f32.gmra.mrb[0].mxu0 %v1232
        %v1302 = vpop.f32.mrb[0].mxu0
        %v1303 = vadd.f32 0.0, %v1302
        %v1304 = vpop.f32.mrb[0].mxu0
        %1305 = vdwg.mxu0
        %v1306 = vmul.f32 %v1081, 0.35355338
        %v1307 = vmul.f32 %v1155, 0.35355338
        %v1308 = vmul.f32 %v1229, 0.35355338
        %v1309 = vmul.f32 %v1303, 0.35355338
        %v1310 = vsel %vm1009, %v1306, -inf
        %1311 = vmax.xlane.f32.xlu0 %v1310
        %v1312 = vpop.xlane.xlu0 %1311
        %v1313 = vsel %vm1009, %v1307, -inf
        %1314 = vmax.xlane.f32.xlu0 %v1313
        %v1315 = vpop.xlane.xlu0 %1314
        %v1316 = vsel %vm1009, %v1308, -inf
        %1317 = vmax.xlane.f32.xlu0 %v1316
        %v1318 = vpop.xlane.xlu0 %1317
        %v1319 = vsel %vm1009, %v1309, -inf
        %1320 = vmax.xlane.f32.xlu0 %v1319
        %v1321 = vpop.xlane.xlu0 %1320
        %v1322 = vsub.f32 %v1306, %v1312
        %v1323 = vsub.f32 %v1307, %v1315
        %v1324 = vsub.f32 %v1308, %v1318
        %v1325 = vsub.f32 %v1309, %v1321
        %v1326 = vmul.f32 %v1322, 1.442695
        %v1327 = vpow.pop %v1326
        %v1328 = vmul.f32 %v1323, 1.442695
        %v1329 = vpow.pop %v1328
        %v1330 = vmul.f32 %v1324, 1.442695
        %v1331 = vpow.pop %v1330
        %v1332 = vmul.f32 %v1325, 1.442695
        %v1333 = vpow.pop %v1332
        %v1334 = vsel %vm1009, %v1327, 0.0
        %1335 = vadd.xlane.f32.xlu0 %v1334
        %v1336 = vpop.xlane.xlu0 %1335
        %v1337 = vsel %vm1009, %v1329, 0.0
        %1338 = vadd.xlane.f32.xlu0 %v1337
        %v1339 = vpop.xlane.xlu0 %1338
        %v1340 = vsel %vm1009, %v1331, 0.0
        %1341 = vadd.xlane.f32.xlu0 %v1340
        %v1342 = vpop.xlane.xlu0 %1341
        %v1343 = vsel %vm1009, %v1333, 0.0
        %1344 = vadd.xlane.f32.xlu0 %v1343
        %v1345 = vpop.xlane.xlu0 %1344
        %v1346 = vrcp.pop %v1336
        %v1347 = vrcp.pop %v1339
        %v1348 = vrcp.pop %v1342
        %v1349 = vrcp.pop %v1345
        %v1350 = vmul.f32 %v1327, %v1346
        %v1351 = vmul.f32 %v1329, %v1347
        %v1352 = vmul.f32 %v1331, %v1348
        %v1353 = vmul.f32 %v1333, %v1349
        %v1355 = vsel %vm1009, %v1350, 0
        %1357 = vmatprep.subr.mxu0 0.0
        %1358 = vmatpush1.msra.mxu0 %v989
        %1359 = vmatprep.subr.mxu0 0.0
        %1360 = vmatpush1.msra.mxu0 0.0
        %1361 = vmatprep.subr.mxu0 0.0
        %1362 = vmatpush1.msra.mxu0 0.0
        %1363 = vmatprep.subr.mxu0 0.0
        %1364 = vmatpush1.msra.mxu0 0.0
        %1365 = vmatprep.subr.mxu0 0.0
        %1366 = vmatpush1.msra.mxu0 0.0
        %1367 = vmatprep.subr.mxu0 0.0
        %1368 = vmatpush1.msra.mxu0 0.0
        %1369 = vmatprep.subr.mxu0 0.0
        %1370 = vmatpush1.msra.mxu0 0.0
        %1371 = vmatprep.subr.mxu0 0.0
        %1372 = vmatpush1.msra.mxu0 0.0
        %1373 = vmatprep.subr.mxu0 0.0
        %1374 = vmatpush1.msra.mxu0 0.0
        %1375 = vmatprep.subr.mxu0 0.0
        %1376 = vmatpush1.msra.mxu0 0.0
        %1377 = vmatprep.subr.mxu0 0.0
        %1378 = vmatpush1.msra.mxu0 0.0
        %1379 = vmatprep.subr.mxu0 0.0
        %1380 = vmatpush1.msra.mxu0 0.0
        %1381 = vmatprep.subr.mxu0 0.0
        %1382 = vmatpush1.msra.mxu0 0.0
        %1383 = vmatprep.subr.mxu0 0.0
        %1384 = vmatpush1.msra.mxu0 0.0
        %1385 = vmatprep.subr.mxu0 0.0
        %1386 = vmatpush1.msra.mxu0 0.0
        %1387 = vmatprep.subr.mxu0 0.0
        %1388 = vmatpush1.msra.mxu0 0.0
        %1389 = vmatprep.subr.mxu0 0.0
        %1390 = vmatpush1.msra.mxu0 0.0
        %1391 = vmatprep.subr.mxu0 0.0
        %1392 = vmatpush1.msra.mxu0 0.0
        %1393 = vmatprep.subr.mxu0 0.0
        %1394 = vmatpush1.msra.mxu0 0.0
        %1395 = vmatprep.subr.mxu0 0.0
        %1396 = vmatpush1.msra.mxu0 0.0
        %1397 = vmatprep.subr.mxu0 0.0
        %1398 = vmatpush1.msra.mxu0 0.0
        %1399 = vmatprep.subr.mxu0 0.0
        %1400 = vmatpush1.msra.mxu0 0.0
        %1401 = vmatprep.subr.mxu0 0.0
        %1402 = vmatpush1.msra.mxu0 0.0
        %1403 = vmatprep.subr.mxu0 0.0
        %1404 = vmatpush1.msra.mxu0 0.0
        %1405 = vmatprep.subr.mxu0 0.0
        %1406 = vmatpush1.msra.mxu0 0.0
        %1407 = vmatprep.subr.mxu0 0.0
        %1408 = vmatpush1.msra.mxu0 0.0
        %1409 = vmatprep.subr.mxu0 0.0
        %1410 = vmatpush1.msra.mxu0 0.0
        %1411 = vmatprep.subr.mxu0 0.0
        %1412 = vmatpush1.msra.mxu0 0.0
        %1413 = vmatprep.subr.mxu0 0.0
        %1414 = vmatpush1.msra.mxu0 0.0
        %1415 = vmatprep.subr.mxu0 0.0
        %1416 = vmatpush1.msra.mxu0 0.0
        %1417 = vmatprep.subr.mxu0 0.0
        %1418 = vmatpush1.msra.mxu0 0.0
        %1419 = vmatprep.subr.mxu0 0.0
        %1420 = vmatpush1.msra.mxu0 0.0
        %1421 = vmatprep.mubr.f32.mxu0 0.0
        %1422 = vmatmul.mubr.f32.gmra.mrb[0].mxu0 %v1355
        %v1423 = vpop.f32.mrb[0].mxu0
        %v1424 = vadd.f32 0.0, %v1423
        %v1425 = vpop.f32.mrb[0].mxu0
        %1426 = vdwg.mxu0
        %v1428 = vsel %vm1009, %v1351, 0
        %1430 = vmatprep.subr.mxu0 0.0
        %1431 = vmatpush1.msra.mxu0 %v1001
        %1432 = vmatprep.subr.mxu0 0.0
        %1433 = vmatpush1.msra.mxu0 0.0
        %1434 = vmatprep.subr.mxu0 0.0
        %1435 = vmatpush1.msra.mxu0 0.0
        %1436 = vmatprep.subr.mxu0 0.0
        %1437 = vmatpush1.msra.mxu0 0.0
        %1438 = vmatprep.subr.mxu0 0.0
        %1439 = vmatpush1.msra.mxu0 0.0
        %1440 = vmatprep.subr.mxu0 0.0
        %1441 = vmatpush1.msra.mxu0 0.0
        %1442 = vmatprep.subr.mxu0 0.0
        %1443 = vmatpush1.msra.mxu0 0.0
        %1444 = vmatprep.subr.mxu0 0.0
        %1445 = vmatpush1.msra.mxu0 0.0
        %1446 = vmatprep.subr.mxu0 0.0
        %1447 = vmatpush1.msra.mxu0 0.0
        %1448 = vmatprep.subr.mxu0 0.0
        %1449 = vmatpush1.msra.mxu0 0.0
        %1450 = vmatprep.subr.mxu0 0.0
        %1451 = vmatpush1.msra.mxu0 0.0
        %1452 = vmatprep.subr.mxu0 0.0
        %1453 = vmatpush1.msra.mxu0 0.0
        %1454 = vmatprep.subr.mxu0 0.0
        %1455 = vmatpush1.msra.mxu0 0.0
        %1456 = vmatprep.subr.mxu0 0.0
        %1457 = vmatpush1.msra.mxu0 0.0
        %1458 = vmatprep.subr.mxu0 0.0
        %1459 = vmatpush1.msra.mxu0 0.0
        %1460 = vmatprep.subr.mxu0 0.0
        %1461 = vmatpush1.msra.mxu0 0.0
        %1462 = vmatprep.subr.mxu0 0.0
        %1463 = vmatpush1.msra.mxu0 0.0
        %1464 = vmatprep.subr.mxu0 0.0
        %1465 = vmatpush1.msra.mxu0 0.0
        %1466 = vmatprep.subr.mxu0 0.0
        %1467 = vmatpush1.msra.mxu0 0.0
        %1468 = vmatprep.subr.mxu0 0.0
        %1469 = vmatpush1.msra.mxu0 0.0
        %1470 = vmatprep.subr.mxu0 0.0
        %1471 = vmatpush1.msra.mxu0 0.0
        %1472 = vmatprep.subr.mxu0 0.0
        %1473 = vmatpush1.msra.mxu0 0.0
        %1474 = vmatprep.subr.mxu0 0.0
        %1475 = vmatpush1.msra.mxu0 0.0
        %1476 = vmatprep.subr.mxu0 0.0
        %1477 = vmatpush1.msra.mxu0 0.0
        %1478 = vmatprep.subr.mxu0 0.0
        %1479 = vmatpush1.msra.mxu0 0.0
        %1480 = vmatprep.subr.mxu0 0.0
        %1481 = vmatpush1.msra.mxu0 0.0
        %1482 = vmatprep.subr.mxu0 0.0
        %1483 = vmatpush1.msra.mxu0 0.0
        %1484 = vmatprep.subr.mxu0 0.0
        %1485 = vmatpush1.msra.mxu0 0.0
        %1486 = vmatprep.subr.mxu0 0.0
        %1487 = vmatpush1.msra.mxu0 0.0
        %1488 = vmatprep.subr.mxu0 0.0
        %1489 = vmatpush1.msra.mxu0 0.0
        %1490 = vmatprep.subr.mxu0 0.0
        %1491 = vmatpush1.msra.mxu0 0.0
        %1492 = vmatprep.subr.mxu0 0.0
        %1493 = vmatpush1.msra.mxu0 0.0
        %1494 = vmatprep.mubr.f32.mxu0 0.0
        %1495 = vmatmul.mubr.f32.gmra.mrb[0].mxu0 %v1428
        %v1496 = vpop.f32.mrb[0].mxu0
        %v1497 = vadd.f32 0.0, %v1496
        %v1498 = vpop.f32.mrb[0].mxu0
        %1499 = vdwg.mxu0
        %v1501 = vsel %vm1009, %v1352, 0
        %1503 = vmatprep.subr.mxu0 0.0
        %1504 = vmatpush1.msra.mxu0 %v1004
        %1505 = vmatprep.subr.mxu0 0.0
        %1506 = vmatpush1.msra.mxu0 0.0
        %1507 = vmatprep.subr.mxu0 0.0
        %1508 = vmatpush1.msra.mxu0 0.0
        %1509 = vmatprep.subr.mxu0 0.0
        %1510 = vmatpush1.msra.mxu0 0.0
        %1511 = vmatprep.subr.mxu0 0.0
        %1512 = vmatpush1.msra.mxu0 0.0
        %1513 = vmatprep.subr.mxu0 0.0
        %1514 = vmatpush1.msra.mxu0 0.0
        %1515 = vmatprep.subr.mxu0 0.0
        %1516 = vmatpush1.msra.mxu0 0.0
        %1517 = vmatprep.subr.mxu0 0.0
        %1518 = vmatpush1.msra.mxu0 0.0
        %1519 = vmatprep.subr.mxu0 0.0
        %1520 = vmatpush1.msra.mxu0 0.0
        %1521 = vmatprep.subr.mxu0 0.0
        %1522 = vmatpush1.msra.mxu0 0.0
        %1523 = vmatprep.subr.mxu0 0.0
        %1524 = vmatpush1.msra.mxu0 0.0
        %1525 = vmatprep.subr.mxu0 0.0
        %1526 = vmatpush1.msra.mxu0 0.0
        %1527 = vmatprep.subr.mxu0 0.0
        %1528 = vmatpush1.msra.mxu0 0.0
        %1529 = vmatprep.subr.mxu0 0.0
        %1530 = vmatpush1.msra.mxu0 0.0
        %1531 = vmatprep.subr.mxu0 0.0
        %1532 = vmatpush1.msra.mxu0 0.0
        %1533 = vmatprep.subr.mxu0 0.0
        %1534 = vmatpush1.msra.mxu0 0.0
        %1535 = vmatprep.subr.mxu0 0.0
        %1536 = vmatpush1.msra.mxu0 0.0
        %1537 = vmatprep.subr.mxu0 0.0
        %1538 = vmatpush1.msra.mxu0 0.0
        %1539 = vmatprep.subr.mxu0 0.0
        %1540 = vmatpush1.msra.mxu0 0.0
        %1541 = vmatprep.subr.mxu0 0.0
        %1542 = vmatpush1.msra.mxu0 0.0
        %1543 = vmatprep.subr.mxu0 0.0
        %1544 = vmatpush1.msra.mxu0 0.0
        %1545 = vmatprep.subr.mxu0 0.0
        %1546 = vmatpush1.msra.mxu0 0.0
        %1547 = vmatprep.subr.mxu0 0.0
        %1548 = vmatpush1.msra.mxu0 0.0
        %1549 = vmatprep.subr.mxu0 0.0
        %1550 = vmatpush1.msra.mxu0 0.0
        %1551 = vmatprep.subr.mxu0 0.0
        %1552 = vmatpush1.msra.mxu0 0.0
        %1553 = vmatprep.subr.mxu0 0.0
        %1554 = vmatpush1.msra.mxu0 0.0
        %1555 = vmatprep.subr.mxu0 0.0
        %1556 = vmatpush1.msra.mxu0 0.0
        %1557 = vmatprep.subr.mxu0 0.0
        %1558 = vmatpush1.msra.mxu0 0.0
        %1559 = vmatprep.subr.mxu0 0.0
        %1560 = vmatpush1.msra.mxu0 0.0
        %1561 = vmatprep.subr.mxu0 0.0
        %1562 = vmatpush1.msra.mxu0 0.0
        %1563 = vmatprep.subr.mxu0 0.0
        %1564 = vmatpush1.msra.mxu0 0.0
        %1565 = vmatprep.subr.mxu0 0.0
        %1566 = vmatpush1.msra.mxu0 0.0
        %1567 = vmatprep.mubr.f32.mxu0 0.0
        %1568 = vmatmul.mubr.f32.gmra.mrb[0].mxu0 %v1501
        %v1569 = vpop.f32.mrb[0].mxu0
        %v1570 = vadd.f32 0.0, %v1569
        %v1571 = vpop.f32.mrb[0].mxu0
        %1572 = vdwg.mxu0
        %v1574 = vsel %vm1009, %v1353, 0
        %1576 = vmatprep.subr.mxu0 0.0
        %1577 = vmatpush1.msra.mxu0 %v1007
        %1578 = vmatprep.subr.mxu0 0.0
        %1579 = vmatpush1.msra.mxu0 0.0
        %1580 = vmatprep.subr.mxu0 0.0
        %1581 = vmatpush1.msra.mxu0 0.0
        %1582 = vmatprep.subr.mxu0 0.0
        %1583 = vmatpush1.msra.mxu0 0.0
        %1584 = vmatprep.subr.mxu0 0.0
        %1585 = vmatpush1.msra.mxu0 0.0
        %1586 = vmatprep.subr.mxu0 0.0
        %1587 = vmatpush1.msra.mxu0 0.0
        %1588 = vmatprep.subr.mxu0 0.0
        %1589 = vmatpush1.msra.mxu0 0.0
        %1590 = vmatprep.subr.mxu0 0.0
        %1591 = vmatpush1.msra.mxu0 0.0
        %1592 = vmatprep.subr.mxu0 0.0
        %1593 = vmatpush1.msra.mxu0 0.0
        %1594 = vmatprep.subr.mxu0 0.0
        %1595 = vmatpush1.msra.mxu0 0.0
        %1596 = vmatprep.subr.mxu0 0.0
        %1597 = vmatpush1.msra.mxu0 0.0
        %1598 = vmatprep.subr.mxu0 0.0
        %1599 = vmatpush1.msra.mxu0 0.0
        %1600 = vmatprep.subr.mxu0 0.0
        %1601 = vmatpush1.msra.mxu0 0.0
        %1602 = vmatprep.subr.mxu0 0.0
        %1603 = vmatpush1.msra.mxu0 0.0
        %1604 = vmatprep.subr.mxu0 0.0
        %1605 = vmatpush1.msra.mxu0 0.0
        %1606 = vmatprep.subr.mxu0 0.0
        %1607 = vmatpush1.msra.mxu0 0.0
        %1608 = vmatprep.subr.mxu0 0.0
        %1609 = vmatpush1.msra.mxu0 0.0
        %1610 = vmatprep.subr.mxu0 0.0
        %1611 = vmatpush1.msra.mxu0 0.0
        %1612 = vmatprep.subr.mxu0 0.0
        %1613 = vmatpush1.msra.mxu0 0.0
        %1614 = vmatprep.subr.mxu0 0.0
        %1615 = vmatpush1.msra.mxu0 0.0
        %1616 = vmatprep.subr.mxu0 0.0
        %1617 = vmatpush1.msra.mxu0 0.0
        %1618 = vmatprep.subr.mxu0 0.0
        %1619 = vmatpush1.msra.mxu0 0.0
        %1620 = vmatprep.subr.mxu0 0.0
        %1621 = vmatpush1.msra.mxu0 0.0
        %1622 = vmatprep.subr.mxu0 0.0
        %1623 = vmatpush1.msra.mxu0 0.0
        %1624 = vmatprep.subr.mxu0 0.0
        %1625 = vmatpush1.msra.mxu0 0.0
        %1626 = vmatprep.subr.mxu0 0.0
        %1627 = vmatpush1.msra.mxu0 0.0
        %1628 = vmatprep.subr.mxu0 0.0
        %1629 = vmatpush1.msra.mxu0 0.0
        %1630 = vmatprep.subr.mxu0 0.0
        %1631 = vmatpush1.msra.mxu0 0.0
        %1632 = vmatprep.subr.mxu0 0.0
        %1633 = vmatpush1.msra.mxu0 0.0
        %1634 = vmatprep.subr.mxu0 0.0
        %1635 = vmatpush1.msra.mxu0 0.0
        %1636 = vmatprep.subr.mxu0 0.0
        %1637 = vmatpush1.msra.mxu0 0.0
        %1638 = vmatprep.subr.mxu0 0.0
        %1639 = vmatpush1.msra.mxu0 0.0
        %1640 = vmatprep.mubr.f32.mxu0 0.0
        %1641 = vmatmul.mubr.f32.gmra.mrb[0].mxu0 %v1574
        %v1642 = vpop.f32.mrb[0].mxu0
        %v1643 = vadd.f32 0.0, %v1642
        %v1644 = vpop.f32.mrb[0].mxu0
        %1645 = vdwg.mxu0
        %1647 = vrot.lane.b32.xlu0 %v1497, 8
        %v1648 = vpop.permute.xlu0 %1647
        %1651 = vrot.lane.b32.xlu0 %v1570, 16
        %v1652 = vpop.permute.xlu0 %1651
        %1655 = vrot.lane.b32.xlu0 %v1643, 24
        %v1656 = vpop.permute.xlu0 %1655
        %v1658 = vsel %vm1009, %v1424, %v1648
        %vm1659 = vcmask 130048
        %v1660 = vsel %vm1659, %v1658, %v1652
        %vm1661 = vcmask 195584
        %v1662 = vsel %vm1661, %v1660, %v1656
        %v1663 = vld [vmem:[#allocation16] sm:$0xff]
        %v1664 = vld [vmem:[#allocation16 + $0x8] sm:$0xff]
        %v1665 = vld [vmem:[#allocation16 + $0x10] sm:$0xff]
        %v1666 = vld [vmem:[#allocation16 + $0x18] sm:$0xff]
        %v1667 = vlaneseq
        %v1668 = vshrl.u32 %v1667, 7
        %v1669 = vsub.s32 5, %v1668
        %v1670 = vrot.slane %v736, %v1669
        %v1672 = vsel %vm747, %v1662, 0
        %1674 = vmatprep.subr.mxu0 0.0
        %1675 = vmatpush1.msra.mxu0 %v1663
        %1676 = vmatprep.subr.mxu0 0.0
        %1677 = vmatpush1.msra.mxu0 %v1664
        %1678 = vmatprep.subr.mxu0 0.0
        %1679 = vmatpush1.msra.mxu0 %v1665
        %1680 = vmatprep.subr.mxu0 0.0
        %1681 = vmatpush1.msra.mxu0 %v1666
        %1682 = vmatprep.subr.mxu0 0.0
        %1683 = vmatpush1.msra.mxu0 0.0
        %1684 = vmatprep.subr.mxu0 0.0
        %1685 = vmatpush1.msra.mxu0 0.0
        %1686 = vmatprep.subr.mxu0 0.0
        %1687 = vmatpush1.msra.mxu0 0.0
        %1688 = vmatprep.subr.mxu0 0.0
        %1689 = vmatpush1.msra.mxu0 0.0
        %1690 = vmatprep.subr.mxu0 0.0
        %1691 = vmatpush1.msra.mxu0 0.0
        %1692 = vmatprep.subr.mxu0 0.0
        %1693 = vmatpush1.msra.mxu0 0.0
        %1694 = vmatprep.subr.mxu0 0.0
        %1695 = vmatpush1.msra.mxu0 0.0
        %1696 = vmatprep.subr.mxu0 0.0
        %1697 = vmatpush1.msra.mxu0 0.0
        %1698 = vmatprep.subr.mxu0 0.0
        %1699 = vmatpush1.msra.mxu0 0.0
        %1700 = vmatprep.subr.mxu0 0.0
        %1701 = vmatpush1.msra.mxu0 0.0
        %1702 = vmatprep.subr.mxu0 0.0
        %1703 = vmatpush1.msra.mxu0 0.0
        %1704 = vmatprep.subr.mxu0 0.0
        %1705 = vmatpush1.msra.mxu0 0.0
        %1706 = vmatprep.subr.mxu0 0.0
        %1707 = vmatpush1.msra.mxu0 0.0
        %1708 = vmatprep.subr.mxu0 0.0
        %1709 = vmatpush1.msra.mxu0 0.0
        %1710 = vmatprep.subr.mxu0 0.0
        %1711 = vmatpush1.msra.mxu0 0.0
        %1712 = vmatprep.subr.mxu0 0.0
        %1713 = vmatpush1.msra.mxu0 0.0
        %1714 = vmatprep.subr.mxu0 0.0
        %1715 = vmatpush1.msra.mxu0 0.0
        %1716 = vmatprep.subr.mxu0 0.0
        %1717 = vmatpush1.msra.mxu0 0.0
        %1718 = vmatprep.subr.mxu0 0.0
        %1719 = vmatpush1.msra.mxu0 0.0
        %1720 = vmatprep.subr.mxu0 0.0
        %1721 = vmatpush1.msra.mxu0 0.0
        %1722 = vmatprep.subr.mxu0 0.0
        %1723 = vmatpush1.msra.mxu0 0.0
        %1724 = vmatprep.subr.mxu0 0.0
        %1725 = vmatpush1.msra.mxu0 0.0
        %1726 = vmatprep.subr.mxu0 0.0
        %1727 = vmatpush1.msra.mxu0 0.0
        %1728 = vmatprep.subr.mxu0 0.0
        %1729 = vmatpush1.msra.mxu0 0.0
        %1730 = vmatprep.subr.mxu0 0.0
        %1731 = vmatpush1.msra.mxu0 0.0
        %1732 = vmatprep.subr.mxu0 0.0
        %1733 = vmatpush1.msra.mxu0 0.0
        %1734 = vmatprep.subr.mxu0 0.0
        %1735 = vmatpush1.msra.mxu0 0.0
        %1736 = vmatprep.subr.mxu0 0.0
        %1737 = vmatpush1.msra.mxu0 0.0
        %1738 = vmatprep.mubr.f32.mxu0 0.0
        %1739 = vmatmul.mubr.f32.gmra.mrb[0].mxu0 %v1672
        %v1740 = vpop.f32.mrb[0].mxu0
        %v1741 = vadd.f32 %v1670, %v1740
        %v1742 = vpop.f32.mrb[0].mxu0
        %1743 = vdwg.mxu0
        %v1744 = vld [vmem:[%s629] sm:$0xff]
        %v1745 = vld [vmem:[%s638] sm:$0xff]
        %v1746 = vld [vmem:[#allocation13] sm:$0xff]
        %v1747 = vld [vmem:[#allocation13 + $0x8] sm:$0xff]
        %v1748 = vld [vmem:[#allocation13 + $0x10] sm:$0xff]
        %v1749 = vld [vmem:[#allocation13 + $0x18] sm:$0xff]
        %v1750 = vlaneseq
        %v1751 = vshrl.u32 %v1750, 7
        %v1752 = vsub.s32 3, %v1751
        %v1753 = vrot.slane %v736, %v1752
        %v1755 = vsel %vm747, %v1744, 0
        %1757 = vmatprep.subr.mxu0 0.0
        %1758 = vmatpush1.msra.mxu0 %v1746
        %1759 = vmatprep.subr.mxu0 0.0
        %1760 = vmatpush1.msra.mxu0 %v1747
        %1761 = vmatprep.subr.mxu0 0.0
        %1762 = vmatpush1.msra.mxu0 %v1748
        %1763 = vmatprep.subr.mxu0 0.0
        %1764 = vmatpush1.msra.mxu0 %v1749
        %1765 = vmatprep.subr.mxu0 0.0
        %1766 = vmatpush1.msra.mxu0 0.0
        %1767 = vmatprep.subr.mxu0 0.0
        %1768 = vmatpush1.msra.mxu0 0.0
        %1769 = vmatprep.subr.mxu0 0.0
        %1770 = vmatpush1.msra.mxu0 0.0
        %1771 = vmatprep.subr.mxu0 0.0
        %1772 = vmatpush1.msra.mxu0 0.0
        %1773 = vmatprep.subr.mxu0 0.0
        %1774 = vmatpush1.msra.mxu0 0.0
        %1775 = vmatprep.subr.mxu0 0.0
        %1776 = vmatpush1.msra.mxu0 0.0
        %1777 = vmatprep.subr.mxu0 0.0
        %1778 = vmatpush1.msra.mxu0 0.0
        %1779 = vmatprep.subr.mxu0 0.0
        %1780 = vmatpush1.msra.mxu0 0.0
        %1781 = vmatprep.subr.mxu0 0.0
        %1782 = vmatpush1.msra.mxu0 0.0
        %1783 = vmatprep.subr.mxu0 0.0
        %1784 = vmatpush1.msra.mxu0 0.0
        %1785 = vmatprep.subr.mxu0 0.0
        %1786 = vmatpush1.msra.mxu0 0.0
        %1787 = vmatprep.subr.mxu0 0.0
        %1788 = vmatpush1.msra.mxu0 0.0
        %1789 = vmatprep.subr.mxu0 0.0
        %1790 = vmatpush1.msra.mxu0 0.0
        %1791 = vmatprep.subr.mxu0 0.0
        %1792 = vmatpush1.msra.mxu0 0.0
        %1793 = vmatprep.subr.mxu0 0.0
        %1794 = vmatpush1.msra.mxu0 0.0
        %1795 = vmatprep.subr.mxu0 0.0
        %1796 = vmatpush1.msra.mxu0 0.0
        %1797 = vmatprep.subr.mxu0 0.0
        %1798 = vmatpush1.msra.mxu0 0.0
        %1799 = vmatprep.subr.mxu0 0.0
        %1800 = vmatpush1.msra.mxu0 0.0
        %1801 = vmatprep.subr.mxu0 0.0
        %1802 = vmatpush1.msra.mxu0 0.0
        %1803 = vmatprep.subr.mxu0 0.0
        %1804 = vmatpush1.msra.mxu0 0.0
        %1805 = vmatprep.subr.mxu0 0.0
        %1806 = vmatpush1.msra.mxu0 0.0
        %1807 = vmatprep.subr.mxu0 0.0
        %1808 = vmatpush1.msra.mxu0 0.0
        %1809 = vmatprep.subr.mxu0 0.0
        %1810 = vmatpush1.msra.mxu0 0.0
        %1811 = vmatprep.subr.mxu0 0.0
        %1812 = vmatpush1.msra.mxu0 0.0
        %1813 = vmatprep.subr.mxu0 0.0
        %1814 = vmatpush1.msra.mxu0 0.0
        %1815 = vmatprep.subr.mxu0 0.0
        %1816 = vmatpush1.msra.mxu0 0.0
        %1817 = vmatprep.subr.mxu0 0.0
        %1818 = vmatpush1.msra.mxu0 0.0
        %1819 = vmatprep.subr.mxu0 0.0
        %1820 = vmatpush1.msra.mxu0 0.0
        %1821 = vmatprep.mubr.f32.mxu0 0.0
        %1822 = vmatmul.mubr.f32.gmra.mrb[0].mxu0 %v1755
        %v1823 = vpop.f32.mrb[0].mxu0
        %v1824 = vadd.f32 %v1753, %v1823
        %v1825 = vpop.f32.mrb[0].mxu0
        %1826 = vdwg.mxu0
        %v1827 = vld [vmem:[#allocation14] sm:$0xff]
        %v1828 = vld [vmem:[#allocation14 + $0x8] sm:$0xff]
        %v1829 = vld [vmem:[#allocation14 + $0x10] sm:$0xff]
        %v1830 = vld [vmem:[#allocation14 + $0x18] sm:$0xff]
        %v1831 = vlaneseq
        %v1832 = vshrl.u32 %v1831, 7
        %v1833 = vsub.s32 4, %v1832
        %v1834 = vrot.slane %v736, %v1833
        %v1836 = vsel %vm747, %v1745, 0
        %1838 = vmatprep.subr.mxu0 0.0
        %1839 = vmatpush1.msra.mxu0 %v1827
        %1840 = vmatprep.subr.mxu0 0.0
        %1841 = vmatpush1.msra.mxu0 %v1828
        %1842 = vmatprep.subr.mxu0 0.0
        %1843 = vmatpush1.msra.mxu0 %v1829
        %1844 = vmatprep.subr.mxu0 0.0
        %1845 = vmatpush1.msra.mxu0 %v1830
        %1846 = vmatprep.subr.mxu0 0.0
        %1847 = vmatpush1.msra.mxu0 0.0
        %1848 = vmatprep.subr.mxu0 0.0
        %1849 = vmatpush1.msra.mxu0 0.0
        %1850 = vmatprep.subr.mxu0 0.0
        %1851 = vmatpush1.msra.mxu0 0.0
        %1852 = vmatprep.subr.mxu0 0.0
        %1853 = vmatpush1.msra.mxu0 0.0
        %1854 = vmatprep.subr.mxu0 0.0
        %1855 = vmatpush1.msra.mxu0 0.0
        %1856 = vmatprep.subr.mxu0 0.0
        %1857 = vmatpush1.msra.mxu0 0.0
        %1858 = vmatprep.subr.mxu0 0.0
        %1859 = vmatpush1.msra.mxu0 0.0
        %1860 = vmatprep.subr.mxu0 0.0
        %1861 = vmatpush1.msra.mxu0 0.0
        %1862 = vmatprep.subr.mxu0 0.0
        %1863 = vmatpush1.msra.mxu0 0.0
        %1864 = vmatprep.subr.mxu0 0.0
        %1865 = vmatpush1.msra.mxu0 0.0
        %1866 = vmatprep.subr.mxu0 0.0
        %1867 = vmatpush1.msra.mxu0 0.0
        %1868 = vmatprep.subr.mxu0 0.0
        %1869 = vmatpush1.msra.mxu0 0.0
        %1870 = vmatprep.subr.mxu0 0.0
        %1871 = vmatpush1.msra.mxu0 0.0
        %1872 = vmatprep.subr.mxu0 0.0
        %1873 = vmatpush1.msra.mxu0 0.0
        %1874 = vmatprep.subr.mxu0 0.0
        %1875 = vmatpush1.msra.mxu0 0.0
        %1876 = vmatprep.subr.mxu0 0.0
        %1877 = vmatpush1.msra.mxu0 0.0
        %1878 = vmatprep.subr.mxu0 0.0
        %1879 = vmatpush1.msra.mxu0 0.0
        %1880 = vmatprep.subr.mxu0 0.0
        %1881 = vmatpush1.msra.mxu0 0.0
        %1882 = vmatprep.subr.mxu0 0.0
        %1883 = vmatpush1.msra.mxu0 0.0
        %1884 = vmatprep.subr.mxu0 0.0
        %1885 = vmatpush1.msra.mxu0 0.0
        %1886 = vmatprep.subr.mxu0 0.0
        %1887 = vmatpush1.msra.mxu0 0.0
        %1888 = vmatprep.subr.mxu0 0.0
        %1889 = vmatpush1.msra.mxu0 0.0
        %1890 = vmatprep.subr.mxu0 0.0
        %1891 = vmatpush1.msra.mxu0 0.0
        %1892 = vmatprep.subr.mxu0 0.0
        %1893 = vmatpush1.msra.mxu0 0.0
        %1894 = vmatprep.subr.mxu0 0.0
        %1895 = vmatpush1.msra.mxu0 0.0
        %1896 = vmatprep.subr.mxu0 0.0
        %1897 = vmatpush1.msra.mxu0 0.0
        %1898 = vmatprep.subr.mxu0 0.0
        %1899 = vmatpush1.msra.mxu0 0.0
        %1900 = vmatprep.subr.mxu0 0.0
        %1901 = vmatpush1.msra.mxu0 0.0
        %1902 = vmatprep.mubr.f32.mxu0 0.0
        %1903 = vmatmul.mubr.f32.gmra.mrb[0].mxu0 %v1836
        %v1904 = vpop.f32.mrb[0].mxu0
        %v1905 = vadd.f32 %v1834, %v1904
        %v1906 = vpop.f32.mrb[0].mxu0
        %1907 = vdwg.mxu0
        %1909 = vrot.lane.b32.xlu0 %v1824, 120
        %v1910 = vpop.permute.xlu0 %1909
        %1911 = vrot.lane.b32.xlu0 %v1824, 112
        %v1912 = vpop.permute.xlu0 %1911
        %1913 = vrot.lane.b32.xlu0 %v1824, 104
        %v1914 = vpop.permute.xlu0 %1913
        %1916 = vrot.lane.b32.xlu0 %v1905, 120
        %v1917 = vpop.permute.xlu0 %1916
        %1919 = vrot.lane.b32.xlu0 %v1905, 112
        %v1920 = vpop.permute.xlu0 %1919
        %1922 = vrot.lane.b32.xlu0 %v1905, 104
        %v1923 = vpop.permute.xlu0 %1922
        %1925 = vrot.lane.b32.xlu0 %v818, 96
        %v1926 = vpop.permute.xlu0 %1925
        %v1927 = vsel %vm1009, %v1926, 0
        %v1929 = vsel %vm1009, %v1824, 0
        %1931 = vmatprep.subr.mxu0 0.0
        %1932 = vmatpush1.xpose.msra.mxu0 %v1929
        %1933 = vmatprep.subr.mxu0 0.0
        %1934 = vmatpush1.xpose.msra.mxu0 0.0
        %1935 = vmatprep.subr.mxu0 0.0
        %1936 = vmatpush1.xpose.msra.mxu0 0.0
        %1937 = vmatprep.subr.mxu0 0.0
        %1938 = vmatpush1.xpose.msra.mxu0 0.0
        %1939 = vmatprep.subr.mxu0 0.0
        %1940 = vmatpush1.xpose.msra.mxu0 0.0
        %1941 = vmatprep.subr.mxu0 0.0
        %1942 = vmatpush1.xpose.msra.mxu0 0.0
        %1943 = vmatprep.subr.mxu0 0.0
        %1944 = vmatpush1.xpose.msra.mxu0 0.0
        %1945 = vmatprep.subr.mxu0 0.0
        %1946 = vmatpush1.xpose.msra.mxu0 0.0
        %1947 = vmatprep.subr.mxu0 0.0
        %1948 = vmatpush1.xpose.msra.mxu0 0.0
        %1949 = vmatprep.subr.mxu0 0.0
        %1950 = vmatpush1.xpose.msra.mxu0 0.0
        %1951 = vmatprep.subr.mxu0 0.0
        %1952 = vmatpush1.xpose.msra.mxu0 0.0
        %1953 = vmatprep.subr.mxu0 0.0
        %1954 = vmatpush1.xpose.msra.mxu0 0.0
        %1955 = vmatprep.subr.mxu0 0.0
        %1956 = vmatpush1.xpose.msra.mxu0 0.0
        %1957 = vmatprep.subr.mxu0 0.0
        %1958 = vmatpush1.xpose.msra.mxu0 0.0
        %1959 = vmatprep.subr.mxu0 0.0
        %1960 = vmatpush1.xpose.msra.mxu0 0.0
        %1961 = vmatprep.subr.mxu0 0.0
        %1962 = vmatpush1.xpose.msra.mxu0 0.0
        %1963 = vmatprep.subr.mxu0 0.0
        %1964 = vmatpush1.xpose.msra.mxu0 0.0
        %1965 = vmatprep.subr.mxu0 0.0
        %1966 = vmatpush1.xpose.msra.mxu0 0.0
        %1967 = vmatprep.subr.mxu0 0.0
        %1968 = vmatpush1.xpose.msra.mxu0 0.0
        %1969 = vmatprep.subr.mxu0 0.0
        %1970 = vmatpush1.xpose.msra.mxu0 0.0
        %1971 = vmatprep.subr.mxu0 0.0
        %1972 = vmatpush1.xpose.msra.mxu0 0.0
        %1973 = vmatprep.subr.mxu0 0.0
        %1974 = vmatpush1.xpose.msra.mxu0 0.0
        %1975 = vmatprep.subr.mxu0 0.0
        %1976 = vmatpush1.xpose.msra.mxu0 0.0
        %1977 = vmatprep.subr.mxu0 0.0
        %1978 = vmatpush1.xpose.msra.mxu0 0.0
        %1979 = vmatprep.subr.mxu0 0.0
        %1980 = vmatpush1.xpose.msra.mxu0 0.0
        %1981 = vmatprep.subr.mxu0 0.0
        %1982 = vmatpush1.xpose.msra.mxu0 0.0
        %1983 = vmatprep.subr.mxu0 0.0
        %1984 = vmatpush1.xpose.msra.mxu0 0.0
        %1985 = vmatprep.subr.mxu0 0.0
        %1986 = vmatpush1.xpose.msra.mxu0 0.0
        %1987 = vmatprep.subr.mxu0 0.0
        %1988 = vmatpush1.xpose.msra.mxu0 0.0
        %1989 = vmatprep.subr.mxu0 0.0
        %1990 = vmatpush1.xpose.msra.mxu0 0.0
        %1991 = vmatprep.subr.mxu0 0.0
        %1992 = vmatpush1.xpose.msra.mxu0 0.0
        %1993 = vmatprep.subr.mxu0 0.0
        %1994 = vmatpush1.xpose.msra.mxu0 0.0
        %1995 = vmatprep.mubr.f32.mxu0 0.0
        %1996 = vmatmul.mubr.f32.gmra.mrb[0].mxu0 %v1927
        %v1997 = vpop.f32.mrb[0].mxu0
        %v1998 = vadd.f32 0.0, %v1997
        %v1999 = vpop.f32.mrb[0].mxu0
        %2000 = vdwg.mxu0
        %2001 = vrot.lane.b32.xlu0 %v823, 96
        %v2002 = vpop.permute.xlu0 %2001
        %v2003 = vsel %vm1009, %v2002, 0
        %v2005 = vsel %vm1009, %v1910, 0
        %2007 = vmatprep.subr.mxu0 0.0
        %2008 = vmatpush1.xpose.msra.mxu0 %v2005
        %2009 = vmatprep.subr.mxu0 0.0
        %2010 = vmatpush1.xpose.msra.mxu0 0.0
        %2011 = vmatprep.subr.mxu0 0.0
        %2012 = vmatpush1.xpose.msra.mxu0 0.0
        %2013 = vmatprep.subr.mxu0 0.0
        %2014 = vmatpush1.xpose.msra.mxu0 0.0
        %2015 = vmatprep.subr.mxu0 0.0
        %2016 = vmatpush1.xpose.msra.mxu0 0.0
        %2017 = vmatprep.subr.mxu0 0.0
        %2018 = vmatpush1.xpose.msra.mxu0 0.0
        %2019 = vmatprep.subr.mxu0 0.0
        %2020 = vmatpush1.xpose.msra.mxu0 0.0
        %2021 = vmatprep.subr.mxu0 0.0
        %2022 = vmatpush1.xpose.msra.mxu0 0.0
        %2023 = vmatprep.subr.mxu0 0.0
        %2024 = vmatpush1.xpose.msra.mxu0 0.0
        %2025 = vmatprep.subr.mxu0 0.0
        %2026 = vmatpush1.xpose.msra.mxu0 0.0
        %2027 = vmatprep.subr.mxu0 0.0
        %2028 = vmatpush1.xpose.msra.mxu0 0.0
        %2029 = vmatprep.subr.mxu0 0.0
        %2030 = vmatpush1.xpose.msra.mxu0 0.0
        %2031 = vmatprep.subr.mxu0 0.0
        %2032 = vmatpush1.xpose.msra.mxu0 0.0
        %2033 = vmatprep.subr.mxu0 0.0
        %2034 = vmatpush1.xpose.msra.mxu0 0.0
        %2035 = vmatprep.subr.mxu0 0.0
        %2036 = vmatpush1.xpose.msra.mxu0 0.0
        %2037 = vmatprep.subr.mxu0 0.0
        %2038 = vmatpush1.xpose.msra.mxu0 0.0
        %2039 = vmatprep.subr.mxu0 0.0
        %2040 = vmatpush1.xpose.msra.mxu0 0.0
        %2041 = vmatprep.subr.mxu0 0.0
        %2042 = vmatpush1.xpose.msra.mxu0 0.0
        %2043 = vmatprep.subr.mxu0 0.0
        %2044 = vmatpush1.xpose.msra.mxu0 0.0
        %2045 = vmatprep.subr.mxu0 0.0
        %2046 = vmatpush1.xpose.msra.mxu0 0.0
        %2047 = vmatprep.subr.mxu0 0.0
        %2048 = vmatpush1.xpose.msra.mxu0 0.0
        %2049 = vmatprep.subr.mxu0 0.0
        %2050 = vmatpush1.xpose.msra.mxu0 0.0
        %2051 = vmatprep.subr.mxu0 0.0
        %2052 = vmatpush1.xpose.msra.mxu0 0.0
        %2053 = vmatprep.subr.mxu0 0.0
        %2054 = vmatpush1.xpose.msra.mxu0 0.0
        %2055 = vmatprep.subr.mxu0 0.0
        %2056 = vmatpush1.xpose.msra.mxu0 0.0
        %2057 = vmatprep.subr.mxu0 0.0
        %2058 = vmatpush1.xpose.msra.mxu0 0.0
        %2059 = vmatprep.subr.mxu0 0.0
        %2060 = vmatpush1.xpose.msra.mxu0 0.0
        %2061 = vmatprep.subr.mxu0 0.0
        %2062 = vmatpush1.xpose.msra.mxu0 0.0
        %2063 = vmatprep.subr.mxu0 0.0
        %2064 = vmatpush1.xpose.msra.mxu0 0.0
        %2065 = vmatprep.subr.mxu0 0.0
        %2066 = vmatpush1.xpose.msra.mxu0 0.0
        %2067 = vmatprep.subr.mxu0 0.0
        %2068 = vmatpush1.xpose.msra.mxu0 0.0
        %2069 = vmatprep.subr.mxu0 0.0
        %2070 = vmatpush1.xpose.msra.mxu0 0.0
        %2071 = vmatprep.mubr.f32.mxu0 0.0
        %2072 = vmatmul.mubr.f32.gmra.mrb[0].mxu0 %v2003
        %v2073 = vpop.f32.mrb[0].mxu0
        %v2074 = vadd.f32 0.0, %v2073
        %v2075 = vpop.f32.mrb[0].mxu0
        %2076 = vdwg.mxu0
        %2077 = vrot.lane.b32.xlu0 %v825, 96
        %v2078 = vpop.permute.xlu0 %2077
        %v2079 = vsel %vm1009, %v2078, 0
        %v2081 = vsel %vm1009, %v1912, 0
        %2083 = vmatprep.subr.mxu0 0.0
        %2084 = vmatpush1.xpose.msra.mxu0 %v2081
        %2085 = vmatprep.subr.mxu0 0.0
        %2086 = vmatpush1.xpose.msra.mxu0 0.0
        %2087 = vmatprep.subr.mxu0 0.0
        %2088 = vmatpush1.xpose.msra.mxu0 0.0
        %2089 = vmatprep.subr.mxu0 0.0
        %2090 = vmatpush1.xpose.msra.mxu0 0.0
        %2091 = vmatprep.subr.mxu0 0.0
        %2092 = vmatpush1.xpose.msra.mxu0 0.0
        %2093 = vmatprep.subr.mxu0 0.0
        %2094 = vmatpush1.xpose.msra.mxu0 0.0
        %2095 = vmatprep.subr.mxu0 0.0
        %2096 = vmatpush1.xpose.msra.mxu0 0.0
        %2097 = vmatprep.subr.mxu0 0.0
        %2098 = vmatpush1.xpose.msra.mxu0 0.0
        %2099 = vmatprep.subr.mxu0 0.0
        %2100 = vmatpush1.xpose.msra.mxu0 0.0
        %2101 = vmatprep.subr.mxu0 0.0
        %2102 = vmatpush1.xpose.msra.mxu0 0.0
        %2103 = vmatprep.subr.mxu0 0.0
        %2104 = vmatpush1.xpose.msra.mxu0 0.0
        %2105 = vmatprep.subr.mxu0 0.0
        %2106 = vmatpush1.xpose.msra.mxu0 0.0
        %2107 = vmatprep.subr.mxu0 0.0
        %2108 = vmatpush1.xpose.msra.mxu0 0.0
        %2109 = vmatprep.subr.mxu0 0.0
        %2110 = vmatpush1.xpose.msra.mxu0 0.0
        %2111 = vmatprep.subr.mxu0 0.0
        %2112 = vmatpush1.xpose.msra.mxu0 0.0
        %2113 = vmatprep.subr.mxu0 0.0
        %2114 = vmatpush1.xpose.msra.mxu0 0.0
        %2115 = vmatprep.subr.mxu0 0.0
        %2116 = vmatpush1.xpose.msra.mxu0 0.0
        %2117 = vmatprep.subr.mxu0 0.0
        %2118 = vmatpush1.xpose.msra.mxu0 0.0
        %2119 = vmatprep.subr.mxu0 0.0
        %2120 = vmatpush1.xpose.msra.mxu0 0.0
        %2121 = vmatprep.subr.mxu0 0.0
        %2122 = vmatpush1.xpose.msra.mxu0 0.0
        %2123 = vmatprep.subr.mxu0 0.0
        %2124 = vmatpush1.xpose.msra.mxu0 0.0
        %2125 = vmatprep.subr.mxu0 0.0
        %2126 = vmatpush1.xpose.msra.mxu0 0.0
        %2127 = vmatprep.subr.mxu0 0.0
        %2128 = vmatpush1.xpose.msra.mxu0 0.0
        %2129 = vmatprep.subr.mxu0 0.0
        %2130 = vmatpush1.xpose.msra.mxu0 0.0
        %2131 = vmatprep.subr.mxu0 0.0
        %2132 = vmatpush1.xpose.msra.mxu0 0.0
        %2133 = vmatprep.subr.mxu0 0.0
        %2134 = vmatpush1.xpose.msra.mxu0 0.0
        %2135 = vmatprep.subr.mxu0 0.0
        %2136 = vmatpush1.xpose.msra.mxu0 0.0
        %2137 = vmatprep.subr.mxu0 0.0
        %2138 = vmatpush1.xpose.msra.mxu0 0.0
        %2139 = vmatprep.subr.mxu0 0.0
        %2140 = vmatpush1.xpose.msra.mxu0 0.0
        %2141 = vmatprep.subr.mxu0 0.0
        %2142 = vmatpush1.xpose.msra.mxu0 0.0
        %2143 = vmatprep.subr.mxu0 0.0
        %2144 = vmatpush1.xpose.msra.mxu0 0.0
        %2145 = vmatprep.subr.mxu0 0.0
        %2146 = vmatpush1.xpose.msra.mxu0 0.0
        %2147 = vmatprep.mubr.f32.mxu0 0.0
        %2148 = vmatmul.mubr.f32.gmra.mrb[0].mxu0 %v2079
        %v2149 = vpop.f32.mrb[0].mxu0
        %v2150 = vadd.f32 0.0, %v2149
        %v2151 = vpop.f32.mrb[0].mxu0
        %2152 = vdwg.mxu0
        %2153 = vrot.lane.b32.xlu0 %v827, 96
        %v2154 = vpop.permute.xlu0 %2153
        %v2155 = vsel %vm1009, %v2154, 0
        %v2157 = vsel %vm1009, %v1914, 0
        %2159 = vmatprep.subr.mxu0 0.0
        %2160 = vmatpush1.xpose.msra.mxu0 %v2157
        %2161 = vmatprep.subr.mxu0 0.0
        %2162 = vmatpush1.xpose.msra.mxu0 0.0
        %2163 = vmatprep.subr.mxu0 0.0
        %2164 = vmatpush1.xpose.msra.mxu0 0.0
        %2165 = vmatprep.subr.mxu0 0.0
        %2166 = vmatpush1.xpose.msra.mxu0 0.0
        %2167 = vmatprep.subr.mxu0 0.0
        %2168 = vmatpush1.xpose.msra.mxu0 0.0
        %2169 = vmatprep.subr.mxu0 0.0
        %2170 = vmatpush1.xpose.msra.mxu0 0.0
        %2171 = vmatprep.subr.mxu0 0.0
        %2172 = vmatpush1.xpose.msra.mxu0 0.0
        %2173 = vmatprep.subr.mxu0 0.0
        %2174 = vmatpush1.xpose.msra.mxu0 0.0
        %2175 = vmatprep.subr.mxu0 0.0
        %2176 = vmatpush1.xpose.msra.mxu0 0.0
        %2177 = vmatprep.subr.mxu0 0.0
        %2178 = vmatpush1.xpose.msra.mxu0 0.0
        %2179 = vmatprep.subr.mxu0 0.0
        %2180 = vmatpush1.xpose.msra.mxu0 0.0
        %2181 = vmatprep.subr.mxu0 0.0
        %2182 = vmatpush1.xpose.msra.mxu0 0.0
        %2183 = vmatprep.subr.mxu0 0.0
        %2184 = vmatpush1.xpose.msra.mxu0 0.0
        %2185 = vmatprep.subr.mxu0 0.0
        %2186 = vmatpush1.xpose.msra.mxu0 0.0
        %2187 = vmatprep.subr.mxu0 0.0
        %2188 = vmatpush1.xpose.msra.mxu0 0.0
        %2189 = vmatprep.subr.mxu0 0.0
        %2190 = vmatpush1.xpose.msra.mxu0 0.0
        %2191 = vmatprep.subr.mxu0 0.0
        %2192 = vmatpush1.xpose.msra.mxu0 0.0
        %2193 = vmatprep.subr.mxu0 0.0
        %2194 = vmatpush1.xpose.msra.mxu0 0.0
        %2195 = vmatprep.subr.mxu0 0.0
        %2196 = vmatpush1.xpose.msra.mxu0 0.0
        %2197 = vmatprep.subr.mxu0 0.0
        %2198 = vmatpush1.xpose.msra.mxu0 0.0
        %2199 = vmatprep.subr.mxu0 0.0
        %2200 = vmatpush1.xpose.msra.mxu0 0.0
        %2201 = vmatprep.subr.mxu0 0.0
        %2202 = vmatpush1.xpose.msra.mxu0 0.0
        %2203 = vmatprep.subr.mxu0 0.0
        %2204 = vmatpush1.xpose.msra.mxu0 0.0
        %2205 = vmatprep.subr.mxu0 0.0
        %2206 = vmatpush1.xpose.msra.mxu0 0.0
        %2207 = vmatprep.subr.mxu0 0.0
        %2208 = vmatpush1.xpose.msra.mxu0 0.0
        %2209 = vmatprep.subr.mxu0 0.0
        %2210 = vmatpush1.xpose.msra.mxu0 0.0
        %2211 = vmatprep.subr.mxu0 0.0
        %2212 = vmatpush1.xpose.msra.mxu0 0.0
        %2213 = vmatprep.subr.mxu0 0.0
        %2214 = vmatpush1.xpose.msra.mxu0 0.0
        %2215 = vmatprep.subr.mxu0 0.0
        %2216 = vmatpush1.xpose.msra.mxu0 0.0
        %2217 = vmatprep.subr.mxu0 0.0
        %2218 = vmatpush1.xpose.msra.mxu0 0.0
        %2219 = vmatprep.subr.mxu0 0.0
        %2220 = vmatpush1.xpose.msra.mxu0 0.0
        %2221 = vmatprep.subr.mxu0 0.0
        %2222 = vmatpush1.xpose.msra.mxu0 0.0
        %2223 = vmatprep.mubr.f32.mxu0 0.0
        %2224 = vmatmul.mubr.f32.gmra.mrb[0].mxu0 %v2155
        %v2225 = vpop.f32.mrb[0].mxu0
        %v2226 = vadd.f32 0.0, %v2225
        %v2227 = vpop.f32.mrb[0].mxu0
        %2228 = vdwg.mxu0
        %v2229 = vmul.f32 %v1998, 0.35355338
        %v2230 = vmul.f32 %v2074, 0.35355338
        %v2231 = vmul.f32 %v2150, 0.35355338
        %v2232 = vmul.f32 %v2226, 0.35355338
        %v2233 = vsel %vm1009, %v2229, -inf
        %2234 = vmax.xlane.f32.xlu0 %v2233
        %v2235 = vpop.xlane.xlu0 %2234
        %v2236 = vsel %vm1009, %v2230, -inf
        %2237 = vmax.xlane.f32.xlu0 %v2236
        %v2238 = vpop.xlane.xlu0 %2237
        %v2239 = vsel %vm1009, %v2231, -inf
        %2240 = vmax.xlane.f32.xlu0 %v2239
        %v2241 = vpop.xlane.xlu0 %2240
        %v2242 = vsel %vm1009, %v2232, -inf
        %2243 = vmax.xlane.f32.xlu0 %v2242
        %v2244 = vpop.xlane.xlu0 %2243
        %v2245 = vsub.f32 %v2229, %v2235
        %v2246 = vsub.f32 %v2230, %v2238
        %v2247 = vsub.f32 %v2231, %v2241
        %v2248 = vsub.f32 %v2232, %v2244
        %v2249 = vmul.f32 %v2245, 1.442695
        %v2250 = vpow.pop %v2249
        %v2251 = vmul.f32 %v2246, 1.442695
        %v2252 = vpow.pop %v2251
        %v2253 = vmul.f32 %v2247, 1.442695
        %v2254 = vpow.pop %v2253
        %v2255 = vmul.f32 %v2248, 1.442695
        %v2256 = vpow.pop %v2255
        %v2257 = vsel %vm1009, %v2250, 0.0
        %2258 = vadd.xlane.f32.xlu0 %v2257
        %v2259 = vpop.xlane.xlu0 %2258
        %v2260 = vsel %vm1009, %v2252, 0.0
        %2261 = vadd.xlane.f32.xlu0 %v2260
        %v2262 = vpop.xlane.xlu0 %2261
        %v2263 = vsel %vm1009, %v2254, 0.0
        %2264 = vadd.xlane.f32.xlu0 %v2263
        %v2265 = vpop.xlane.xlu0 %2264
        %v2266 = vsel %vm1009, %v2256, 0.0
        %2267 = vadd.xlane.f32.xlu0 %v2266
        %v2268 = vpop.xlane.xlu0 %2267
        %v2269 = vrcp.pop %v2259
        %v2270 = vrcp.pop %v2262
        %v2271 = vrcp.pop %v2265
        %v2272 = vrcp.pop %v2268
        %v2273 = vmul.f32 %v2250, %v2269
        %v2274 = vmul.f32 %v2252, %v2270
        %v2275 = vmul.f32 %v2254, %v2271
        %v2276 = vmul.f32 %v2256, %v2272
        %v2278 = vsel %vm1009, %v2273, 0
        %2280 = vmatprep.subr.mxu0 0.0
        %2281 = vmatpush1.msra.mxu0 %v1905
        %2282 = vmatprep.subr.mxu0 0.0
        %2283 = vmatpush1.msra.mxu0 0.0
        %2284 = vmatprep.subr.mxu0 0.0
        %2285 = vmatpush1.msra.mxu0 0.0
        %2286 = vmatprep.subr.mxu0 0.0
        %2287 = vmatpush1.msra.mxu0 0.0
        %2288 = vmatprep.subr.mxu0 0.0
        %2289 = vmatpush1.msra.mxu0 0.0
        %2290 = vmatprep.subr.mxu0 0.0
        %2291 = vmatpush1.msra.mxu0 0.0
        %2292 = vmatprep.subr.mxu0 0.0
        %2293 = vmatpush1.msra.mxu0 0.0
        %2294 = vmatprep.subr.mxu0 0.0
        %2295 = vmatpush1.msra.mxu0 0.0
        %2296 = vmatprep.subr.mxu0 0.0
        %2297 = vmatpush1.msra.mxu0 0.0
        %2298 = vmatprep.subr.mxu0 0.0
        %2299 = vmatpush1.msra.mxu0 0.0
        %2300 = vmatprep.subr.mxu0 0.0
        %2301 = vmatpush1.msra.mxu0 0.0
        %2302 = vmatprep.subr.mxu0 0.0
        %2303 = vmatpush1.msra.mxu0 0.0
        %2304 = vmatprep.subr.mxu0 0.0
        %2305 = vmatpush1.msra.mxu0 0.0
        %2306 = vmatprep.subr.mxu0 0.0
        %2307 = vmatpush1.msra.mxu0 0.0
        %2308 = vmatprep.subr.mxu0 0.0
        %2309 = vmatpush1.msra.mxu0 0.0
        %2310 = vmatprep.subr.mxu0 0.0
        %2311 = vmatpush1.msra.mxu0 0.0
        %2312 = vmatprep.subr.mxu0 0.0
        %2313 = vmatpush1.msra.mxu0 0.0
        %2314 = vmatprep.subr.mxu0 0.0
        %2315 = vmatpush1.msra.mxu0 0.0
        %2316 = vmatprep.subr.mxu0 0.0
        %2317 = vmatpush1.msra.mxu0 0.0
        %2318 = vmatprep.subr.mxu0 0.0
        %2319 = vmatpush1.msra.mxu0 0.0
        %2320 = vmatprep.subr.mxu0 0.0
        %2321 = vmatpush1.msra.mxu0 0.0
        %2322 = vmatprep.subr.mxu0 0.0
        %2323 = vmatpush1.msra.mxu0 0.0
        %2324 = vmatprep.subr.mxu0 0.0
        %2325 = vmatpush1.msra.mxu0 0.0
        %2326 = vmatprep.subr.mxu0 0.0
        %2327 = vmatpush1.msra.mxu0 0.0
        %2328 = vmatprep.subr.mxu0 0.0
        %2329 = vmatpush1.msra.mxu0 0.0
        %2330 = vmatprep.subr.mxu0 0.0
        %2331 = vmatpush1.msra.mxu0 0.0
        %2332 = vmatprep.subr.mxu0 0.0
        %2333 = vmatpush1.msra.mxu0 0.0
        %2334 = vmatprep.subr.mxu0 0.0
        %2335 = vmatpush1.msra.mxu0 0.0
        %2336 = vmatprep.subr.mxu0 0.0
        %2337 = vmatpush1.msra.mxu0 0.0
        %2338 = vmatprep.subr.mxu0 0.0
        %2339 = vmatpush1.msra.mxu0 0.0
        %2340 = vmatprep.subr.mxu0 0.0
        %2341 = vmatpush1.msra.mxu0 0.0
        %2342 = vmatprep.subr.mxu0 0.0
        %2343 = vmatpush1.msra.mxu0 0.0
        %2344 = vmatprep.mubr.f32.mxu0 0.0
        %2345 = vmatmul.mubr.f32.gmra.mrb[0].mxu0 %v2278
        %v2346 = vpop.f32.mrb[0].mxu0
        %v2347 = vadd.f32 0.0, %v2346
        %v2348 = vpop.f32.mrb[0].mxu0
        %2349 = vdwg.mxu0
        %v2351 = vsel %vm1009, %v2274, 0
        %2353 = vmatprep.subr.mxu0 0.0
        %2354 = vmatpush1.msra.mxu0 %v1917
        %2355 = vmatprep.subr.mxu0 0.0
        %2356 = vmatpush1.msra.mxu0 0.0
        %2357 = vmatprep.subr.mxu0 0.0
        %2358 = vmatpush1.msra.mxu0 0.0
        %2359 = vmatprep.subr.mxu0 0.0
        %2360 = vmatpush1.msra.mxu0 0.0
        %2361 = vmatprep.subr.mxu0 0.0
        %2362 = vmatpush1.msra.mxu0 0.0
        %2363 = vmatprep.subr.mxu0 0.0
        %2364 = vmatpush1.msra.mxu0 0.0
        %2365 = vmatprep.subr.mxu0 0.0
        %2366 = vmatpush1.msra.mxu0 0.0
        %2367 = vmatprep.subr.mxu0 0.0
        %2368 = vmatpush1.msra.mxu0 0.0
        %2369 = vmatprep.subr.mxu0 0.0
        %2370 = vmatpush1.msra.mxu0 0.0
        %2371 = vmatprep.subr.mxu0 0.0
        %2372 = vmatpush1.msra.mxu0 0.0
        %2373 = vmatprep.subr.mxu0 0.0
        %2374 = vmatpush1.msra.mxu0 0.0
        %2375 = vmatprep.subr.mxu0 0.0
        %2376 = vmatpush1.msra.mxu0 0.0
        %2377 = vmatprep.subr.mxu0 0.0
        %2378 = vmatpush1.msra.mxu0 0.0
        %2379 = vmatprep.subr.mxu0 0.0
        %2380 = vmatpush1.msra.mxu0 0.0
        %2381 = vmatprep.subr.mxu0 0.0
        %2382 = vmatpush1.msra.mxu0 0.0
        %2383 = vmatprep.subr.mxu0 0.0
        %2384 = vmatpush1.msra.mxu0 0.0
        %2385 = vmatprep.subr.mxu0 0.0
        %2386 = vmatpush1.msra.mxu0 0.0
        %2387 = vmatprep.subr.mxu0 0.0
        %2388 = vmatpush1.msra.mxu0 0.0
        %2389 = vmatprep.subr.mxu0 0.0
        %2390 = vmatpush1.msra.mxu0 0.0
        %2391 = vmatprep.subr.mxu0 0.0
        %2392 = vmatpush1.msra.mxu0 0.0
        %2393 = vmatprep.subr.mxu0 0.0
        %2394 = vmatpush1.msra.mxu0 0.0
        %2395 = vmatprep.subr.mxu0 0.0
        %2396 = vmatpush1.msra.mxu0 0.0
        %2397 = vmatprep.subr.mxu0 0.0
        %2398 = vmatpush1.msra.mxu0 0.0
        %2399 = vmatprep.subr.mxu0 0.0
        %2400 = vmatpush1.msra.mxu0 0.0
        %2401 = vmatprep.subr.mxu0 0.0
        %2402 = vmatpush1.msra.mxu0 0.0
        %2403 = vmatprep.subr.mxu0 0.0
        %2404 = vmatpush1.msra.mxu0 0.0
        %2405 = vmatprep.subr.mxu0 0.0
        %2406 = vmatpush1.msra.mxu0 0.0
        %2407 = vmatprep.subr.mxu0 0.0
        %2408 = vmatpush1.msra.mxu0 0.0
        %2409 = vmatprep.subr.mxu0 0.0
        %2410 = vmatpush1.msra.mxu0 0.0
        %2411 = vmatprep.subr.mxu0 0.0
        %2412 = vmatpush1.msra.mxu0 0.0
        %2413 = vmatprep.subr.mxu0 0.0
        %2414 = vmatpush1.msra.mxu0 0.0
        %2415 = vmatprep.subr.mxu0 0.0
        %2416 = vmatpush1.msra.mxu0 0.0
        %2417 = vmatprep.mubr.f32.mxu0 0.0
        %2418 = vmatmul.mubr.f32.gmra.mrb[0].mxu0 %v2351
        %v2419 = vpop.f32.mrb[0].mxu0
        %v2420 = vadd.f32 0.0, %v2419
        %v2421 = vpop.f32.mrb[0].mxu0
        %2422 = vdwg.mxu0
        %v2424 = vsel %vm1009, %v2275, 0
        %2426 = vmatprep.subr.mxu0 0.0
        %2427 = vmatpush1.msra.mxu0 %v1920
        %2428 = vmatprep.subr.mxu0 0.0
        %2429 = vmatpush1.msra.mxu0 0.0
        %2430 = vmatprep.subr.mxu0 0.0
        %2431 = vmatpush1.msra.mxu0 0.0
        %2432 = vmatprep.subr.mxu0 0.0
        %2433 = vmatpush1.msra.mxu0 0.0
        %2434 = vmatprep.subr.mxu0 0.0
        %2435 = vmatpush1.msra.mxu0 0.0
        %2436 = vmatprep.subr.mxu0 0.0
        %2437 = vmatpush1.msra.mxu0 0.0
        %2438 = vmatprep.subr.mxu0 0.0
        %2439 = vmatpush1.msra.mxu0 0.0
        %2440 = vmatprep.subr.mxu0 0.0
        %2441 = vmatpush1.msra.mxu0 0.0
        %2442 = vmatprep.subr.mxu0 0.0
        %2443 = vmatpush1.msra.mxu0 0.0
        %2444 = vmatprep.subr.mxu0 0.0
        %2445 = vmatpush1.msra.mxu0 0.0
        %2446 = vmatprep.subr.mxu0 0.0
        %2447 = vmatpush1.msra.mxu0 0.0
        %2448 = vmatprep.subr.mxu0 0.0
        %2449 = vmatpush1.msra.mxu0 0.0
        %2450 = vmatprep.subr.mxu0 0.0
        %2451 = vmatpush1.msra.mxu0 0.0
        %2452 = vmatprep.subr.mxu0 0.0
        %2453 = vmatpush1.msra.mxu0 0.0
        %2454 = vmatprep.subr.mxu0 0.0
        %2455 = vmatpush1.msra.mxu0 0.0
        %2456 = vmatprep.subr.mxu0 0.0
        %2457 = vmatpush1.msra.mxu0 0.0
        %2458 = vmatprep.subr.mxu0 0.0
        %2459 = vmatpush1.msra.mxu0 0.0
        %2460 = vmatprep.subr.mxu0 0.0
        %2461 = vmatpush1.msra.mxu0 0.0
        %2462 = vmatprep.subr.mxu0 0.0
        %2463 = vmatpush1.msra.mxu0 0.0
        %2464 = vmatprep.subr.mxu0 0.0
        %2465 = vmatpush1.msra.mxu0 0.0
        %2466 = vmatprep.subr.mxu0 0.0
        %2467 = vmatpush1.msra.mxu0 0.0
        %2468 = vmatprep.subr.mxu0 0.0
        %2469 = vmatpush1.msra.mxu0 0.0
        %2470 = vmatprep.subr.mxu0 0.0
        %2471 = vmatpush1.msra.mxu0 0.0
        %2472 = vmatprep.subr.mxu0 0.0
        %2473 = vmatpush1.msra.mxu0 0.0
        %2474 = vmatprep.subr.mxu0 0.0
        %2475 = vmatpush1.msra.mxu0 0.0
        %2476 = vmatprep.subr.mxu0 0.0
        %2477 = vmatpush1.msra.mxu0 0.0
        %2478 = vmatprep.subr.mxu0 0.0
        %2479 = vmatpush1.msra.mxu0 0.0
        %2480 = vmatprep.subr.mxu0 0.0
        %2481 = vmatpush1.msra.mxu0 0.0
        %2482 = vmatprep.subr.mxu0 0.0
        %2483 = vmatpush1.msra.mxu0 0.0
        %2484 = vmatprep.subr.mxu0 0.0
        %2485 = vmatpush1.msra.mxu0 0.0
        %2486 = vmatprep.subr.mxu0 0.0
        %2487 = vmatpush1.msra.mxu0 0.0
        %2488 = vmatprep.subr.mxu0 0.0
        %2489 = vmatpush1.msra.mxu0 0.0
        %2490 = vmatprep.mubr.f32.mxu0 0.0
        %2491 = vmatmul.mubr.f32.gmra.mrb[0].mxu0 %v2424
        %v2492 = vpop.f32.mrb[0].mxu0
        %v2493 = vadd.f32 0.0, %v2492
        %v2494 = vpop.f32.mrb[0].mxu0
        %2495 = vdwg.mxu0
        %v2497 = vsel %vm1009, %v2276, 0
        %2499 = vmatprep.subr.mxu0 0.0
        %2500 = vmatpush1.msra.mxu0 %v1923
        %2501 = vmatprep.subr.mxu0 0.0
        %2502 = vmatpush1.msra.mxu0 0.0
        %2503 = vmatprep.subr.mxu0 0.0
        %2504 = vmatpush1.msra.mxu0 0.0
        %2505 = vmatprep.subr.mxu0 0.0
        %2506 = vmatpush1.msra.mxu0 0.0
        %2507 = vmatprep.subr.mxu0 0.0
        %2508 = vmatpush1.msra.mxu0 0.0
        %2509 = vmatprep.subr.mxu0 0.0
        %2510 = vmatpush1.msra.mxu0 0.0
        %2511 = vmatprep.subr.mxu0 0.0
        %2512 = vmatpush1.msra.mxu0 0.0
        %2513 = vmatprep.subr.mxu0 0.0
        %2514 = vmatpush1.msra.mxu0 0.0
        %2515 = vmatprep.subr.mxu0 0.0
        %2516 = vmatpush1.msra.mxu0 0.0
        %2517 = vmatprep.subr.mxu0 0.0
        %2518 = vmatpush1.msra.mxu0 0.0
        %2519 = vmatprep.subr.mxu0 0.0
        %2520 = vmatpush1.msra.mxu0 0.0
        %2521 = vmatprep.subr.mxu0 0.0
        %2522 = vmatpush1.msra.mxu0 0.0
        %2523 = vmatprep.subr.mxu0 0.0
        %2524 = vmatpush1.msra.mxu0 0.0
        %2525 = vmatprep.subr.mxu0 0.0
        %2526 = vmatpush1.msra.mxu0 0.0
        %2527 = vmatprep.subr.mxu0 0.0
        %2528 = vmatpush1.msra.mxu0 0.0
        %2529 = vmatprep.subr.mxu0 0.0
        %2530 = vmatpush1.msra.mxu0 0.0
        %2531 = vmatprep.subr.mxu0 0.0
        %2532 = vmatpush1.msra.mxu0 0.0
        %2533 = vmatprep.subr.mxu0 0.0
        %2534 = vmatpush1.msra.mxu0 0.0
        %2535 = vmatprep.subr.mxu0 0.0
        %2536 = vmatpush1.msra.mxu0 0.0
        %2537 = vmatprep.subr.mxu0 0.0
        %2538 = vmatpush1.msra.mxu0 0.0
        %2539 = vmatprep.subr.mxu0 0.0
        %2540 = vmatpush1.msra.mxu0 0.0
        %2541 = vmatprep.subr.mxu0 0.0
        %2542 = vmatpush1.msra.mxu0 0.0
        %2543 = vmatprep.subr.mxu0 0.0
        %2544 = vmatpush1.msra.mxu0 0.0
        %2545 = vmatprep.subr.mxu0 0.0
        %2546 = vmatpush1.msra.mxu0 0.0
        %2547 = vmatprep.subr.mxu0 0.0
        %2548 = vmatpush1.msra.mxu0 0.0
        %2549 = vmatprep.subr.mxu0 0.0
        %2550 = vmatpush1.msra.mxu0 0.0
        %2551 = vmatprep.subr.mxu0 0.0
        %2552 = vmatpush1.msra.mxu0 0.0
        %2553 = vmatprep.subr.mxu0 0.0
        %2554 = vmatpush1.msra.mxu0 0.0
        %2555 = vmatprep.subr.mxu0 0.0
        %2556 = vmatpush1.msra.mxu0 0.0
        %2557 = vmatprep.subr.mxu0 0.0
        %2558 = vmatpush1.msra.mxu0 0.0
        %2559 = vmatprep.subr.mxu0 0.0
        %2560 = vmatpush1.msra.mxu0 0.0
        %2561 = vmatprep.subr.mxu0 0.0
        %2562 = vmatpush1.msra.mxu0 0.0
        %2563 = vmatprep.mubr.f32.mxu0 0.0
        %2564 = vmatmul.mubr.f32.gmra.mrb[0].mxu0 %v2497
        %v2565 = vpop.f32.mrb[0].mxu0
        %v2566 = vadd.f32 0.0, %v2565
        %v2567 = vpop.f32.mrb[0].mxu0
        %2568 = vdwg.mxu0
        %2570 = vrot.lane.b32.xlu0 %v2420, 8
        %v2571 = vpop.permute.xlu0 %2570
        %2574 = vrot.lane.b32.xlu0 %v2493, 16
        %v2575 = vpop.permute.xlu0 %2574
        %2578 = vrot.lane.b32.xlu0 %v2566, 24
        %v2579 = vpop.permute.xlu0 %2578
        %v2581 = vsel %vm1009, %v2347, %v2571
        %v2582 = vsel %vm1659, %v2581, %v2575
        %v2583 = vsel %vm1661, %v2582, %v2579
        %v2584 = vld [vmem:[#allocation17] sm:$0xff]
        %v2585 = vld [vmem:[#allocation17 + $0x8] sm:$0xff]
        %v2586 = vld [vmem:[#allocation17 + $0x10] sm:$0xff]
        %v2587 = vld [vmem:[#allocation17 + $0x18] sm:$0xff]
        %v2588 = vlaneseq
        %v2589 = vshrl.u32 %v2588, 7
        %v2590 = vsub.s32 6, %v2589
        %v2591 = vrot.slane %v736, %v2590
        %v2593 = vsel %vm747, %v2583, 0
        %2595 = vmatprep.subr.mxu0 0.0
        %2596 = vmatpush1.msra.mxu0 %v2584
        %2597 = vmatprep.subr.mxu0 0.0
        %2598 = vmatpush1.msra.mxu0 %v2585
        %2599 = vmatprep.subr.mxu0 0.0
        %2600 = vmatpush1.msra.mxu0 %v2586
        %2601 = vmatprep.subr.mxu0 0.0
        %2602 = vmatpush1.msra.mxu0 %v2587
        %2603 = vmatprep.subr.mxu0 0.0
        %2604 = vmatpush1.msra.mxu0 0.0
        %2605 = vmatprep.subr.mxu0 0.0
        %2606 = vmatpush1.msra.mxu0 0.0
        %2607 = vmatprep.subr.mxu0 0.0
        %2608 = vmatpush1.msra.mxu0 0.0
        %2609 = vmatprep.subr.mxu0 0.0
        %2610 = vmatpush1.msra.mxu0 0.0
        %2611 = vmatprep.subr.mxu0 0.0
        %2612 = vmatpush1.msra.mxu0 0.0
        %2613 = vmatprep.subr.mxu0 0.0
        %2614 = vmatpush1.msra.mxu0 0.0
        %2615 = vmatprep.subr.mxu0 0.0
        %2616 = vmatpush1.msra.mxu0 0.0
        %2617 = vmatprep.subr.mxu0 0.0
        %2618 = vmatpush1.msra.mxu0 0.0
        %2619 = vmatprep.subr.mxu0 0.0
        %2620 = vmatpush1.msra.mxu0 0.0
        %2621 = vmatprep.subr.mxu0 0.0
        %2622 = vmatpush1.msra.mxu0 0.0
        %2623 = vmatprep.subr.mxu0 0.0
        %2624 = vmatpush1.msra.mxu0 0.0
        %2625 = vmatprep.subr.mxu0 0.0
        %2626 = vmatpush1.msra.mxu0 0.0
        %2627 = vmatprep.subr.mxu0 0.0
        %2628 = vmatpush1.msra.mxu0 0.0
        %2629 = vmatprep.subr.mxu0 0.0
        %2630 = vmatpush1.msra.mxu0 0.0
        %2631 = vmatprep.subr.mxu0 0.0
        %2632 = vmatpush1.msra.mxu0 0.0
        %2633 = vmatprep.subr.mxu0 0.0
        %2634 = vmatpush1.msra.mxu0 0.0
        %2635 = vmatprep.subr.mxu0 0.0
        %2636 = vmatpush1.msra.mxu0 0.0
        %2637 = vmatprep.subr.mxu0 0.0
        %2638 = vmatpush1.msra.mxu0 0.0
        %2639 = vmatprep.subr.mxu0 0.0
        %2640 = vmatpush1.msra.mxu0 0.0
        %2641 = vmatprep.subr.mxu0 0.0
        %2642 = vmatpush1.msra.mxu0 0.0
        %2643 = vmatprep.subr.mxu0 0.0
        %2644 = vmatpush1.msra.mxu0 0.0
        %2645 = vmatprep.subr.mxu0 0.0
        %2646 = vmatpush1.msra.mxu0 0.0
        %2647 = vmatprep.subr.mxu0 0.0
        %2648 = vmatpush1.msra.mxu0 0.0
        %2649 = vmatprep.subr.mxu0 0.0
        %2650 = vmatpush1.msra.mxu0 0.0
        %2651 = vmatprep.subr.mxu0 0.0
        %2652 = vmatpush1.msra.mxu0 0.0
        %2653 = vmatprep.subr.mxu0 0.0
        %2654 = vmatpush1.msra.mxu0 0.0
        %2655 = vmatprep.subr.mxu0 0.0
        %2656 = vmatpush1.msra.mxu0 0.0
        %2657 = vmatprep.subr.mxu0 0.0
        %2658 = vmatpush1.msra.mxu0 0.0
        %2659 = vmatprep.mubr.f32.mxu0 0.0
        %2660 = vmatmul.mubr.f32.gmra.mrb[0].mxu0 %v2593
        %v2661 = vpop.f32.mrb[0].mxu0
        %v2662 = vadd.f32 %v2591, %v2661
        %v2663 = vpop.f32.mrb[0].mxu0
        %2664 = vdwg.mxu0
        %2666 = vrot.lane.b32.xlu0 %v2662, 32
        %v2667 = vpop.permute.xlu0 %2666
        %v2669 = vsel %vm747, %v1741, %v2667
        %v2670 = vld [vmem:[%s12] sm:$0xff]
        %v2671 = vld [vmem:[%s12 + $0x8] sm:$0xff]
        %v2672 = vld [vmem:[%s12 + $0x10] sm:$0xff]
        %v2673 = vld [vmem:[%s12 + $0x18] sm:$0xff]
        %v2674 = vld [vmem:[%s12 + $0x20] sm:$0xff]
        %v2675 = vld [vmem:[%s12 + $0x28] sm:$0xff]
        %v2676 = vld [vmem:[%s12 + $0x30] sm:$0xff]
        %v2677 = vld [vmem:[%s12 + $0x38] sm:$0xff]
        %v2678 = vlaneseq
        %v2679 = vshrl.u32 %v2678, 7
        %v2680 = vsub.s32 7, %v2679
        %v2681 = vrot.slane %v736, %v2680
        %vm2682 = vcmask 523264
        %v2684 = vsel %vm2682, %v2669, 0
        %2686 = vmatprep.subr.mxu0 0.0
        %2687 = vmatpush1.msra.mxu0 %v2670
        %2688 = vmatprep.subr.mxu0 0.0
        %2689 = vmatpush1.msra.mxu0 %v2671
        %2690 = vmatprep.subr.mxu0 0.0
        %2691 = vmatpush1.msra.mxu0 %v2672
        %2692 = vmatprep.subr.mxu0 0.0
        %2693 = vmatpush1.msra.mxu0 %v2673
        %2694 = vmatprep.subr.mxu0 0.0
        %2695 = vmatpush1.msra.mxu0 %v2674
        %2696 = vmatprep.subr.mxu0 0.0
        %2697 = vmatpush1.msra.mxu0 %v2675
        %2698 = vmatprep.subr.mxu0 0.0
        %2699 = vmatpush1.msra.mxu0 %v2676
        %2700 = vmatprep.subr.mxu0 0.0
        %2701 = vmatpush1.msra.mxu0 %v2677
        %2702 = vmatprep.subr.mxu0 0.0
        %2703 = vmatpush1.msra.mxu0 0.0
        %2704 = vmatprep.subr.mxu0 0.0
        %2705 = vmatpush1.msra.mxu0 0.0
        %2706 = vmatprep.subr.mxu0 0.0
        %2707 = vmatpush1.msra.mxu0 0.0
        %2708 = vmatprep.subr.mxu0 0.0
        %2709 = vmatpush1.msra.mxu0 0.0
        %2710 = vmatprep.subr.mxu0 0.0
        %2711 = vmatpush1.msra.mxu0 0.0
        %2712 = vmatprep.subr.mxu0 0.0
        %2713 = vmatpush1.msra.mxu0 0.0
        %2714 = vmatprep.subr.mxu0 0.0
        %2715 = vmatpush1.msra.mxu0 0.0
        %2716 = vmatprep.subr.mxu0 0.0
        %2717 = vmatpush1.msra.mxu0 0.0
        %2718 = vmatprep.subr.mxu0 0.0
        %2719 = vmatpush1.msra.mxu0 0.0
        %2720 = vmatprep.subr.mxu0 0.0
        %2721 = vmatpush1.msra.mxu0 0.0
        %2722 = vmatprep.subr.mxu0 0.0
        %2723 = vmatpush1.msra.mxu0 0.0
        %2724 = vmatprep.subr.mxu0 0.0
        %2725 = vmatpush1.msra.mxu0 0.0
        %2726 = vmatprep.subr.mxu0 0.0
        %2727 = vmatpush1.msra.mxu0 0.0
        %2728 = vmatprep.subr.mxu0 0.0
        %2729 = vmatpush1.msra.mxu0 0.0
        %2730 = vmatprep.subr.mxu0 0.0
        %2731 = vmatpush1.msra.mxu0 0.0
        %2732 = vmatprep.subr.mxu0 0.0
        %2733 = vmatpush1.msra.mxu0 0.0
        %2734 = vmatprep.subr.mxu0 0.0
        %2735 = vmatpush1.msra.mxu0 0.0
        %2736 = vmatprep.subr.mxu0 0.0
        %2737 = vmatpush1.msra.mxu0 0.0
        %2738 = vmatprep.subr.mxu0 0.0
        %2739 = vmatpush1.msra.mxu0 0.0
        %2740 = vmatprep.subr.mxu0 0.0
        %2741 = vmatpush1.msra.mxu0 0.0
        %2742 = vmatprep.subr.mxu0 0.0
        %2743 = vmatpush1.msra.mxu0 0.0
        %2744 = vmatprep.subr.mxu0 0.0
        %2745 = vmatpush1.msra.mxu0 0.0
        %2746 = vmatprep.subr.mxu0 0.0
        %2747 = vmatpush1.msra.mxu0 0.0
        %2748 = vmatprep.subr.mxu0 0.0
        %2749 = vmatpush1.msra.mxu0 0.0
        %2750 = vmatprep.mubr.f32.mxu0 0.0
        %2751 = vmatmul.mubr.f32.gmra.mrb[0].mxu0 %v2684
        %v2752 = vpop.f32.mrb[0].mxu0
        %v2753 = vadd.f32 %v2681, %v2752
        %v2754 = vpop.f32.mrb[0].mxu0
        %2755 = vdwg.mxu0
        %v2756 = vmax.f32 %v2753, 0.0
        %v2757 = vld [vmem:[%s13] sm:$0xff]
        %v2758 = vld [vmem:[%s13 + $0x8] sm:$0xff]
        %v2759 = vld [vmem:[%s13 + $0x10] sm:$0xff]
        %v2760 = vld [vmem:[%s13 + $0x18] sm:$0xff]
        %v2761 = vld [vmem:[%s13 + $0x20] sm:$0xff]
        %v2762 = vld [vmem:[%s13 + $0x28] sm:$0xff]
        %v2763 = vld [vmem:[%s13 + $0x30] sm:$0xff]
        %v2764 = vld [vmem:[%s13 + $0x38] sm:$0xff]
        %v2765 = vlaneseq
        %v2766 = vshrl.u32 %v2765, 7
        %v2767 = vsub.s32 0, %v2766
        %v2768 = vrot.slane %v737, %v2767
        %v2770 = vsel %vm2682, %v2756, 0
        %2772 = vmatprep.subr.mxu0 0.0
        %2773 = vmatpush1.msra.mxu0 %v2757
        %2774 = vmatprep.subr.mxu0 0.0
        %2775 = vmatpush1.msra.mxu0 %v2758
        %2776 = vmatprep.subr.mxu0 0.0
        %2777 = vmatpush1.msra.mxu0 %v2759
        %2778 = vmatprep.subr.mxu0 0.0
        %2779 = vmatpush1.msra.mxu0 %v2760
        %2780 = vmatprep.subr.mxu0 0.0
        %2781 = vmatpush1.msra.mxu0 %v2761
        %2782 = vmatprep.subr.mxu0 0.0
        %2783 = vmatpush1.msra.mxu0 %v2762
        %2784 = vmatprep.subr.mxu0 0.0
        %2785 = vmatpush1.msra.mxu0 %v2763
        %2786 = vmatprep.subr.mxu0 0.0
        %2787 = vmatpush1.msra.mxu0 %v2764
        %2788 = vmatprep.subr.mxu0 0.0
        %2789 = vmatpush1.msra.mxu0 0.0
        %2790 = vmatprep.subr.mxu0 0.0
        %2791 = vmatpush1.msra.mxu0 0.0
        %2792 = vmatprep.subr.mxu0 0.0
        %2793 = vmatpush1.msra.mxu0 0.0
        %2794 = vmatprep.subr.mxu0 0.0
        %2795 = vmatpush1.msra.mxu0 0.0
        %2796 = vmatprep.subr.mxu0 0.0
        %2797 = vmatpush1.msra.mxu0 0.0
        %2798 = vmatprep.subr.mxu0 0.0
        %2799 = vmatpush1.msra.mxu0 0.0
        %2800 = vmatprep.subr.mxu0 0.0
        %2801 = vmatpush1.msra.mxu0 0.0
        %2802 = vmatprep.subr.mxu0 0.0
        %2803 = vmatpush1.msra.mxu0 0.0
        %2804 = vmatprep.subr.mxu0 0.0
        %2805 = vmatpush1.msra.mxu0 0.0
        %2806 = vmatprep.subr.mxu0 0.0
        %2807 = vmatpush1.msra.mxu0 0.0
        %2808 = vmatprep.subr.mxu0 0.0
        %2809 = vmatpush1.msra.mxu0 0.0
        %2810 = vmatprep.subr.mxu0 0.0
        %2811 = vmatpush1.msra.mxu0 0.0
        %2812 = vmatprep.subr.mxu0 0.0
        %2813 = vmatpush1.msra.mxu0 0.0
        %2814 = vmatprep.subr.mxu0 0.0
        %2815 = vmatpush1.msra.mxu0 0.0
        %2816 = vmatprep.subr.mxu0 0.0
        %2817 = vmatpush1.msra.mxu0 0.0
        %2818 = vmatprep.subr.mxu0 0.0
        %2819 = vmatpush1.msra.mxu0 0.0
        %2820 = vmatprep.subr.mxu0 0.0
        %2821 = vmatpush1.msra.mxu0 0.0
        %2822 = vmatprep.subr.mxu0 0.0
        %2823 = vmatpush1.msra.mxu0 0.0
        %2824 = vmatprep.subr.mxu0 0.0
        %2825 = vmatpush1.msra.mxu0 0.0
        %2826 = vmatprep.subr.mxu0 0.0
        %2827 = vmatpush1.msra.mxu0 0.0
        %2828 = vmatprep.subr.mxu0 0.0
        %2829 = vmatpush1.msra.mxu0 0.0
        %2830 = vmatprep.subr.mxu0 0.0
        %2831 = vmatpush1.msra.mxu0 0.0
        %2832 = vmatprep.subr.mxu0 0.0
        %2833 = vmatpush1.msra.mxu0 0.0
        %2834 = vmatprep.subr.mxu0 0.0
        %2835 = vmatpush1.msra.mxu0 0.0
        %2836 = vmatprep.mubr.f32.mxu0 0.0
        %2837 = vmatmul.mubr.f32.gmra.mrb[0].mxu0 %v2770
        %v2838 = vpop.f32.mrb[0].mxu0
        %v2839 = vadd.f32 %v2768, %v2838
        %v2840 = vpop.f32.mrb[0].mxu0
        %2841 = vdwg.mxu0
        %v2842 = vadd.f32 %v2839, %v738
        %v2843 = vsel %vm747, %v2842, 0.0
        %2844 = vadd.xlane.f32.xlu0 %v2843
        %v2845 = vpop.xlane.xlu0 %2844
        %v2846 = vrcp.pop 32.0
        %v2847 = vmul.f32 %v2845, %v2846
        %v2848 = vsub.f32 %v2842, %v2847
        %v2849 = vmul.f32 %v2848, %v2848
        %v2850 = vsel %vm747, %v2849, 0.0
        %2851 = vadd.xlane.f32.xlu0 %v2850
        %v2852 = vpop.xlane.xlu0 %2851
        %v2853 = vmul.f32 %v2852, %v2846
        %v2854 = vadd.f32 %v2853, 1e-05
        %v2855 = vrsqrt.pop %v2854
        %v2856 = vmul.f32 %v2848, %v2855
        %v2857 = vlaneseq
        %v2858 = vshrl.u32 %v2857, 7
        %v2859 = vsub.s32 1, %v2858
        %v2860 = vrot.slane %v737, %v2859
        %v2861 = vmul.f32 %v2856, %v2860
        %v2862 = vlaneseq
        %v2863 = vshrl.u32 %v2862, 7
        %v2864 = vsub.s32 2, %v2863
        %v2865 = vrot.slane %v737, %v2864
        %v2866 = vadd.f32 %v2861, %v2865
        %2867 = vst.msk [vmem:[%s731] sm:$0xff] %vm747, %v2866
        %s2868 = sand.u32 %s389, 1
        %s2869 = scalar_lea.sflag [#allocation4], %s2868
        %s2870 = sand.u32 %s389, 1
        %s2871 = smul.addr %s2870, 8
        %s2872 = scalar_lea.vmem [#allocation20], %s2871
        // Predicated region
        $region125: #{tpu_custom_call.1} parent=79 // pred_check
          %p2873 = pneg %p399
        $region126: #{tpu_custom_call.1} parent=79 // pred_check_branch
          %2875 = sbr.rel (%p2873) target = $region128
        $region127: #{tpu_custom_call.1} parent=79 // pred_region
          %s2877 = ssub.s32 128, 128
          %2878 = vsyncadd %s2869, %s2877
          %s2879 = smul.addr %s41, 128
          %s2880 = scalar_lea.hbm %s15, %s2879
          %s2882 = sshll.u32 %s2872, 4
          %s2883 = int_to_ptr.vmem [resolvable:$true] %s2882
          %2885 = dma.vmem_to_hbm [thread:$0]  %s2883, 128, %s2880, %s2869
        $region128: #{tpu_custom_call.1} parent=79 // pred_fallthru
          _
      $region80: #{tpu_custom_call.1} parent=5 // pred_fallthru
        _
      %p2886 = scmp.le.s32.totalorder 2, %s36
      // Predicated region
      $region129: #{tpu_custom_call.1} parent=5 // pred_check
        %p2887 = pneg %p2886
      $region130: #{tpu_custom_call.1} parent=5 // pred_check_branch
        %2889 = sbr.rel (%p2887) target = $region132
      $region131: #{tpu_custom_call.1} parent=5 // pred_region
        %s2890 = ssub.s32 %s36, 2
        // Predicated region
        $region133: #{tpu_custom_call.1} parent=131 // pred_check
          %p2891 = pneg %p405
        $region134: #{tpu_custom_call.1} parent=131 // pred_check_branch
          %2893 = sbr.rel (%p2891) target = $region136
        $region135: #{tpu_custom_call.1} parent=131 // pred_region
          %s2894 = sand.u32 %s390, 1
          %s2895 = scalar_lea.sflag [#allocation4], %s2894
          %s2896 = sand.u32 %s390, 1
          %s2897 = smul.addr %s2896, 8
          %s2898 = scalar_lea.vmem [#allocation20], %s2897
          %2899 = dma.done %s2895, 128
        $region136: #{tpu_custom_call.1} parent=131 // pred_fallthru
          _
      $region132: #{tpu_custom_call.1} parent=5 // pred_fallthru
        _
    $region6: #{tpu_custom_call.1} parent=1 // loop_footer
      %s40 = sadd.s32 1, %s36
    $region7: #{tpu_custom_call.1} parent=1 // loop_footer_branch
      %35 = sbr.rel target = $region3
    $region8: #{tpu_custom_call.1} parent=1 // loop_exit
      _
    %2900 = vsyncpa [#allocation3], 1
    %s2901 = scalar_lea.sflag [#allocation3], 1
    %2902 = vsyncpa %s2901, 1
    %2903 = vsyncpa [#allocation6], 1
    %s2904 = scalar_lea.sflag [#allocation6], 1
    %2905 = vsyncpa %s2904, 1
    %2906 = vsyncpa [#allocation9], 1
    %s2907 = scalar_lea.sflag [#allocation9], 1
    %2908 = vsyncpa %s2907, 1
    %2909 = vsyncpa [#allocation12], 1
    %2910 = vsyncpa [#allocation15], 1
    %2911 = vsyncpa [#allocation18], 1
    %2912 = vsyncpa [#allocation4], 1
    %s2913 = scalar_lea.sflag [#allocation4], 1
    %2914 = vsyncpa %s2913, 1

</llo_original>
